<compile_context>
chip_gen: v7x
topology: tpu7x:2x2x1
jax: 0.10.0
libtpu: 0.0.40
codegen_flags: <defaults>
</compile_context>

<pallas_src>
import functools
import math

import jax
import jax.numpy as jnp
from jax.experimental import pallas as pl
from jax.experimental.pallas import tpu as pltpu

WDTYPE = jnp.bfloat16      # weights / activations in HBM
ADTYPE = jnp.float32       # bias, LN params, accumulators

_VMEM_LIMIT = 32 * 1024 * 1024   # safe on v5e/v6e/v7x


def _round_up(x, m):
    return (x + m - 1) // m * m


def _pick_tile(dim, pref):
    """Largest convenient tile <= dim that divides dim (multiples of 128 preferred)."""
    if dim <= pref:
        return dim
    for t in (pref, 512, 256, 128):
        if t <= dim and dim % t == 0:
            return t
    return dim


# ----------------- fused (LN) + GEMM (+ bias / QuickGELU / residual) -----------------

def _fused_linear_kernel(x_ref, w_ref, *rest, has_bias, has_ln, has_res,
                         activation, single_k):
    # rest = [b_ref] [g_ref, beta_ref] [res_ref] o_ref [xn_scratch] [acc_scratch]
    idx = 0
    b_ref = g_ref = beta_ref = res_ref = None
    if has_bias:
        b_ref = rest[idx]; idx += 1
    if has_ln:
        g_ref, beta_ref = rest[idx], rest[idx + 1]; idx += 2
    if has_res:
        res_ref = rest[idx]; idx += 1
    o_ref = rest[idx]; idx += 1
    scratch = rest[idx:]

    if has_ln:
        xn_ref = scratch[0]

        # LN once per row-block (j == 0), cached in VMEM, reused for every N-tile.
        @pl.when(pl.program_id(1) == 0)
        def _():
            xf = x_ref[...].astype(jnp.float32)
            mu = jnp.mean(xf, axis=-1, keepdims=True)
            xc = xf - mu
            var = jnp.mean(xc * xc, axis=-1, keepdims=True)
            xf = xc * jax.lax.rsqrt(var + 1e-5)
            xf = xf * g_ref[...].astype(jnp.float32) + beta_ref[...].astype(jnp.float32)
            xn_ref[...] = xf.astype(xn_ref.dtype)

        x = xn_ref[...]
    else:
        x = x_ref[...]

    def epilogue(y):
        if has_bias:
            y = y + b_ref[...].astype(jnp.float32)
        if activation == "quick_gelu":              # CLIP QuickGELU: x * sigmoid(1.702 x)
            y = y * jax.nn.sigmoid(1.702 * y)
        if has_res:
            y = y + res_ref[...].astype(jnp.float32)
        return y

    if single_k:
        # No fp32 VMEM accumulator round-trip: dot -> epilogue -> store.
        y = jnp.dot(x, w_ref[...], preferred_element_type=jnp.float32)
        o_ref[...] = epilogue(y).astype(o_ref.dtype)
    else:
        acc_ref = scratch[-1]
        k = pl.program_id(2)

        @pl.when(k == 0)
        def _():
            acc_ref[...] = jnp.zeros_like(acc_ref)

        acc_ref[...] += jnp.dot(x, w_ref[...], preferred_element_type=jnp.float32)

        @pl.when(k == pl.num_programs(2) - 1)
        def _():
            o_ref[...] = epilogue(acc_ref[...]).astype(o_ref.dtype)


def fused_linear(x, w, b=None, *, ln=None, residual=None, activation=None,
                 out_dtype=WDTYPE):
    """y = [LN(x)] @ w [+ b] [QuickGELU] [+ residual], tiled/pipelined on the MXU."""
    M, K = x.shape
    N = w.shape[1]
    has_bias = b is not None
    has_ln = ln is not None
    has_res = residual is not None

    # Row block covers all rows (single pass over the weights) up to 512 rows.
    Mp = _round_up(M, 8)
    if Mp > 512:
        Mp = _round_up(M, 512)
    tm = min(Mp, 512)

    tn = _pick_tile(N, 256)
    # Single K pass whenever it fits VMEM; the LN prologue always needs the full row.
    tk = K if (has_ln or K <= 4096) else _pick_tile(K, 512)
    nk = K // tk
    single_k = (nk == 1)
    grid = (Mp // tm, N // tn, nk)

    def pad_rows(a):
        return jnp.pad(a, ((0, Mp - M), (0, 0))) if Mp != M else a

    inputs = [pad_rows(x.astype(WDTYPE)), w.astype(WDTYPE)]
    in_specs = [pl.BlockSpec((tm, tk), lambda i, j, k: (i, k)),
                pl.BlockSpec((tk, tn), lambda i, j, k: (k, j))]
    if has_bias:
        inputs.append(b.reshape(1, N).astype(ADTYPE))
        in_specs.append(pl.BlockSpec((1, tn), lambda i, j, k: (0, j)))
    if has_ln:
        g, beta = ln
        inputs += [g.reshape(1, K).astype(ADTYPE), beta.reshape(1, K).astype(ADTYPE)]
        in_specs += [pl.BlockSpec((1, tk), lambda i, j, k: (0, k)),
                     pl.BlockSpec((1, tk), lambda i, j, k: (0, k))]
    if has_res:
        inputs.append(pad_rows(residual.astype(WDTYPE)))
        in_specs.append(pl.BlockSpec((tm, tn), lambda i, j, k: (i, j)))

    scratch_shapes = []
    if has_ln:
        scratch_shapes.append(pltpu.VMEM((tm, tk), WDTYPE))      # normalized-x cache
    if not single_k:
        scratch_shapes.append(pltpu.VMEM((tm, tn), jnp.float32))  # K-loop accumulator

    # The LN row-block cache requires the whole N sweep of a row-block to stay on one
    # core (j == 0 runs first), so only the row axis is megacore-parallel in that case.
    dims = (("parallel", "arbitrary", "arbitrary") if has_ln
            else ("parallel", "parallel", "arbitrary"))

    out_bytes = jnp.dtype(out_dtype).itemsize
    cost = pl.CostEstimate(
        flops=2 * Mp * N * K,
        transcendentals=Mp * N if activation == "quick_gelu" else 0,
        bytes_accessed=2 * (Mp * K + K * N) + out_bytes * Mp * N)

    out = pl.pallas_call(
        functools.partial(_fused_linear_kernel, has_bias=has_bias, has_ln=has_ln,
                          has_res=has_res, activation=activation, single_k=single_k),
        out_shape=jax.ShapeDtypeStruct((Mp, N), out_dtype),
        grid_spec=pltpu.PrefetchScalarGridSpec(
            num_scalar_prefetch=0, grid=grid,
            in_specs=in_specs,
            out_specs=pl.BlockSpec((tm, tn), lambda i, j, k: (i, j)),
            scratch_shapes=scratch_shapes),
        compiler_params=pltpu.CompilerParams(
            dimension_semantics=dims, vmem_limit_bytes=_VMEM_LIMIT),
        cost_estimate=cost,
    )(*inputs)
    return out[:M] if Mp != M else out


# ------------------------------- attention -------------------------------

def _attention_kernel(q_ref, k_ref, v_ref, o_ref, *, dh, n_valid):
    # blocks: q/k/v/o = [1, Tp, hg*dh] (one 128-lane head group of one batch row)
    Tp = q_ref.shape[1]
    hg = q_ref.shape[2] // dh
    scale = 1.0 / math.sqrt(dh)
    masked = n_valid < Tp
    if masked:
        key_id = jax.lax.broadcasted_iota(jnp.int32, (Tp, Tp), 1)

    for h in range(hg):                                   # small group (<= 128 lanes)
        lo, hi = h * dh, (h + 1) * dh
        q = q_ref[0, :, lo:hi]                            # bf16 [Tp, dh]
        k = k_ref[0, :, lo:hi]
        v = v_ref[0, :, lo:hi]
        s = jax.lax.dot_general(q, k, (((1,), (1,)), ((), ())),
                                preferred_element_type=jnp.float32) * scale
        if masked:
            s = jnp.where(key_id < n_valid, s, -1e30)     # padded keys -> -inf
        m = jnp.max(s, axis=-1, keepdims=True)
        p = jnp.exp(s - m)
        p = p * pl.reciprocal(jnp.sum(p, axis=-1, keepdims=True), approx=True)
        o = jnp.dot(p.astype(jnp.bfloat16), v, preferred_element_type=jnp.float32)
        o_ref[0, :, lo:hi] = o.astype(o_ref.dtype)        # direct store, no concat
    # TODO(synk): for max MXU contraction depth, emit a [B, 3, H, Tp, dh] QKV layout
    #             from the QKV GEMM and batch lane-aligned head pairs in one dot_general.


def attention(qkv, heads, n_valid):
    """qkv:[B, Tp, 3D] packed (q|k|v) -> [B, Tp, D]; key positions >= n_valid masked."""
    B, Tp, D3 = qkv.shape
    D = D3 // 3
    dh = D // heads
    hg = min(heads, max(1, 128 // dh))          # heads per 128-lane group
    while heads % hg:
        hg -= 1
    n_groups = heads // hg
    gw = hg * dh

    return pl.pallas_call(
        functools.partial(_attention_kernel, dh=dh, n_valid=n_valid),
        out_shape=jax.ShapeDtypeStruct((B, Tp, D), qkv.dtype),
        grid_spec=pltpu.PrefetchScalarGridSpec(
            num_scalar_prefetch=0, grid=(B, n_groups),
            in_specs=[pl.BlockSpec((1, Tp, gw), lambda b, g: (b, 0, g)),
                      pl.BlockSpec((1, Tp, gw), lambda b, g: (b, 0, g + n_groups)),
                      pl.BlockSpec((1, Tp, gw), lambda b, g: (b, 0, g + 2 * n_groups))],
            out_specs=pl.BlockSpec((1, Tp, gw), lambda b, g: (b, 0, g))),
        compiler_params=pltpu.CompilerParams(
            dimension_semantics=("parallel", "parallel"),
            vmem_limit_bytes=_VMEM_LIMIT),
    )(qkv, qkv, qkv)


# -------------------------- pos-add + LayerNorm (pre) --------------------------

def _ln_pre_kernel(x_ref, pos_ref, g_ref, b_ref, o_ref):
    x = x_ref[0].astype(jnp.float32) + pos_ref[...].astype(jnp.float32)
    mu = jnp.mean(x, axis=-1, keepdims=True)
    xc = x - mu
    var = jnp.mean(xc * xc, axis=-1, keepdims=True)
    y = xc * jax.lax.rsqrt(var + 1e-5)
    o_ref[0] = (y * g_ref[...].astype(jnp.float32)
                + b_ref[...].astype(jnp.float32)).astype(o_ref.dtype)


def ln_pre(x, pos, g, b):
    """x:[B,Tp,D] -> LN(x + pos), fused (one HBM pass)."""
    B, T, D = x.shape
    return pl.pallas_call(
        _ln_pre_kernel,
        out_shape=jax.ShapeDtypeStruct((B, T, D), WDTYPE),
        grid_spec=pltpu.PrefetchScalarGridSpec(
            num_scalar_prefetch=0, grid=(B,),
            in_specs=[pl.BlockSpec((1, T, D), lambda i: (i, 0, 0)),
                      pl.BlockSpec((T, D), lambda i: (0, 0)),
                      pl.BlockSpec((1, D), lambda i: (0, 0)),
                      pl.BlockSpec((1, D), lambda i: (0, 0))],
            out_specs=pl.BlockSpec((1, T, D), lambda i: (i, 0, 0))),
        compiler_params=pltpu.CompilerParams(
            dimension_semantics=("parallel",),
            vmem_limit_bytes=_VMEM_LIMIT),
    )(x, pos.astype(ADTYPE), g.reshape(1, D).astype(ADTYPE), b.reshape(1, D).astype(ADTYPE))


# --------------------------- Parameter creation -----------------------------

def init_params(key, *, in_ch=3, image_size=16, patch=8, width=128, layers=2,
                heads=4, mlp_ratio=4, out_dim=128):
    grid = image_size // patch
    n_tok = grid * grid + 1
    keys = iter(jax.random.split(key, 16 + 16 * layers))

    def rnd(shape, scale=0.02, dtype=WDTYPE):
        return (scale * jax.random.normal(next(keys), shape)).astype(dtype)

    blocks = []
    for _ in range(layers):
        blocks.append(dict(
            ln1_g=jnp.ones((width,), ADTYPE), ln1_b=jnp.zeros((width,), ADTYPE),
            qkv_w=rnd((width, 3 * width)),    qkv_b=jnp.zeros((3 * width,), ADTYPE),
            proj_w=rnd((width, width)),       proj_b=jnp.zeros((width,), ADTYPE),
            ln2_g=jnp.ones((width,), ADTYPE), ln2_b=jnp.zeros((width,), ADTYPE),
            fc_w=rnd((width, mlp_ratio * width)),  fc_b=jnp.zeros((mlp_ratio * width,), ADTYPE),
            fc2_w=rnd((mlp_ratio * width, width)), fc2_b=jnp.zeros((width,), ADTYPE),
        ))

    return dict(
        conv_w=rnd((in_ch * patch * patch, width)),   # conv1 (bias=False), flattened (c,p,q)
        cls=rnd((width,)),
        pos=rnd((n_tok, width), dtype=ADTYPE),
        ln_pre_g=jnp.ones((width,), ADTYPE), ln_pre_b=jnp.zeros((width,), ADTYPE),
        blocks=blocks,
        ln_post_g=jnp.ones((width,), ADTYPE), ln_post_b=jnp.zeros((width,), ADTYPE),
        proj=rnd((width, out_dim)),
    )


# ------------------------------- Forward pass --------------------------------

def encode_image(params, image, *, patch, heads):
    """CLIP visual encoder forward: image [B, C, H, W] -> features [B, out_dim]."""
    B, C, H, W = image.shape
    P = patch
    Hg, Wg = H // P, W // P
    Np = Hg * Wg
    n_tok = Np + 1
    # Pad the token axis ONCE (lane/sublane friendly) and carry it through all blocks.
    Tp = _round_up(n_tok, 128) if n_tok >= 64 else _round_up(n_tok, 8)

    # Patch embedding: stride-P conv == per-patch matmul (bf16 before the transpose).
    patches = (image.astype(WDTYPE)
               .reshape(B, C, Hg, P, Wg, P)
               .transpose(0, 2, 4, 1, 3, 5)
               .reshape(B * Np, C * P * P))
    tok = fused_linear(patches, params["conv_w"])                 # [B*Np, D] bf16
    D = tok.shape[-1]

    # cls prepend + pad to Tp (one-time glue); padded rows are only ever used as
    # masked attention keys, so zeros are fine.
    # TODO(synk): fold the cls/pos prepend into the ln_pre kernel to save one HBM pass.
    cls = jnp.broadcast_to(params["cls"].reshape(1, 1, D).astype(WDTYPE), (B, 1, D))
    xt = jnp.concatenate([cls, tok.reshape(B, Np, D)], axis=1)    # [B, n_tok, D]
    pos = params["pos"].astype(ADTYPE)
    if Tp != n_tok:
        xt = jnp.pad(xt, ((0, 0), (0, Tp - n_tok), (0, 0)))
        pos = jnp.pad(pos, ((0, Tp - n_tok), (0, 0)))

    # pos-embed add + ln_pre fused in one kernel
    xt = ln_pre(xt, pos, params["ln_pre_g"], params["ln_pre_b"])  # [B, Tp, D] bf16
    x2 = xt.reshape(B * Tp, D)                                    # padded residual stream

    for blk in params["blocks"]:
        # --- attention: LN1 fused into QKV GEMM (LN cached per row-block), head
        #     grouping inside the attention kernel, residual fused into the proj GEMM ---
        qkv = fused_linear(x2, blk["qkv_w"], blk["qkv_b"],
                           ln=(blk["ln1_g"], blk["ln1_b"]))        # [B*Tp, 3D]
        attn = attention(qkv.reshape(B, Tp, 3 * D), heads, n_tok).reshape(B * Tp, D)
        x2 = fused_linear(attn, blk["proj_w"], blk["proj_b"], residual=x2)

        # --- MLP: LN2 + FC1 + QuickGELU fused; residual fused into FC2 ---
        h = fused_linear(x2, blk["fc_w"], blk["fc_b"],
                         ln=(blk["ln2_g"], blk["ln2_b"]), activation="quick_gelu")
        x2 = fused_linear(h, blk["fc2_w"], blk["fc2_b"], residual=x2)

    cls_tok = x2.reshape(B, Tp, D)[:, 0, :]                       # [B, D]
    # ln_post fused into the final projection (no bias in CLIP's visual proj)
    feats = fused_linear(cls_tok, params["proj"],
                         ln=(params["ln_post_g"], params["ln_post_b"]),
                         out_dtype=jnp.float32)                   # [B, out_dim]
    return feats


# ---------------------------------- Main -------------------------------------

if __name__ == "__main__":
    key = jax.random.PRNGKey(0)
    k_img, k_par = jax.random.split(key)

    B, C, H, W = 2, 3, 16, 16
    PATCH, HEADS, WIDTH, OUT = 8, 4, 128, 128
    image = jax.random.normal(k_img, (B, C, H, W), dtype=jnp.float32)

    params = init_params(k_par, in_ch=C, image_size=H, patch=PATCH, width=WIDTH,
                         layers=2, heads=HEADS, mlp_ratio=4, out_dim=OUT)

    fwd = jax.jit(functools.partial(encode_image, patch=PATCH, heads=HEADS))
    feats = jax.block_until_ready(fwd(params, image))
    assert feats.shape == (B, OUT)
    assert bool(jnp.all(jnp.isfinite(feats)))
    print("KERNEL_OK")
</pallas_src>

<mosaic_0001>
module attributes {stable_mosaic.version = 11 : i64} {
  func.func @_fused_linear_kernel(%arg0: i32, %arg1: i32, %arg2: i32, %arg3: memref<8x192xbf16, #tpu.memory_space<vmem>>, %arg4: memref<192x128xbf16, #tpu.memory_space<vmem>>, %arg5: memref<8x128xbf16, #tpu.memory_space<vmem>>) attributes {dimension_semantics = [#tpu.dimension_semantics<parallel>, #tpu.dimension_semantics<parallel>, #tpu.dimension_semantics<arbitrary>], iteration_bounds = array<i64: 1, 1, 1>, scalar_prefetch = 0 : i64, scratch_operands = 0 : i64, tpu.core_type = #tpu.core_type<tc>, window_params = [{transform_indices = @transform_0, window_bounds = array<i64: 8, 192>}, {transform_indices = @transform_1, window_bounds = array<i64: 192, 128>}, {transform_indices = @transform_2, window_bounds = array<i64: 8, 128>}]} {
    %c0 = arith.constant 0 : index
    %c0_0 = arith.constant 0 : index
    %0 = vector.load %arg3[%c0, %c0_0] : memref<8x192xbf16, #tpu.memory_space<vmem>>, vector<8x192xbf16>
    %c0_1 = arith.constant 0 : index
    %c0_2 = arith.constant 0 : index
    %1 = vector.load %arg4[%c0_1, %c0_2] : memref<192x128xbf16, #tpu.memory_space<vmem>>, vector<192x128xbf16>
    %cst = arith.constant dense<0.000000e+00> : vector<8x128xf32>
    %2 = tpu.matmul %0, %1, %cst {dimension_numbers = #tpu.dot_dimension_numbers<[1], [0], [0], [1], [0, 0, 1, 1], [], []>} : vector<8x192xbf16>, vector<192x128xbf16>, vector<8x128xf32> -> vector<8x128xf32>
    %3 = arith.truncf %2 : vector<8x128xf32> to vector<8x128xbf16>
    %c0_3 = arith.constant 0 : index
    %c0_4 = arith.constant 0 : index
    %4 = vector.load %arg5[%c0_3, %c0_4] : memref<8x128xbf16, #tpu.memory_space<vmem>>, vector<8x128xbf16>
    tpu.vector_store %arg5[%c0_3, %c0_4], %3 {strides = array<i32>} : memref<8x128xbf16, #tpu.memory_space<vmem>>, vector<8x128xbf16>,
    return
  }
  func.func @transform_0(%arg0: i32, %arg1: i32, %arg2: i32) -> (i32, i32) {
    %c0_i32 = arith.constant 0 : i32
    return %arg0, %arg2 : i32, i32
  }
  func.func @transform_1(%arg0: i32, %arg1: i32, %arg2: i32) -> (i32, i32) {
    %c0_i32 = arith.constant 0 : i32
    return %arg2, %arg1 : i32, i32
  }
  func.func @transform_2(%arg0: i32, %arg1: i32, %arg2: i32) -> (i32, i32) {
    %c0_i32 = arith.constant 0 : i32
    return %arg0, %arg1 : i32, i32
  }
}

module attributes {stable_mosaic.version = 11 : i64} {
  func.func @_fused_linear_kernel(%arg0: i32, %arg1: i32, %arg2: i32, %arg3: memref<16x128xbf16, #tpu.memory_space<vmem>>, %arg4: memref<128x128xbf16, #tpu.memory_space<vmem>>, %arg5: memref<1x128xf32, #tpu.memory_space<vmem>>, %arg6: memref<1x128xf32, #tpu.memory_space<vmem>>, %arg7: memref<1x128xf32, #tpu.memory_space<vmem>>, %arg8: memref<16x128xbf16, #tpu.memory_space<vmem>>, %arg9: memref<16x128xbf16, #tpu.memory_space<vmem>>) attributes {dimension_semantics = [#tpu.dimension_semantics<parallel>, #tpu.dimension_semantics<arbitrary>, #tpu.dimension_semantics<arbitrary>], iteration_bounds = array<i64: 1, 3, 1>, scalar_prefetch = 0 : i64, scratch_operands = 1 : i64, tpu.core_type = #tpu.core_type<tc>, window_params = [{transform_indices = @transform_0, window_bounds = array<i64: 16, 128>}, {transform_indices = @transform_1, window_bounds = array<i64: 128, 128>}, {transform_indices = @transform_2, window_bounds = array<i64: 1, 128>}, {transform_indices = @transform_3, window_bounds = array<i64: 1, 128>}, {transform_indices = @transform_4, window_bounds = array<i64: 1, 128>}, {transform_indices = @transform_5, window_bounds = array<i64: 16, 128>}]} {
    %c0_i32 = arith.constant 0 : i32
    %0 = arith.cmpi eq, %arg1, %c0_i32 : i32
    %1 = arith.extui %0 : i1 to i32
    %c0_i32_0 = arith.constant 0 : i32
    %2 = arith.cmpi ne, %1, %c0_i32_0 : i32
    scf.if %2 {
      %c0_8 = arith.constant 0 : index
      %c0_9 = arith.constant 0 : index
      %11 = vector.load %arg3[%c0_8, %c0_9] : memref<16x128xbf16, #tpu.memory_space<vmem>>, vector<16x128xbf16>
      %12 = arith.extf %11 : vector<16x128xbf16> to vector<16x128xf32>
      %cst_10 = arith.constant dense<0.000000e+00> : vector<16xf32>
      %13 = vector.multi_reduction <add>, %12, %cst_10 [1] : vector<16x128xf32> to vector<16xf32>
      %14 = vector.shape_cast %13 : vector<16xf32> to vector<16x1xf32>
      %cst_11 = arith.constant 1.280000e+02 : f32
      %15 = vector.broadcast %cst_11 : f32 to vector<16x1xf32>
      %16 = arith.divf %14, %15 : vector<16x1xf32>
      %17 = vector.broadcast %16 : vector<16x1xf32> to vector<16x128xf32>
      %18 = arith.subf %12, %17 : vector<16x128xf32>
      %19 = arith.mulf %18, %18 : vector<16x128xf32>
      %cst_12 = arith.constant dense<0.000000e+00> : vector<16xf32>
      %20 = vector.multi_reduction <add>, %19, %cst_12 [1] : vector<16x128xf32> to vector<16xf32>
      %21 = vector.shape_cast %20 : vector<16xf32> to vector<16x1xf32>
      %cst_13 = arith.constant 1.280000e+02 : f32
      %22 = vector.broadcast %cst_13 : f32 to vector<16x1xf32>
      %23 = arith.divf %21, %22 : vector<16x1xf32>
      %cst_14 = arith.constant 9.99999974E-6 : f32
      %24 = vector.broadcast %cst_14 : f32 to vector<16x1xf32>
      %25 = arith.addf %23, %24 : vector<16x1xf32>
      %26 = math.rsqrt %25 : vector<16x1xf32>
      %27 = vector.broadcast %26 : vector<16x1xf32> to vector<16x128xf32>
      %28 = arith.mulf %18, %27 : vector<16x128xf32>
      %c0_15 = arith.constant 0 : index
      %c0_16 = arith.constant 0 : index
      %29 = vector.load %arg6[%c0_15, %c0_16] : memref<1x128xf32, #tpu.memory_space<vmem>>, vector<1x128xf32>
      %30 = vector.broadcast %29 : vector<1x128xf32> to vector<16x128xf32>
      %31 = arith.mulf %28, %30 : vector<16x128xf32>
      %c0_17 = arith.constant 0 : index
      %c0_18 = arith.constant 0 : index
      %32 = vector.load %arg7[%c0_17, %c0_18] : memref<1x128xf32, #tpu.memory_space<vmem>>, vector<1x128xf32>
      %33 = vector.broadcast %32 : vector<1x128xf32> to vector<16x128xf32>
      %34 = arith.addf %31, %33 : vector<16x128xf32>
      %35 = arith.truncf %34 : vector<16x128xf32> to vector<16x128xbf16>
      %c0_19 = arith.constant 0 : index
      %c0_20 = arith.constant 0 : index
      %36 = vector.load %arg9[%c0_19, %c0_20] : memref<16x128xbf16, #tpu.memory_space<vmem>>, vector<16x128xbf16>
      tpu.vector_store %arg9[%c0_19, %c0_20], %35 {strides = array<i32>} : memref<16x128xbf16, #tpu.memory_space<vmem>>, vector<16x128xbf16>,
    } else {
    }
    %c0 = arith.constant 0 : index
    %c0_1 = arith.constant 0 : index
    %3 = vector.load %arg9[%c0, %c0_1] : memref<16x128xbf16, #tpu.memory_space<vmem>>, vector<16x128xbf16>
    %c0_2 = arith.constant 0 : index
    %c0_3 = arith.constant 0 : index
    %4 = vector.load %arg4[%c0_2, %c0_3] : memref<128x128xbf16, #tpu.memory_space<vmem>>, vector<128x128xbf16>
    %cst = arith.constant dense<0.000000e+00> : vector<16x128xf32>
    %5 = tpu.matmul %3, %4, %cst {dimension_numbers = #tpu.dot_dimension_numbers<[1], [0], [0], [1], [0, 0, 1, 1], [], []>} : vector<16x128xbf16>, vector<128x128xbf16>, vector<16x128xf32> -> vector<16x128xf32>
    %c0_4 = arith.constant 0 : index
    %c0_5 = arith.constant 0 : index
    %6 = vector.load %arg5[%c0_4, %c0_5] : memref<1x128xf32, #tpu.memory_space<vmem>>, vector<1x128xf32>
    %7 = vector.broadcast %6 : vector<1x128xf32> to vector<16x128xf32>
    %8 = arith.addf %5, %7 : vector<16x128xf32>
    %9 = arith.truncf %8 : vector<16x128xf32> to vector<16x128xbf16>
    %c0_6 = arith.constant 0 : index
    %c0_7 = arith.constant 0 : index
    %10 = vector.load %arg8[%c0_6, %c0_7] : memref<16x128xbf16, #tpu.memory_space<vmem>>, vector<16x128xbf16>
    tpu.vector_store %arg8[%c0_6, %c0_7], %9 {strides = array<i32>} : memref<16x128xbf16, #tpu.memory_space<vmem>>, vector<16x128xbf16>,
    return
  }
  func.func @transform_0(%arg0: i32, %arg1: i32, %arg2: i32) -> (i32, i32) {
    %c0_i32 = arith.constant 0 : i32
    return %arg0, %arg2 : i32, i32
  }
  func.func @transform_1(%arg0: i32, %arg1: i32, %arg2: i32) -> (i32, i32) {
    %c0_i32 = arith.constant 0 : i32
    return %arg2, %arg1 : i32, i32
  }
  func.func @transform_2(%arg0: i32, %arg1: i32, %arg2: i32) -> (i32, i32) {
    %c0_i32 = arith.constant 0 : i32
    %c0_i32_0 = arith.constant 0 : i32
    return %c0_i32, %arg1 : i32, i32
  }
  func.func @transform_3(%arg0: i32, %arg1: i32, %arg2: i32) -> (i32, i32) {
    %c0_i32 = arith.constant 0 : i32
    %c0_i32_0 = arith.constant 0 : i32
    return %c0_i32, %arg2 : i32, i32
  }
  func.func @transform_4(%arg0: i32, %arg1: i32, %arg2: i32) -> (i32, i32) {
    %c0_i32 = arith.constant 0 : i32
    %c0_i32_0 = arith.constant 0 : i32
    return %c0_i32, %arg2 : i32, i32
  }
  func.func @transform_5(%arg0: i32, %arg1: i32, %arg2: i32) -> (i32, i32) {
    %c0_i32 = arith.constant 0 : i32
    return %arg0, %arg1 : i32, i32
  }
}

module attributes {stable_mosaic.version = 11 : i64} {
  func.func @_ln_pre_kernel(%arg0: i32, %arg1: memref<1x8x128xbf16, #tpu.memory_space<vmem>>, %arg2: memref<8x128xf32, #tpu.memory_space<vmem>>, %arg3: memref<1x128xf32, #tpu.memory_space<vmem>>, %arg4: memref<1x128xf32, #tpu.memory_space<vmem>>, %arg5: memref<1x8x128xbf16, #tpu.memory_space<vmem>>) attributes {dimension_semantics = [#tpu.dimension_semantics<parallel>], iteration_bounds = array<i64: 2>, scalar_prefetch = 0 : i64, scratch_operands = 0 : i64, tpu.core_type = #tpu.core_type<tc>, window_params = [{transform_indices = @transform_0, window_bounds = array<i64: 1, 8, 128>}, {pipeline_mode = #tpu.pipeline_mode<synchronous>, transform_indices = @transform_1, window_bounds = array<i64: 8, 128>}, {pipeline_mode = #tpu.pipeline_mode<synchronous>, transform_indices = @transform_2, window_bounds = array<i64: 1, 128>}, {pipeline_mode = #tpu.pipeline_mode<synchronous>, transform_indices = @transform_3, window_bounds = array<i64: 1, 128>}, {transform_indices = @transform_4, window_bounds = array<i64: 1, 8, 128>}]} {
    %c0 = arith.constant 0 : index
    %c0_0 = arith.constant 0 : index
    %c0_1 = arith.constant 0 : index
    %0 = vector.load %arg1[%c0, %c0_0, %c0_1] : memref<1x8x128xbf16, #tpu.memory_space<vmem>>, vector<1x8x128xbf16>
    %1 = vector.shape_cast %0 : vector<1x8x128xbf16> to vector<8x128xbf16>
    %2 = arith.extf %1 : vector<8x128xbf16> to vector<8x128xf32>
    %c0_2 = arith.constant 0 : index
    %c0_3 = arith.constant 0 : index
    %3 = vector.load %arg2[%c0_2, %c0_3] : memref<8x128xf32, #tpu.memory_space<vmem>>, vector<8x128xf32>
    %4 = arith.addf %2, %3 : vector<8x128xf32>
    %cst = arith.constant dense<0.000000e+00> : vector<8xf32>
    %5 = vector.multi_reduction <add>, %4, %cst [1] : vector<8x128xf32> to vector<8xf32>
    %6 = vector.shape_cast %5 : vector<8xf32> to vector<8x1xf32>
    %cst_4 = arith.constant 1.280000e+02 : f32
    %7 = vector.broadcast %cst_4 : f32 to vector<8x1xf32>
    %8 = arith.divf %6, %7 : vector<8x1xf32>
    %9 = vector.broadcast %8 : vector<8x1xf32> to vector<8x128xf32>
    %10 = arith.subf %4, %9 : vector<8x128xf32>
    %11 = arith.mulf %10, %10 : vector<8x128xf32>
    %cst_5 = arith.constant dense<0.000000e+00> : vector<8xf32>
    %12 = vector.multi_reduction <add>, %11, %cst_5 [1] : vector<8x128xf32> to vector<8xf32>
    %13 = vector.shape_cast %12 : vector<8xf32> to vector<8x1xf32>
    %cst_6 = arith.constant 1.280000e+02 : f32
    %14 = vector.broadcast %cst_6 : f32 to vector<8x1xf32>
    %15 = arith.divf %13, %14 : vector<8x1xf32>
    %cst_7 = arith.constant 9.99999974E-6 : f32
    %16 = vector.broadcast %cst_7 : f32 to vector<8x1xf32>
    %17 = arith.addf %15, %16 : vector<8x1xf32>
    %18 = math.rsqrt %17 : vector<8x1xf32>
    %19 = vector.broadcast %18 : vector<8x1xf32> to vector<8x128xf32>
    %20 = arith.mulf %10, %19 : vector<8x128xf32>
    %c0_8 = arith.constant 0 : index
    %c0_9 = arith.constant 0 : index
    %21 = vector.load %arg3[%c0_8, %c0_9] : memref<1x128xf32, #tpu.memory_space<vmem>>, vector<1x128xf32>
    %22 = vector.broadcast %21 : vector<1x128xf32> to vector<8x128xf32>
    %23 = arith.mulf %20, %22 : vector<8x128xf32>
    %c0_10 = arith.constant 0 : index
    %c0_11 = arith.constant 0 : index
    %24 = vector.load %arg4[%c0_10, %c0_11] : memref<1x128xf32, #tpu.memory_space<vmem>>, vector<1x128xf32>
    %25 = vector.broadcast %24 : vector<1x128xf32> to vector<8x128xf32>
    %26 = arith.addf %23, %25 : vector<8x128xf32>
    %27 = arith.truncf %26 : vector<8x128xf32> to vector<8x128xbf16>
    %c0_12 = arith.constant 0 : index
    %c0_13 = arith.constant 0 : index
    %c0_14 = arith.constant 0 : index
    %28 = vector.load %arg5[%c0_12, %c0_13, %c0_14] : memref<1x8x128xbf16, #tpu.memory_space<vmem>>, vector<1x8x128xbf16>
    %29 = vector.shape_cast %28 : vector<1x8x128xbf16> to vector<8x128xbf16>
    %30 = vector.shape_cast %27 : vector<8x128xbf16> to vector<1x8x128xbf16>
    tpu.vector_store %arg5[%c0_12, %c0_13, %c0_14], %30 {strides = array<i32>} : memref<1x8x128xbf16, #tpu.memory_space<vmem>>, vector<1x8x128xbf16>,
    return
  }
  func.func @transform_0(%arg0: i32) -> (i32, i32, i32) {
    %c0_i32 = arith.constant 0 : i32
    %c0_i32_0 = arith.constant 0 : i32
    %c0_i32_1 = arith.constant 0 : i32
    return %arg0, %c0_i32, %c0_i32_0 : i32, i32, i32
  }
  func.func @transform_1(%arg0: i32) -> (i32, i32) {
    %c0_i32 = arith.constant 0 : i32
    %c0_i32_0 = arith.constant 0 : i32
    %c0_i32_1 = arith.constant 0 : i32
    return %c0_i32, %c0_i32_0 : i32, i32
  }
  func.func @transform_2(%arg0: i32) -> (i32, i32) {
    %c0_i32 = arith.constant 0 : i32
    %c0_i32_0 = arith.constant 0 : i32
    %c0_i32_1 = arith.constant 0 : i32
    return %c0_i32, %c0_i32_0 : i32, i32
  }
  func.func @transform_3(%arg0: i32) -> (i32, i32) {
    %c0_i32 = arith.constant 0 : i32
    %c0_i32_0 = arith.constant 0 : i32
    %c0_i32_1 = arith.constant 0 : i32
    return %c0_i32, %c0_i32_0 : i32, i32
  }
  func.func @transform_4(%arg0: i32) -> (i32, i32, i32) {
    %c0_i32 = arith.constant 0 : i32
    %c0_i32_0 = arith.constant 0 : i32
    %c0_i32_1 = arith.constant 0 : i32
    return %arg0, %c0_i32, %c0_i32_0 : i32, i32, i32
  }
}

module attributes {stable_mosaic.version = 11 : i64} {
  func.func @_attention_kernel(%arg0: i32, %arg1: i32, %arg2: memref<1x8x128xbf16, #tpu.memory_space<vmem>>, %arg3: memref<1x8x128xbf16, #tpu.memory_space<vmem>>, %arg4: memref<1x8x128xbf16, #tpu.memory_space<vmem>>, %arg5: memref<1x8x128xbf16, #tpu.memory_space<vmem>>) attributes {dimension_semantics = [#tpu.dimension_semantics<parallel>, #tpu.dimension_semantics<parallel>], iteration_bounds = array<i64: 2, 1>, scalar_prefetch = 0 : i64, scratch_operands = 0 : i64, tpu.core_type = #tpu.core_type<tc>, window_params = [{transform_indices = @transform_0, window_bounds = array<i64: 1, 8, 128>}, {transform_indices = @transform_1, window_bounds = array<i64: 1, 8, 128>}, {transform_indices = @transform_2, window_bounds = array<i64: 1, 8, 128>}, {transform_indices = @transform_3, window_bounds = array<i64: 1, 8, 128>}]} {
    %0 = tpu.iota {dimensions = array<i32: 1>} : vector<8x8xi32>
    %c0 = arith.constant 0 : index
    %c0_0 = arith.constant 0 : index
    %c0_1 = arith.constant 0 : index
    %1 = vector.load %arg2[%c0, %c0_0, %c0_1] : memref<1x8x128xbf16, #tpu.memory_space<vmem>>, vector<1x8x32xbf16>
    %2 = vector.shape_cast %1 : vector<1x8x32xbf16> to vector<8x32xbf16>
    %c0_2 = arith.constant 0 : index
    %c0_3 = arith.constant 0 : index
    %c0_4 = arith.constant 0 : index
    %3 = vector.load %arg3[%c0_2, %c0_3, %c0_4] : memref<1x8x128xbf16, #tpu.memory_space<vmem>>, vector<1x8x32xbf16>
    %4 = vector.shape_cast %3 : vector<1x8x32xbf16> to vector<8x32xbf16>
    %c0_5 = arith.constant 0 : index
    %c0_6 = arith.constant 0 : index
    %c0_7 = arith.constant 0 : index
    %5 = vector.load %arg4[%c0_5, %c0_6, %c0_7] : memref<1x8x128xbf16, #tpu.memory_space<vmem>>, vector<1x8x32xbf16>
    %6 = vector.shape_cast %5 : vector<1x8x32xbf16> to vector<8x32xbf16>
    %cst = arith.constant dense<0.000000e+00> : vector<8x8xf32>
    %7 = tpu.matmul %2, %4, %cst {dimension_numbers = #tpu.dot_dimension_numbers<[1], [1], [0], [0], [0, 0, 1, 0], [], []>} : vector<8x32xbf16>, vector<8x32xbf16>, vector<8x8xf32> -> vector<8x8xf32>
    %cst_8 = arith.constant 0.176776692 : f32
    %8 = vector.broadcast %cst_8 : f32 to vector<8x8xf32>
    %9 = arith.mulf %7, %8 : vector<8x8xf32>
    %c5_i32 = arith.constant 5 : i32
    %10 = vector.broadcast %c5_i32 : i32 to vector<8x8xi32>
    %11 = arith.cmpi slt, %0, %10 : vector<8x8xi32>
    %cst_9 = arith.constant -1.000000e+30 : f32
    %12 = vector.broadcast %cst_9 : f32 to vector<8x8xf32>
    %13 = arith.select %11, %9, %12 : vector<8x8xi1>, vector<8x8xf32>
    %cst_10 = arith.constant dense<0xFF800000> : vector<8xf32>
    %14 = vector.multi_reduction <maximumf>, %13, %cst_10 [1] : vector<8x8xf32> to vector<8xf32>
    %15 = vector.shape_cast %14 : vector<8xf32> to vector<8x1xf32>
    %16 = vector.broadcast %15 : vector<8x1xf32> to vector<8x8xf32>
    %17 = arith.subf %13, %16 : vector<8x8xf32>
    %18 = math.exp %17 : vector<8x8xf32>
    %cst_11 = arith.constant dense<0.000000e+00> : vector<8xf32>
    %19 = vector.multi_reduction <add>, %18, %cst_11 [1] : vector<8x8xf32> to vector<8xf32>
    %20 = vector.shape_cast %19 : vector<8xf32> to vector<8x1xf32>
    %21 = tpu.reciprocal %20 {approx = true} : vector<8x1xf32> -> vector<8x1xf32>
    %22 = vector.broadcast %21 : vector<8x1xf32> to vector<8x8xf32>
    %23 = arith.mulf %18, %22 : vector<8x8xf32>
    %24 = arith.truncf %23 : vector<8x8xf32> to vector<8x8xbf16>
    %cst_12 = arith.constant dense<0.000000e+00> : vector<8x32xf32>
    %25 = tpu.matmul %24, %6, %cst_12 {dimension_numbers = #tpu.dot_dimension_numbers<[1], [0], [0], [1], [0, 0, 1, 1], [], []>} : vector<8x8xbf16>, vector<8x32xbf16>, vector<8x32xf32> -> vector<8x32xf32>
    %26 = arith.truncf %25 : vector<8x32xf32> to vector<8x32xbf16>
    %c0_13 = arith.constant 0 : index
    %c0_14 = arith.constant 0 : index
    %c0_15 = arith.constant 0 : index
    %27 = vector.load %arg5[%c0_13, %c0_14, %c0_15] : memref<1x8x128xbf16, #tpu.memory_space<vmem>>, vector<1x8x32xbf16>
    %28 = vector.shape_cast %27 : vector<1x8x32xbf16> to vector<8x32xbf16>
    %29 = vector.shape_cast %26 : vector<8x32xbf16> to vector<1x8x32xbf16>
    tpu.vector_store %arg5[%c0_13, %c0_14, %c0_15], %29 {strides = array<i32>} : memref<1x8x128xbf16, #tpu.memory_space<vmem>>, vector<1x8x32xbf16>,
    %c0_16 = arith.constant 0 : index
    %c0_17 = arith.constant 0 : index
    %c32 = arith.constant 32 : index
    %30 = vector.load %arg2[%c0_16, %c0_17, %c32] : memref<1x8x128xbf16, #tpu.memory_space<vmem>>, vector<1x8x32xbf16>
    %31 = vector.shape_cast %30 : vector<1x8x32xbf16> to vector<8x32xbf16>
    %c0_18 = arith.constant 0 : index
    %c0_19 = arith.constant 0 : index
    %c32_20 = arith.constant 32 : index
    %32 = vector.load %arg3[%c0_18, %c0_19, %c32_20] : memref<1x8x128xbf16, #tpu.memory_space<vmem>>, vector<1x8x32xbf16>
    %33 = vector.shape_cast %32 : vector<1x8x32xbf16> to vector<8x32xbf16>
    %c0_21 = arith.constant 0 : index
    %c0_22 = arith.constant 0 : index
    %c32_23 = arith.constant 32 : index
    %34 = vector.load %arg4[%c0_21, %c0_22, %c32_23] : memref<1x8x128xbf16, #tpu.memory_space<vmem>>, vector<1x8x32xbf16>
    %35 = vector.shape_cast %34 : vector<1x8x32xbf16> to vector<8x32xbf16>
    %cst_24 = arith.constant dense<0.000000e+00> : vector<8x8xf32>
    %36 = tpu.matmul %31, %33, %cst_24 {dimension_numbers = #tpu.dot_dimension_numbers<[1], [1], [0], [0], [0, 0, 1, 0], [], []>} : vector<8x32xbf16>, vector<8x32xbf16>, vector<8x8xf32> -> vector<8x8xf32>
    %cst_25 = arith.constant 0.176776692 : f32
    %37 = vector.broadcast %cst_25 : f32 to vector<8x8xf32>
    %38 = arith.mulf %36, %37 : vector<8x8xf32>
    %c5_i32_26 = arith.constant 5 : i32
    %39 = vector.broadcast %c5_i32_26 : i32 to vector<8x8xi32>
    %40 = arith.cmpi slt, %0, %39 : vector<8x8xi32>
    %cst_27 = arith.constant -1.000000e+30 : f32
    %41 = vector.broadcast %cst_27 : f32 to vector<8x8xf32>
    %42 = arith.select %40, %38, %41 : vector<8x8xi1>, vector<8x8xf32>
    %cst_28 = arith.constant dense<0xFF800000> : vector<8xf32>
    %43 = vector.multi_reduction <maximumf>, %42, %cst_28 [1] : vector<8x8xf32> to vector<8xf32>
    %44 = vector.shape_cast %43 : vector<8xf32> to vector<8x1xf32>
    %45 = vector.broadcast %44 : vector<8x1xf32> to vector<8x8xf32>
    %46 = arith.subf %42, %45 : vector<8x8xf32>
    %47 = math.exp %46 : vector<8x8xf32>
    %cst_29 = arith.constant dense<0.000000e+00> : vector<8xf32>
    %48 = vector.multi_reduction <add>, %47, %cst_29 [1] : vector<8x8xf32> to vector<8xf32>
    %49 = vector.shape_cast %48 : vector<8xf32> to vector<8x1xf32>
    %50 = tpu.reciprocal %49 {approx = true} : vector<8x1xf32> -> vector<8x1xf32>
    %51 = vector.broadcast %50 : vector<8x1xf32> to vector<8x8xf32>
    %52 = arith.mulf %47, %51 : vector<8x8xf32>
    %53 = arith.truncf %52 : vector<8x8xf32> to vector<8x8xbf16>
    %cst_30 = arith.constant dense<0.000000e+00> : vector<8x32xf32>
    %54 = tpu.matmul %53, %35, %cst_30 {dimension_numbers = #tpu.dot_dimension_numbers<[1], [0], [0], [1], [0, 0, 1, 1], [], []>} : vector<8x8xbf16>, vector<8x32xbf16>, vector<8x32xf32> -> vector<8x32xf32>
    %55 = arith.truncf %54 : vector<8x32xf32> to vector<8x32xbf16>
    %c0_31 = arith.constant 0 : index
    %c0_32 = arith.constant 0 : index
    %c32_33 = arith.constant 32 : index
    %56 = vector.load %arg5[%c0_31, %c0_32, %c32_33] : memref<1x8x128xbf16, #tpu.memory_space<vmem>>, vector<1x8x32xbf16>
    %57 = vector.shape_cast %56 : vector<1x8x32xbf16> to vector<8x32xbf16>
    %58 = vector.shape_cast %55 : vector<8x32xbf16> to vector<1x8x32xbf16>
    tpu.vector_store %arg5[%c0_31, %c0_32, %c32_33], %58 {strides = array<i32>} : memref<1x8x128xbf16, #tpu.memory_space<vmem>>, vector<1x8x32xbf16>,
    %c0_34 = arith.constant 0 : index
    %c0_35 = arith.constant 0 : index
    %c64 = arith.constant 64 : index
    %59 = vector.load %arg2[%c0_34, %c0_35, %c64] : memref<1x8x128xbf16, #tpu.memory_space<vmem>>, vector<1x8x32xbf16>
    %60 = vector.shape_cast %59 : vector<1x8x32xbf16> to vector<8x32xbf16>
    %c0_36 = arith.constant 0 : index
    %c0_37 = arith.constant 0 : index
    %c64_38 = arith.constant 64 : index
    %61 = vector.load %arg3[%c0_36, %c0_37, %c64_38] : memref<1x8x128xbf16, #tpu.memory_space<vmem>>, vector<1x8x32xbf16>
    %62 = vector.shape_cast %61 : vector<1x8x32xbf16> to vector<8x32xbf16>
    %c0_39 = arith.constant 0 : index
    %c0_40 = arith.constant 0 : index
    %c64_41 = arith.constant 64 : index
    %63 = vector.load %arg4[%c0_39, %c0_40, %c64_41] : memref<1x8x128xbf16, #tpu.memory_space<vmem>>, vector<1x8x32xbf16>
    %64 = vector.shape_cast %63 : vector<1x8x32xbf16> to vector<8x32xbf16>
    %cst_42 = arith.constant dense<0.000000e+00> : vector<8x8xf32>
    %65 = tpu.matmul %60, %62, %cst_42 {dimension_numbers = #tpu.dot_dimension_numbers<[1], [1], [0], [0], [0, 0, 1, 0], [], []>} : vector<8x32xbf16>, vector<8x32xbf16>, vector<8x8xf32> -> vector<8x8xf32>
    %cst_43 = arith.constant 0.176776692 : f32
    %66 = vector.broadcast %cst_43 : f32 to vector<8x8xf32>
    %67 = arith.mulf %65, %66 : vector<8x8xf32>
    %c5_i32_44 = arith.constant 5 : i32
    %68 = vector.broadcast %c5_i32_44 : i32 to vector<8x8xi32>
    %69 = arith.cmpi slt, %0, %68 : vector<8x8xi32>
    %cst_45 = arith.constant -1.000000e+30 : f32
    %70 = vector.broadcast %cst_45 : f32 to vector<8x8xf32>
    %71 = arith.select %69, %67, %70 : vector<8x8xi1>, vector<8x8xf32>
    %cst_46 = arith.constant dense<0xFF800000> : vector<8xf32>
    %72 = vector.multi_reduction <maximumf>, %71, %cst_46 [1] : vector<8x8xf32> to vector<8xf32>
    %73 = vector.shape_cast %72 : vector<8xf32> to vector<8x1xf32>
    %74 = vector.broadcast %73 : vector<8x1xf32> to vector<8x8xf32>
    %75 = arith.subf %71, %74 : vector<8x8xf32>
    %76 = math.exp %75 : vector<8x8xf32>
    %cst_47 = arith.constant dense<0.000000e+00> : vector<8xf32>
    %77 = vector.multi_reduction <add>, %76, %cst_47 [1] : vector<8x8xf32> to vector<8xf32>
    %78 = vector.shape_cast %77 : vector<8xf32> to vector<8x1xf32>
    %79 = tpu.reciprocal %78 {approx = true} : vector<8x1xf32> -> vector<8x1xf32>
    %80 = vector.broadcast %79 : vector<8x1xf32> to vector<8x8xf32>
    %81 = arith.mulf %76, %80 : vector<8x8xf32>
    %82 = arith.truncf %81 : vector<8x8xf32> to vector<8x8xbf16>
    %cst_48 = arith.constant dense<0.000000e+00> : vector<8x32xf32>
    %83 = tpu.matmul %82, %64, %cst_48 {dimension_numbers = #tpu.dot_dimension_numbers<[1], [0], [0], [1], [0, 0, 1, 1], [], []>} : vector<8x8xbf16>, vector<8x32xbf16>, vector<8x32xf32> -> vector<8x32xf32>
    %84 = arith.truncf %83 : vector<8x32xf32> to vector<8x32xbf16>
    %c0_49 = arith.constant 0 : index
    %c0_50 = arith.constant 0 : index
    %c64_51 = arith.constant 64 : index
    %85 = vector.load %arg5[%c0_49, %c0_50, %c64_51] : memref<1x8x128xbf16, #tpu.memory_space<vmem>>, vector<1x8x32xbf16>
    %86 = vector.shape_cast %85 : vector<1x8x32xbf16> to vector<8x32xbf16>
    %87 = vector.shape_cast %84 : vector<8x32xbf16> to vector<1x8x32xbf16>
    tpu.vector_store %arg5[%c0_49, %c0_50, %c64_51], %87 {strides = array<i32>} : memref<1x8x128xbf16, #tpu.memory_space<vmem>>, vector<1x8x32xbf16>,
    %c0_52 = arith.constant 0 : index
    %c0_53 = arith.constant 0 : index
    %c96 = arith.constant 96 : index
    %88 = vector.load %arg2[%c0_52, %c0_53, %c96] : memref<1x8x128xbf16, #tpu.memory_space<vmem>>, vector<1x8x32xbf16>
    %89 = vector.shape_cast %88 : vector<1x8x32xbf16> to vector<8x32xbf16>
    %c0_54 = arith.constant 0 : index
    %c0_55 = arith.constant 0 : index
    %c96_56 = arith.constant 96 : index
    %90 = vector.load %arg3[%c0_54, %c0_55, %c96_56] : memref<1x8x128xbf16, #tpu.memory_space<vmem>>, vector<1x8x32xbf16>
    %91 = vector.shape_cast %90 : vector<1x8x32xbf16> to vector<8x32xbf16>
    %c0_57 = arith.constant 0 : index
    %c0_58 = arith.constant 0 : index
    %c96_59 = arith.constant 96 : index
    %92 = vector.load %arg4[%c0_57, %c0_58, %c96_59] : memref<1x8x128xbf16, #tpu.memory_space<vmem>>, vector<1x8x32xbf16>
    %93 = vector.shape_cast %92 : vector<1x8x32xbf16> to vector<8x32xbf16>
    %cst_60 = arith.constant dense<0.000000e+00> : vector<8x8xf32>
    %94 = tpu.matmul %89, %91, %cst_60 {dimension_numbers = #tpu.dot_dimension_numbers<[1], [1], [0], [0], [0, 0, 1, 0], [], []>} : vector<8x32xbf16>, vector<8x32xbf16>, vector<8x8xf32> -> vector<8x8xf32>
    %cst_61 = arith.constant 0.176776692 : f32
    %95 = vector.broadcast %cst_61 : f32 to vector<8x8xf32>
    %96 = arith.mulf %94, %95 : vector<8x8xf32>
    %c5_i32_62 = arith.constant 5 : i32
    %97 = vector.broadcast %c5_i32_62 : i32 to vector<8x8xi32>
    %98 = arith.cmpi slt, %0, %97 : vector<8x8xi32>
    %cst_63 = arith.constant -1.000000e+30 : f32
    %99 = vector.broadcast %cst_63 : f32 to vector<8x8xf32>
    %100 = arith.select %98, %96, %99 : vector<8x8xi1>, vector<8x8xf32>
    %cst_64 = arith.constant dense<0xFF800000> : vector<8xf32>
    %101 = vector.multi_reduction <maximumf>, %100, %cst_64 [1] : vector<8x8xf32> to vector<8xf32>
    %102 = vector.shape_cast %101 : vector<8xf32> to vector<8x1xf32>
    %103 = vector.broadcast %102 : vector<8x1xf32> to vector<8x8xf32>
    %104 = arith.subf %100, %103 : vector<8x8xf32>
    %105 = math.exp %104 : vector<8x8xf32>
    %cst_65 = arith.constant dense<0.000000e+00> : vector<8xf32>
    %106 = vector.multi_reduction <add>, %105, %cst_65 [1] : vector<8x8xf32> to vector<8xf32>
    %107 = vector.shape_cast %106 : vector<8xf32> to vector<8x1xf32>
    %108 = tpu.reciprocal %107 {approx = true} : vector<8x1xf32> -> vector<8x1xf32>
    %109 = vector.broadcast %108 : vector<8x1xf32> to vector<8x8xf32>
    %110 = arith.mulf %105, %109 : vector<8x8xf32>
    %111 = arith.truncf %110 : vector<8x8xf32> to vector<8x8xbf16>
    %cst_66 = arith.constant dense<0.000000e+00> : vector<8x32xf32>
    %112 = tpu.matmul %111, %93, %cst_66 {dimension_numbers = #tpu.dot_dimension_numbers<[1], [0], [0], [1], [0, 0, 1, 1], [], []>} : vector<8x8xbf16>, vector<8x32xbf16>, vector<8x32xf32> -> vector<8x32xf32>
    %113 = arith.truncf %112 : vector<8x32xf32> to vector<8x32xbf16>
    %c0_67 = arith.constant 0 : index
    %c0_68 = arith.constant 0 : index
    %c96_69 = arith.constant 96 : index
    %114 = vector.load %arg5[%c0_67, %c0_68, %c96_69] : memref<1x8x128xbf16, #tpu.memory_space<vmem>>, vector<1x8x32xbf16>
    %115 = vector.shape_cast %114 : vector<1x8x32xbf16> to vector<8x32xbf16>
    %116 = vector.shape_cast %113 : vector<8x32xbf16> to vector<1x8x32xbf16>
    tpu.vector_store %arg5[%c0_67, %c0_68, %c96_69], %116 {strides = array<i32>} : memref<1x8x128xbf16, #tpu.memory_space<vmem>>, vector<1x8x32xbf16>,
    return
  }
  func.func @transform_0(%arg0: i32, %arg1: i32) -> (i32, i32, i32) {
    %c0_i32 = arith.constant 0 : i32
    %c0_i32_0 = arith.constant 0 : i32
    return %arg0, %c0_i32, %arg1 : i32, i32, i32
  }
  func.func @transform_1(%arg0: i32, %arg1: i32) -> (i32, i32, i32) {
    %c1_i32 = arith.constant 1 : i32
    %0 = arith.addi %arg1, %c1_i32 : i32
    %c0_i32 = arith.constant 0 : i32
    %c0_i32_0 = arith.constant 0 : i32
    return %arg0, %c0_i32, %0 : i32, i32, i32
  }
  func.func @transform_2(%arg0: i32, %arg1: i32) -> (i32, i32, i32) {
    %c2_i32 = arith.constant 2 : i32
    %0 = arith.addi %arg1, %c2_i32 : i32
    %c0_i32 = arith.constant 0 : i32
    %c0_i32_0 = arith.constant 0 : i32
    return %arg0, %c0_i32, %0 : i32, i32, i32
  }
  func.func @transform_3(%arg0: i32, %arg1: i32) -> (i32, i32, i32) {
    %c0_i32 = arith.constant 0 : i32
    %c0_i32_0 = arith.constant 0 : i32
    return %arg0, %c0_i32, %arg1 : i32, i32, i32
  }
}

module attributes {stable_mosaic.version = 11 : i64} {
  func.func @_fused_linear_kernel(%arg0: i32, %arg1: i32, %arg2: i32, %arg3: memref<16x128xbf16, #tpu.memory_space<vmem>>, %arg4: memref<128x128xbf16, #tpu.memory_space<vmem>>, %arg5: memref<1x128xf32, #tpu.memory_space<vmem>>, %arg6: memref<16x128xbf16, #tpu.memory_space<vmem>>, %arg7: memref<16x128xbf16, #tpu.memory_space<vmem>>) attributes {dimension_semantics = [#tpu.dimension_semantics<parallel>, #tpu.dimension_semantics<parallel>, #tpu.dimension_semantics<arbitrary>], iteration_bounds = array<i64: 1, 1, 1>, scalar_prefetch = 0 : i64, scratch_operands = 0 : i64, tpu.core_type = #tpu.core_type<tc>, window_params = [{transform_indices = @transform_0, window_bounds = array<i64: 16, 128>}, {transform_indices = @transform_1, window_bounds = array<i64: 128, 128>}, {transform_indices = @transform_2, window_bounds = array<i64: 1, 128>}, {transform_indices = @transform_3, window_bounds = array<i64: 16, 128>}, {transform_indices = @transform_4, window_bounds = array<i64: 16, 128>}]} {
    %c0 = arith.constant 0 : index
    %c0_0 = arith.constant 0 : index
    %0 = vector.load %arg3[%c0, %c0_0] : memref<16x128xbf16, #tpu.memory_space<vmem>>, vector<16x128xbf16>
    %c0_1 = arith.constant 0 : index
    %c0_2 = arith.constant 0 : index
    %1 = vector.load %arg4[%c0_1, %c0_2] : memref<128x128xbf16, #tpu.memory_space<vmem>>, vector<128x128xbf16>
    %cst = arith.constant dense<0.000000e+00> : vector<16x128xf32>
    %2 = tpu.matmul %0, %1, %cst {dimension_numbers = #tpu.dot_dimension_numbers<[1], [0], [0], [1], [0, 0, 1, 1], [], []>} : vector<16x128xbf16>, vector<128x128xbf16>, vector<16x128xf32> -> vector<16x128xf32>
    %c0_3 = arith.constant 0 : index
    %c0_4 = arith.constant 0 : index
    %3 = vector.load %arg5[%c0_3, %c0_4] : memref<1x128xf32, #tpu.memory_space<vmem>>, vector<1x128xf32>
    %4 = vector.broadcast %3 : vector<1x128xf32> to vector<16x128xf32>
    %5 = arith.addf %2, %4 : vector<16x128xf32>
    %c0_5 = arith.constant 0 : index
    %c0_6 = arith.constant 0 : index
    %6 = vector.load %arg6[%c0_5, %c0_6] : memref<16x128xbf16, #tpu.memory_space<vmem>>, vector<16x128xbf16>
    %7 = arith.extf %6 : vector<16x128xbf16> to vector<16x128xf32>
    %8 = arith.addf %5, %7 : vector<16x128xf32>
    %9 = arith.truncf %8 : vector<16x128xf32> to vector<16x128xbf16>
    %c0_7 = arith.constant 0 : index
    %c0_8 = arith.constant 0 : index
    %10 = vector.load %arg7[%c0_7, %c0_8] : memref<16x128xbf16, #tpu.memory_space<vmem>>, vector<16x128xbf16>
    tpu.vector_store %arg7[%c0_7, %c0_8], %9 {strides = array<i32>} : memref<16x128xbf16, #tpu.memory_space<vmem>>, vector<16x128xbf16>,
    return
  }
  func.func @transform_0(%arg0: i32, %arg1: i32, %arg2: i32) -> (i32, i32) {
    %c0_i32 = arith.constant 0 : i32
    return %arg0, %arg2 : i32, i32
  }
  func.func @transform_1(%arg0: i32, %arg1: i32, %arg2: i32) -> (i32, i32) {
    %c0_i32 = arith.constant 0 : i32
    return %arg2, %arg1 : i32, i32
  }
  func.func @transform_2(%arg0: i32, %arg1: i32, %arg2: i32) -> (i32, i32) {
    %c0_i32 = arith.constant 0 : i32
    %c0_i32_0 = arith.constant 0 : i32
    return %c0_i32, %arg1 : i32, i32
  }
  func.func @transform_3(%arg0: i32, %arg1: i32, %arg2: i32) -> (i32, i32) {
    %c0_i32 = arith.constant 0 : i32
    return %arg0, %arg1 : i32, i32
  }
  func.func @transform_4(%arg0: i32, %arg1: i32, %arg2: i32) -> (i32, i32) {
    %c0_i32 = arith.constant 0 : i32
    return %arg0, %arg1 : i32, i32
  }
}

module attributes {stable_mosaic.version = 11 : i64} {
  func.func @_fused_linear_kernel(%arg0: i32, %arg1: i32, %arg2: i32, %arg3: memref<16x128xbf16, #tpu.memory_space<vmem>>, %arg4: memref<128x256xbf16, #tpu.memory_space<vmem>>, %arg5: memref<1x256xf32, #tpu.memory_space<vmem>>, %arg6: memref<1x128xf32, #tpu.memory_space<vmem>>, %arg7: memref<1x128xf32, #tpu.memory_space<vmem>>, %arg8: memref<16x256xbf16, #tpu.memory_space<vmem>>, %arg9: memref<16x128xbf16, #tpu.memory_space<vmem>>) attributes {dimension_semantics = [#tpu.dimension_semantics<parallel>, #tpu.dimension_semantics<arbitrary>, #tpu.dimension_semantics<arbitrary>], iteration_bounds = array<i64: 1, 2, 1>, scalar_prefetch = 0 : i64, scratch_operands = 1 : i64, tpu.core_type = #tpu.core_type<tc>, window_params = [{transform_indices = @transform_0, window_bounds = array<i64: 16, 128>}, {transform_indices = @transform_1, window_bounds = array<i64: 128, 256>}, {transform_indices = @transform_2, window_bounds = array<i64: 1, 256>}, {transform_indices = @transform_3, window_bounds = array<i64: 1, 128>}, {transform_indices = @transform_4, window_bounds = array<i64: 1, 128>}, {transform_indices = @transform_5, window_bounds = array<i64: 16, 256>}]} {
    %c0_i32 = arith.constant 0 : i32
    %0 = arith.cmpi eq, %arg1, %c0_i32 : i32
    %1 = arith.extui %0 : i1 to i32
    %c0_i32_0 = arith.constant 0 : i32
    %2 = arith.cmpi ne, %1, %c0_i32_0 : i32
    scf.if %2 {
      %c0_10 = arith.constant 0 : index
      %c0_11 = arith.constant 0 : index
      %19 = vector.load %arg3[%c0_10, %c0_11] : memref<16x128xbf16, #tpu.memory_space<vmem>>, vector<16x128xbf16>
      %20 = arith.extf %19 : vector<16x128xbf16> to vector<16x128xf32>
      %cst_12 = arith.constant dense<0.000000e+00> : vector<16xf32>
      %21 = vector.multi_reduction <add>, %20, %cst_12 [1] : vector<16x128xf32> to vector<16xf32>
      %22 = vector.shape_cast %21 : vector<16xf32> to vector<16x1xf32>
      %cst_13 = arith.constant 1.280000e+02 : f32
      %23 = vector.broadcast %cst_13 : f32 to vector<16x1xf32>
      %24 = arith.divf %22, %23 : vector<16x1xf32>
      %25 = vector.broadcast %24 : vector<16x1xf32> to vector<16x128xf32>
      %26 = arith.subf %20, %25 : vector<16x128xf32>
      %27 = arith.mulf %26, %26 : vector<16x128xf32>
      %cst_14 = arith.constant dense<0.000000e+00> : vector<16xf32>
      %28 = vector.multi_reduction <add>, %27, %cst_14 [1] : vector<16x128xf32> to vector<16xf32>
      %29 = vector.shape_cast %28 : vector<16xf32> to vector<16x1xf32>
      %cst_15 = arith.constant 1.280000e+02 : f32
      %30 = vector.broadcast %cst_15 : f32 to vector<16x1xf32>
      %31 = arith.divf %29, %30 : vector<16x1xf32>
      %cst_16 = arith.constant 9.99999974E-6 : f32
      %32 = vector.broadcast %cst_16 : f32 to vector<16x1xf32>
      %33 = arith.addf %31, %32 : vector<16x1xf32>
      %34 = math.rsqrt %33 : vector<16x1xf32>
      %35 = vector.broadcast %34 : vector<16x1xf32> to vector<16x128xf32>
      %36 = arith.mulf %26, %35 : vector<16x128xf32>
      %c0_17 = arith.constant 0 : index
      %c0_18 = arith.constant 0 : index
      %37 = vector.load %arg6[%c0_17, %c0_18] : memref<1x128xf32, #tpu.memory_space<vmem>>, vector<1x128xf32>
      %38 = vector.broadcast %37 : vector<1x128xf32> to vector<16x128xf32>
      %39 = arith.mulf %36, %38 : vector<16x128xf32>
      %c0_19 = arith.constant 0 : index
      %c0_20 = arith.constant 0 : index
      %40 = vector.load %arg7[%c0_19, %c0_20] : memref<1x128xf32, #tpu.memory_space<vmem>>, vector<1x128xf32>
      %41 = vector.broadcast %40 : vector<1x128xf32> to vector<16x128xf32>
      %42 = arith.addf %39, %41 : vector<16x128xf32>
      %43 = arith.truncf %42 : vector<16x128xf32> to vector<16x128xbf16>
      %c0_21 = arith.constant 0 : index
      %c0_22 = arith.constant 0 : index
      %44 = vector.load %arg9[%c0_21, %c0_22] : memref<16x128xbf16, #tpu.memory_space<vmem>>, vector<16x128xbf16>
      tpu.vector_store %arg9[%c0_21, %c0_22], %43 {strides = array<i32>} : memref<16x128xbf16, #tpu.memory_space<vmem>>, vector<16x128xbf16>,
    } else {
    }
    %c0 = arith.constant 0 : index
    %c0_1 = arith.constant 0 : index
    %3 = vector.load %arg9[%c0, %c0_1] : memref<16x128xbf16, #tpu.memory_space<vmem>>, vector<16x128xbf16>
    %c0_2 = arith.constant 0 : index
    %c0_3 = arith.constant 0 : index
    %4 = vector.load %arg4[%c0_2, %c0_3] : memref<128x256xbf16, #tpu.memory_space<vmem>>, vector<128x256xbf16>
    %cst = arith.constant dense<0.000000e+00> : vector<16x256xf32>
    %5 = tpu.matmul %3, %4, %cst {dimension_numbers = #tpu.dot_dimension_numbers<[1], [0], [0], [1], [0, 0, 1, 1], [], []>} : vector<16x128xbf16>, vector<128x256xbf16>, vector<16x256xf32> -> vector<16x256xf32>
    %c0_4 = arith.constant 0 : index
    %c0_5 = arith.constant 0 : index
    %6 = vector.load %arg5[%c0_4, %c0_5] : memref<1x256xf32, #tpu.memory_space<vmem>>, vector<1x256xf32>
    %7 = vector.broadcast %6 : vector<1x256xf32> to vector<16x256xf32>
    %8 = arith.addf %5, %7 : vector<16x256xf32>
    %cst_6 = arith.constant 1.702000e+00 : f32
    %9 = vector.broadcast %cst_6 : f32 to vector<16x256xf32>
    %10 = arith.mulf %9, %8 : vector<16x256xf32>
    %11 = arith.negf %10 : vector<16x256xf32>
    %12 = math.exp %11 : vector<16x256xf32>
    %cst_7 = arith.constant 1.000000e+00 : f32
    %13 = vector.broadcast %cst_7 : f32 to vector<16x256xf32>
    %14 = arith.addf %13, %12 : vector<16x256xf32>
    %15 = arith.divf %13, %14 : vector<16x256xf32>
    %16 = arith.mulf %8, %15 : vector<16x256xf32>
    %17 = arith.truncf %16 : vector<16x256xf32> to vector<16x256xbf16>
    %c0_8 = arith.constant 0 : index
    %c0_9 = arith.constant 0 : index
    %18 = vector.load %arg8[%c0_8, %c0_9] : memref<16x256xbf16, #tpu.memory_space<vmem>>, vector<16x256xbf16>
    tpu.vector_store %arg8[%c0_8, %c0_9], %17 {strides = array<i32>} : memref<16x256xbf16, #tpu.memory_space<vmem>>, vector<16x256xbf16>,
    return
  }
  func.func @transform_0(%arg0: i32, %arg1: i32, %arg2: i32) -> (i32, i32) {
    %c0_i32 = arith.constant 0 : i32
    return %arg0, %arg2 : i32, i32
  }
  func.func @transform_1(%arg0: i32, %arg1: i32, %arg2: i32) -> (i32, i32) {
    %c0_i32 = arith.constant 0 : i32
    return %arg2, %arg1 : i32, i32
  }
  func.func @transform_2(%arg0: i32, %arg1: i32, %arg2: i32) -> (i32, i32) {
    %c0_i32 = arith.constant 0 : i32
    %c0_i32_0 = arith.constant 0 : i32
    return %c0_i32, %arg1 : i32, i32
  }
  func.func @transform_3(%arg0: i32, %arg1: i32, %arg2: i32) -> (i32, i32) {
    %c0_i32 = arith.constant 0 : i32
    %c0_i32_0 = arith.constant 0 : i32
    return %c0_i32, %arg2 : i32, i32
  }
  func.func @transform_4(%arg0: i32, %arg1: i32, %arg2: i32) -> (i32, i32) {
    %c0_i32 = arith.constant 0 : i32
    %c0_i32_0 = arith.constant 0 : i32
    return %c0_i32, %arg2 : i32, i32
  }
  func.func @transform_5(%arg0: i32, %arg1: i32, %arg2: i32) -> (i32, i32) {
    %c0_i32 = arith.constant 0 : i32
    return %arg0, %arg1 : i32, i32
  }
}

module attributes {stable_mosaic.version = 11 : i64} {
  func.func @_fused_linear_kernel(%arg0: i32, %arg1: i32, %arg2: i32, %arg3: memref<16x512xbf16, #tpu.memory_space<vmem>>, %arg4: memref<512x128xbf16, #tpu.memory_space<vmem>>, %arg5: memref<1x128xf32, #tpu.memory_space<vmem>>, %arg6: memref<16x128xbf16, #tpu.memory_space<vmem>>, %arg7: memref<16x128xbf16, #tpu.memory_space<vmem>>) attributes {dimension_semantics = [#tpu.dimension_semantics<parallel>, #tpu.dimension_semantics<parallel>, #tpu.dimension_semantics<arbitrary>], iteration_bounds = array<i64: 1, 1, 1>, scalar_prefetch = 0 : i64, scratch_operands = 0 : i64, tpu.core_type = #tpu.core_type<tc>, window_params = [{transform_indices = @transform_0, window_bounds = array<i64: 16, 512>}, {transform_indices = @transform_1, window_bounds = array<i64: 512, 128>}, {transform_indices = @transform_2, window_bounds = array<i64: 1, 128>}, {transform_indices = @transform_3, window_bounds = array<i64: 16, 128>}, {transform_indices = @transform_4, window_bounds = array<i64: 16, 128>}]} {
    %c0 = arith.constant 0 : index
    %c0_0 = arith.constant 0 : index
    %0 = vector.load %arg3[%c0, %c0_0] : memref<16x512xbf16, #tpu.memory_space<vmem>>, vector<16x512xbf16>
    %c0_1 = arith.constant 0 : index
    %c0_2 = arith.constant 0 : index
    %1 = vector.load %arg4[%c0_1, %c0_2] : memref<512x128xbf16, #tpu.memory_space<vmem>>, vector<512x128xbf16>
    %cst = arith.constant dense<0.000000e+00> : vector<16x128xf32>
    %2 = tpu.matmul %0, %1, %cst {dimension_numbers = #tpu.dot_dimension_numbers<[1], [0], [0], [1], [0, 0, 1, 1], [], []>} : vector<16x512xbf16>, vector<512x128xbf16>, vector<16x128xf32> -> vector<16x128xf32>
    %c0_3 = arith.constant 0 : index
    %c0_4 = arith.constant 0 : index
    %3 = vector.load %arg5[%c0_3, %c0_4] : memref<1x128xf32, #tpu.memory_space<vmem>>, vector<1x128xf32>
    %4 = vector.broadcast %3 : vector<1x128xf32> to vector<16x128xf32>
    %5 = arith.addf %2, %4 : vector<16x128xf32>
    %c0_5 = arith.constant 0 : index
    %c0_6 = arith.constant 0 : index
    %6 = vector.load %arg6[%c0_5, %c0_6] : memref<16x128xbf16, #tpu.memory_space<vmem>>, vector<16x128xbf16>
    %7 = arith.extf %6 : vector<16x128xbf16> to vector<16x128xf32>
    %8 = arith.addf %5, %7 : vector<16x128xf32>
    %9 = arith.truncf %8 : vector<16x128xf32> to vector<16x128xbf16>
    %c0_7 = arith.constant 0 : index
    %c0_8 = arith.constant 0 : index
    %10 = vector.load %arg7[%c0_7, %c0_8] : memref<16x128xbf16, #tpu.memory_space<vmem>>, vector<16x128xbf16>
    tpu.vector_store %arg7[%c0_7, %c0_8], %9 {strides = array<i32>} : memref<16x128xbf16, #tpu.memory_space<vmem>>, vector<16x128xbf16>,
    return
  }
  func.func @transform_0(%arg0: i32, %arg1: i32, %arg2: i32) -> (i32, i32) {
    %c0_i32 = arith.constant 0 : i32
    return %arg0, %arg2 : i32, i32
  }
  func.func @transform_1(%arg0: i32, %arg1: i32, %arg2: i32) -> (i32, i32) {
    %c0_i32 = arith.constant 0 : i32
    return %arg2, %arg1 : i32, i32
  }
  func.func @transform_2(%arg0: i32, %arg1: i32, %arg2: i32) -> (i32, i32) {
    %c0_i32 = arith.constant 0 : i32
    %c0_i32_0 = arith.constant 0 : i32
    return %c0_i32, %arg1 : i32, i32
  }
  func.func @transform_3(%arg0: i32, %arg1: i32, %arg2: i32) -> (i32, i32) {
    %c0_i32 = arith.constant 0 : i32
    return %arg0, %arg1 : i32, i32
  }
  func.func @transform_4(%arg0: i32, %arg1: i32, %arg2: i32) -> (i32, i32) {
    %c0_i32 = arith.constant 0 : i32
    return %arg0, %arg1 : i32, i32
  }
}

module attributes {stable_mosaic.version = 11 : i64} {
  func.func @_fused_linear_kernel(%arg0: i32, %arg1: i32, %arg2: i32, %arg3: memref<8x128xbf16, #tpu.memory_space<vmem>>, %arg4: memref<128x128xbf16, #tpu.memory_space<vmem>>, %arg5: memref<1x128xf32, #tpu.memory_space<vmem>>, %arg6: memref<1x128xf32, #tpu.memory_space<vmem>>, %arg7: memref<8x128xf32, #tpu.memory_space<vmem>>, %arg8: memref<8x128xbf16, #tpu.memory_space<vmem>>) attributes {dimension_semantics = [#tpu.dimension_semantics<parallel>, #tpu.dimension_semantics<arbitrary>, #tpu.dimension_semantics<arbitrary>], iteration_bounds = array<i64: 1, 1, 1>, scalar_prefetch = 0 : i64, scratch_operands = 1 : i64, tpu.core_type = #tpu.core_type<tc>, window_params = [{transform_indices = @transform_0, window_bounds = array<i64: 8, 128>}, {transform_indices = @transform_1, window_bounds = array<i64: 128, 128>}, {transform_indices = @transform_2, window_bounds = array<i64: 1, 128>}, {transform_indices = @transform_3, window_bounds = array<i64: 1, 128>}, {transform_indices = @transform_4, window_bounds = array<i64: 8, 128>}]} {
    %c0_i32 = arith.constant 0 : i32
    %0 = arith.cmpi eq, %arg1, %c0_i32 : i32
    %1 = arith.extui %0 : i1 to i32
    %c0_i32_0 = arith.constant 0 : i32
    %2 = arith.cmpi ne, %1, %c0_i32_0 : i32
    scf.if %2 {
      %c0_6 = arith.constant 0 : index
      %c0_7 = arith.constant 0 : index
      %7 = vector.load %arg3[%c0_6, %c0_7] : memref<8x128xbf16, #tpu.memory_space<vmem>>, vector<8x128xbf16>
      %8 = arith.extf %7 : vector<8x128xbf16> to vector<8x128xf32>
      %cst_8 = arith.constant dense<0.000000e+00> : vector<8xf32>
      %9 = vector.multi_reduction <add>, %8, %cst_8 [1] : vector<8x128xf32> to vector<8xf32>
      %10 = vector.shape_cast %9 : vector<8xf32> to vector<8x1xf32>
      %cst_9 = arith.constant 1.280000e+02 : f32
      %11 = vector.broadcast %cst_9 : f32 to vector<8x1xf32>
      %12 = arith.divf %10, %11 : vector<8x1xf32>
      %13 = vector.broadcast %12 : vector<8x1xf32> to vector<8x128xf32>
      %14 = arith.subf %8, %13 : vector<8x128xf32>
      %15 = arith.mulf %14, %14 : vector<8x128xf32>
      %cst_10 = arith.constant dense<0.000000e+00> : vector<8xf32>
      %16 = vector.multi_reduction <add>, %15, %cst_10 [1] : vector<8x128xf32> to vector<8xf32>
      %17 = vector.shape_cast %16 : vector<8xf32> to vector<8x1xf32>
      %cst_11 = arith.constant 1.280000e+02 : f32
      %18 = vector.broadcast %cst_11 : f32 to vector<8x1xf32>
      %19 = arith.divf %17, %18 : vector<8x1xf32>
      %cst_12 = arith.constant 9.99999974E-6 : f32
      %20 = vector.broadcast %cst_12 : f32 to vector<8x1xf32>
      %21 = arith.addf %19, %20 : vector<8x1xf32>
      %22 = math.rsqrt %21 : vector<8x1xf32>
      %23 = vector.broadcast %22 : vector<8x1xf32> to vector<8x128xf32>
      %24 = arith.mulf %14, %23 : vector<8x128xf32>
      %c0_13 = arith.constant 0 : index
      %c0_14 = arith.constant 0 : index
      %25 = vector.load %arg5[%c0_13, %c0_14] : memref<1x128xf32, #tpu.memory_space<vmem>>, vector<1x128xf32>
      %26 = vector.broadcast %25 : vector<1x128xf32> to vector<8x128xf32>
      %27 = arith.mulf %24, %26 : vector<8x128xf32>
      %c0_15 = arith.constant 0 : index
      %c0_16 = arith.constant 0 : index
      %28 = vector.load %arg6[%c0_15, %c0_16] : memref<1x128xf32, #tpu.memory_space<vmem>>, vector<1x128xf32>
      %29 = vector.broadcast %28 : vector<1x128xf32> to vector<8x128xf32>
      %30 = arith.addf %27, %29 : vector<8x128xf32>
      %31 = arith.truncf %30 : vector<8x128xf32> to vector<8x128xbf16>
      %c0_17 = arith.constant 0 : index
      %c0_18 = arith.constant 0 : index
      %32 = vector.load %arg8[%c0_17, %c0_18] : memref<8x128xbf16, #tpu.memory_space<vmem>>, vector<8x128xbf16>
      tpu.vector_store %arg8[%c0_17, %c0_18], %31 {strides = array<i32>} : memref<8x128xbf16, #tpu.memory_space<vmem>>, vector<8x128xbf16>,
    } else {
    }
    %c0 = arith.constant 0 : index
    %c0_1 = arith.constant 0 : index
    %3 = vector.load %arg8[%c0, %c0_1] : memref<8x128xbf16, #tpu.memory_space<vmem>>, vector<8x128xbf16>
    %c0_2 = arith.constant 0 : index
    %c0_3 = arith.constant 0 : index
    %4 = vector.load %arg4[%c0_2, %c0_3] : memref<128x128xbf16, #tpu.memory_space<vmem>>, vector<128x128xbf16>
    %cst = arith.constant dense<0.000000e+00> : vector<8x128xf32>
    %5 = tpu.matmul %3, %4, %cst {dimension_numbers = #tpu.dot_dimension_numbers<[1], [0], [0], [1], [0, 0, 1, 1], [], []>} : vector<8x128xbf16>, vector<128x128xbf16>, vector<8x128xf32> -> vector<8x128xf32>
    %c0_4 = arith.constant 0 : index
    %c0_5 = arith.constant 0 : index
    %6 = vector.load %arg7[%c0_4, %c0_5] : memref<8x128xf32, #tpu.memory_space<vmem>>, vector<8x128xf32>
    tpu.vector_store %arg7[%c0_4, %c0_5], %5 {strides = array<i32>} : memref<8x128xf32, #tpu.memory_space<vmem>>, vector<8x128xf32>,
    return
  }
  func.func @transform_0(%arg0: i32, %arg1: i32, %arg2: i32) -> (i32, i32) {
    %c0_i32 = arith.constant 0 : i32
    return %arg0, %arg2 : i32, i32
  }
  func.func @transform_1(%arg0: i32, %arg1: i32, %arg2: i32) -> (i32, i32) {
    %c0_i32 = arith.constant 0 : i32
    return %arg2, %arg1 : i32, i32
  }
  func.func @transform_2(%arg0: i32, %arg1: i32, %arg2: i32) -> (i32, i32) {
    %c0_i32 = arith.constant 0 : i32
    %c0_i32_0 = arith.constant 0 : i32
    return %c0_i32, %arg2 : i32, i32
  }
  func.func @transform_3(%arg0: i32, %arg1: i32, %arg2: i32) -> (i32, i32) {
    %c0_i32 = arith.constant 0 : i32
    %c0_i32_0 = arith.constant 0 : i32
    return %c0_i32, %arg2 : i32, i32
  }
  func.func @transform_4(%arg0: i32, %arg1: i32, %arg2: i32) -> (i32, i32) {
    %c0_i32 = arith.constant 0 : i32
    return %arg0, %arg1 : i32, i32
  }
}

</mosaic_0001>

<llo_original>
// kernel: encode_image.13
$region0: #{encode_image.13}
  #allocation0 [shape = 'u32[]', space=smem, size = 0x4, offset = 0x4, fixed_abs, tag = 'smem constant byte address 0x4 - core index']
  #allocation1 [shape = 'u32[144,128]{1,0:T(1,128)}', space=vmem, size = 0x12000, scoped, tag = 'internal scratch']
  %s0 = inlined_call_operand.vmem [shape: bf16[8,192], index: 0, kind: input, shape index: {}]
  %s1 = inlined_call_operand.vmem [shape: bf16[192,128], index: 1, kind: input, shape index: {}]
  %s2 = inlined_call_operand.vmem [shape: bf16[8,128], index: 2, kind: output, shape index: {}]
  %s3 = sld [smem:[#allocation0]]
  $region18: #{encode_image.13} parent=0
    _
  %s5 = ssub.s32 1, %s3
  %s6 = scalar_select 0, %s5, %s3
  // Predicated region
  $region2: #{encode_image.13} parent=0 // pred_check
    _
  $region3: #{encode_image.13} parent=0 // pred_check_branch
    %8 = sbr.rel (0) target = $region5
  $region4: #{encode_image.13} parent=0 // pred_region
    _
  $region5: #{encode_image.13} parent=0 // pred_fallthru
    _
  // Predicated region
  $region6: #{encode_image.13} parent=0 // pred_check
    _
  $region7: #{encode_image.13} parent=0 // pred_check_branch
    %10 = sbr.rel (0) target = $region9
  $region8: #{encode_image.13} parent=0 // pred_region
    _
  $region9: #{encode_image.13} parent=0 // pred_fallthru
    _
  %v12 = vld [vmem:[%s0] sm:$0xff]
  %v13 = vld [vmem:[%s1] sm:$0xf]
  %v14 = vld [vmem:[%s1 + $0x4] sm:$0xf]
  %v15 = vld [vmem:[%s1 + $0x8] sm:$0xf]
  %v16 = vld [vmem:[%s1 + $0xc] sm:$0xf]
  %v17 = vld [vmem:[%s1 + $0x10] sm:$0xf]
  %v18 = vld [vmem:[%s1 + $0x14] sm:$0xf]
  %v19 = vld [vmem:[%s1 + $0x18] sm:$0xf]
  %v20 = vld [vmem:[%s1 + $0x1c] sm:$0xf]
  %v21 = vld [vmem:[%s1 + $0x20] sm:$0xf]
  %v22 = vld [vmem:[%s1 + $0x24] sm:$0xf]
  %v23 = vld [vmem:[%s1 + $0x28] sm:$0xf]
  %v24 = vld [vmem:[%s1 + $0x2c] sm:$0xf]
  %v25 = vld [vmem:[%s1 + $0x30] sm:$0xf]
  %v26 = vld [vmem:[%s1 + $0x34] sm:$0xf]
  %v27 = vld [vmem:[%s1 + $0x38] sm:$0xf]
  %v28 = vld [vmem:[%s1 + $0x3c] sm:$0xf]
  %v29 = vld [vmem:[%s1 + $0x40] sm:$0xf]
  %v30 = vld [vmem:[%s1 + $0x44] sm:$0xf]
  %v31 = vld [vmem:[%s1 + $0x48] sm:$0xf]
  %v32 = vld [vmem:[%s1 + $0x4c] sm:$0xf]
  %v33 = vld [vmem:[%s1 + $0x50] sm:$0xf]
  %v34 = vld [vmem:[%s1 + $0x54] sm:$0xf]
  %v35 = vld [vmem:[%s1 + $0x58] sm:$0xf]
  %v36 = vld [vmem:[%s1 + $0x5c] sm:$0xf]
  %v38 = vunpack.c.l.b16 %v12
  %v39 = vunpack.c.h.b16 %v12
  %v40 = vpack.c.b16 %v38, %v38
  %v41 = vpack.c.b16 %v39, %v39
  %v67 = vunpack.c.l.b16 %v13
  %v68 = vunpack.c.l.b16 %v14
  %v69 = vunpack.c.l.b16 %v15
  %v70 = vunpack.c.l.b16 %v16
  %v71 = vunpack.c.l.b16 %v17
  %v72 = vunpack.c.l.b16 %v18
  %v73 = vunpack.c.l.b16 %v19
  %v74 = vunpack.c.l.b16 %v20
  %v75 = vunpack.c.l.b16 %v21
  %v76 = vunpack.c.l.b16 %v22
  %v77 = vunpack.c.l.b16 %v23
  %v78 = vunpack.c.l.b16 %v24
  %v79 = vunpack.c.l.b16 %v25
  %v80 = vunpack.c.l.b16 %v26
  %v81 = vunpack.c.l.b16 %v27
  %v82 = vunpack.c.l.b16 %v28
  %v83 = vunpack.c.l.b16 %v29
  %v84 = vunpack.c.l.b16 %v30
  %v85 = vunpack.c.l.b16 %v31
  %v86 = vunpack.c.l.b16 %v32
  %v87 = vunpack.c.l.b16 %v33
  %v88 = vunpack.c.l.b16 %v34
  %v89 = vunpack.c.l.b16 %v35
  %v90 = vunpack.c.l.b16 %v36
  %v91 = vpack.c.b16 %v68, %v67
  %v92 = vpack.c.b16 %v70, %v69
  %v93 = vpack.c.b16 %v72, %v71
  %v94 = vpack.c.b16 %v74, %v73
  %v95 = vpack.c.b16 %v76, %v75
  %v96 = vpack.c.b16 %v78, %v77
  %v97 = vpack.c.b16 %v80, %v79
  %v98 = vpack.c.b16 %v82, %v81
  %v99 = vpack.c.b16 %v84, %v83
  %v100 = vpack.c.b16 %v86, %v85
  %v101 = vpack.c.b16 %v88, %v87
  %v102 = vpack.c.b16 %v90, %v89
  %vm115 = vcmask 523264
  %v117 = vsel %vm115, %v41, 0
  %119 = vmatprep.subr.bf16.mxu0 0
  %120 = vmatpush1.bf16.msra.mxu0 %v91
  %121 = vmatprep.subr.bf16.mxu0 0
  %122 = vmatpush1.bf16.msra.mxu0 %v92
  %123 = vmatprep.subr.bf16.mxu0 0
  %124 = vmatpush1.bf16.msra.mxu0 %v93
  %125 = vmatprep.subr.bf16.mxu0 0
  %126 = vmatpush1.bf16.msra.mxu0 %v94
  %127 = vmatprep.subr.bf16.mxu0 0
  %128 = vmatpush1.bf16.msra.mxu0 %v95
  %129 = vmatprep.subr.bf16.mxu0 0
  %130 = vmatpush1.bf16.msra.mxu0 %v96
  %131 = vmatprep.subr.bf16.mxu0 0
  %132 = vmatpush1.bf16.msra.mxu0 %v97
  %133 = vmatprep.subr.bf16.mxu0 0
  %134 = vmatpush1.bf16.msra.mxu0 %v98
  %135 = vmatprep.subr.bf16.mxu0 0
  %136 = vmatpush1.bf16.msra.mxu0 %v99
  %137 = vmatprep.subr.bf16.mxu0 0
  %138 = vmatpush1.bf16.msra.mxu0 %v100
  %139 = vmatprep.subr.bf16.mxu0 0
  %140 = vmatpush1.bf16.msra.mxu0 %v101
  %141 = vmatprep.subr.bf16.mxu0 0
  %142 = vmatpush1.bf16.msra.mxu0 %v102
  %143 = vmatprep.subr.bf16.mxu0 0
  %144 = vmatpush1.bf16.msra.mxu0 0
  %145 = vmatprep.subr.bf16.mxu0 0
  %146 = vmatpush1.bf16.msra.mxu0 0
  %147 = vmatprep.subr.bf16.mxu0 0
  %148 = vmatpush1.bf16.msra.mxu0 0
  %149 = vmatprep.subr.bf16.mxu0 0
  %150 = vmatpush1.bf16.msra.mxu0 0
  %151 = vmatprep.mubr.bf16.mxu0 %v117
  %152 = vmatmul.mubr.bf16.gmra.mrb[0].mxu0 %v40
  %v153 = vpop.f32.mrb[0].mxu0
  %v154 = vadd.f32 0.0, %v153
  %v155 = vpop.f32.mrb[0].mxu0
  %v156 = vpop.f32.mrb[0].mxu0
  %v157 = vpop.f32.mrb[0].mxu0
  %158 = vdwg.mxu0
  %v159 = vpack.c.bf16 %v154, %v154
  %160 = vst [vmem:[%s2] sm:$0xf] %v159
  // Predicated region
  $region10: #{encode_image.13} parent=0 // pred_check
    _
  $region11: #{encode_image.13} parent=0 // pred_check_branch
    %162 = sbr.rel (0) target = $region13
  $region12: #{encode_image.13} parent=0 // pred_region
    _
  $region13: #{encode_image.13} parent=0 // pred_fallthru
    _
  // Predicated region
  $region14: #{encode_image.13} parent=0 // pred_check
    _
  $region15: #{encode_image.13} parent=0 // pred_check_branch
    %164 = sbr.rel (0) target = $region17
  $region16: #{encode_image.13} parent=0 // pred_region
    _
  $region17: #{encode_image.13} parent=0 // pred_fallthru
    _

// kernel: encode_image.15
$region0: #{encode_image.15}
  #allocation0 [shape = 'u32[]', space=smem, size = 0x4, offset = 0x4, fixed_abs, tag = 'smem constant byte address 0x4 - core index']
  #allocation1 [shape = 'u32[144,128]{1,0:T(1,128)}', space=vmem, size = 0x12000, scoped, tag = 'internal scratch']
  #allocation2 [shape = 'bf16[16,128]{1,0:T(16,128)(2,1)}', space=vmem, size = 0x1000, scoped, tag = 'scratch operand']
  %s0 = inlined_call_operand.vmem [shape: bf16[16,128], index: 0, kind: input, shape index: {}]
  %s1 = inlined_call_operand.vmem [shape: bf16[128,384], index: 1, kind: input, shape index: {}]
  %s2 = inlined_call_operand.vmem [shape: f32[1,384], index: 2, kind: input, shape index: {}]
  %s3 = inlined_call_operand.vmem [shape: f32[1,128], index: 3, kind: input, shape index: {}]
  %s4 = inlined_call_operand.vmem [shape: f32[1,128], index: 4, kind: input, shape index: {}]
  %s5 = inlined_call_operand.vmem [shape: bf16[16,384], index: 5, kind: output, shape index: {}]
  %s6 = sld [smem:[#allocation0]]
  $region135: #{encode_image.15} parent=0
    _
  %s8 = ssub.s32 1, %s6
  %s9 = scalar_select 0, %s8, %s6
  $region1: #{encode_image.15} parent=0
    #allocation3 [shape = 'u8[65536]{0}', space=vmem, size = 0x10000, scoped, tag = 'input window, operand 1']
    #allocation4 [shape = 'u8[8192]{0}', space=vmem, size = 0x2000, scoped, tag = 'output window, operand 0']
    loop: start=0, step=1, limit=5
    $region2: #{encode_image.15} parent=1 // loop_pre_header
      _
    $region3: #{encode_image.15} parent=1 // loop_header
      %s11 = sphi 0, %s15
      %p12 = scmp.ge.s32.totalorder %s11, 5
      %s18 = sphi 0, %s37
      %s19 = sphi 0, %s33
      %s20 = sphi 0, %s29
      %s21 = sphi 0, %s18
      %s22 = sphi 0, %s19
      %s23 = sphi 0, %s20
      %s24 = sphi 0, %s21
      %s25 = sphi 0, %s22
      %s26 = sphi 0, %s23
      %s42 = sphi 0, %s44
      %s45 = sphi 0, %s42
      %s46 = sphi 0, %s45
      %s62 = sphi 0, %s46
      %s70 = sphi 0, %s72
      %s73 = sphi 0, %s70
      %s74 = sphi 0, %s73
      %s90 = sphi 0, %s74
      %s96 = sphi 0, %s98
      %s99 = sphi 0, %s96
      %s100 = sphi 0, %s99
      %s116 = sphi 0, %s100
      %s122 = sphi 0, %s124
      %s125 = sphi 0, %s122
      %s126 = sphi 0, %s125
      %s142 = sphi 0, %s126
      %s148 = sphi 0, %s150
      %s151 = sphi 0, %s148
      %s152 = sphi 0, %s151
      %s168 = sphi 0, %s152
      %s176 = sphi 0, %s178
      %s179 = sphi 0, %s176
      %s180 = sphi 0, %s179
      %s196 = sphi 0, %s180
    $region4: #{encode_image.15} parent=1 // loop_header_branch
      %14 = sbr.rel (%p12) target = $region8
    $region5: #{encode_image.15} parent=1 // loop_body
      %s16 = ssub.s32 %s11, 1
      %s17 = ssub.s32 %s11, 2
      %s27 = sadd.s32 1, %s20
      %p28 = scmp.ge.s32.totalorder %s27, 1
      %s29 = scalar_select %p28, 0, %s27
      %s30 = sadd.s32 1, %s19
      %s31 = scalar_select %p28, %s30, %s19
      %p32 = scmp.ge.s32.totalorder %s31, 3
      %s33 = scalar_select %p32, 0, %s31
      %s34 = sadd.s32 1, %s18
      %s35 = scalar_select %p32, %s34, %s18
      %p36 = scmp.ge.s32.totalorder %s35, 1
      %s37 = scalar_select %p36, 0, %s35
      %s38 = ssub.s32 %s18, %s37
      %s39 = ssub.s32 %s20, %s29
      %s40 = sor.u32 %s38, %s39
      %p41 = scmp.eq.s32.totalorder %s40, 0
      %s43 = sadd.s32 %s42, 1
      %s44 = scalar_select %p41, %s42, %s43
      %p47 = pneg %p41
      %p48 = scmp.eq.s32.totalorder %s11, 2
      %p49 = por %p47, %p48
      %p50 = scmp.ne.s32.totalorder %s42, %s45
      %p51 = scmp.eq.s32.totalorder %s11, 0
      %p52 = por %p50, %p51
      %p53 = scmp.ne.s32.totalorder %s42, %s45
      %p54 = scmp.eq.s32.totalorder %s16, 2
      %p55 = por %p53, %p54
      %p56 = scmp.ne.s32.totalorder %s45, %s46
      %p57 = scmp.eq.s32.totalorder %s16, 0
      %p58 = por %p56, %p57
      %p59 = scmp.ne.s32.totalorder %s45, %s46
      %p60 = scmp.eq.s32.totalorder %s17, 2
      %p61 = por %p59, %p60
      %p63 = scmp.ne.s32.totalorder %s46, %s62
      %p64 = scmp.eq.s32.totalorder %s17, 0
      %p65 = por %p63, %p64
      %s66 = ssub.s32 %s20, %s29
      %s67 = ssub.s32 %s19, %s33
      %s68 = sor.u32 %s66, %s67
      %p69 = scmp.eq.s32.totalorder %s68, 0
      %s71 = sadd.s32 %s70, 1
      %s72 = scalar_select %p69, %s70, %s71
      %p75 = pneg %p69
      %p76 = scmp.eq.s32.totalorder %s11, 2
      %p77 = por %p75, %p76
      %p78 = scmp.ne.s32.totalorder %s70, %s73
      %p79 = scmp.eq.s32.totalorder %s11, 0
      %p80 = por %p78, %p79
      %p81 = scmp.ne.s32.totalorder %s70, %s73
      %p82 = scmp.eq.s32.totalorder %s16, 2
      %p83 = por %p81, %p82
      %p84 = scmp.ne.s32.totalorder %s73, %s74
      %p85 = scmp.eq.s32.totalorder %s16, 0
      %p86 = por %p84, %p85
      %p87 = scmp.ne.s32.totalorder %s73, %s74
      %p88 = scmp.eq.s32.totalorder %s17, 2
      %p89 = por %p87, %p88
      %p91 = scmp.ne.s32.totalorder %s74, %s90
      %p92 = scmp.eq.s32.totalorder %s17, 0
      %p93 = por %p91, %p92
      %s94 = ssub.s32 %s19, %s33
      %p95 = scmp.eq.s32.totalorder %s94, 0
      %s97 = sadd.s32 %s96, 1
      %s98 = scalar_select %p95, %s96, %s97
      %p101 = pneg %p95
      %p102 = scmp.eq.s32.totalorder %s11, 2
      %p103 = por %p101, %p102
      %p104 = scmp.ne.s32.totalorder %s96, %s99
      %p105 = scmp.eq.s32.totalorder %s11, 0
      %p106 = por %p104, %p105
      %p107 = scmp.ne.s32.totalorder %s96, %s99
      %p108 = scmp.eq.s32.totalorder %s16, 2
      %p109 = por %p107, %p108
      %p110 = scmp.ne.s32.totalorder %s99, %s100
      %p111 = scmp.eq.s32.totalorder %s16, 0
      %p112 = por %p110, %p111
      %p113 = scmp.ne.s32.totalorder %s99, %s100
      %p114 = scmp.eq.s32.totalorder %s17, 2
      %p115 = por %p113, %p114
      %p117 = scmp.ne.s32.totalorder %s100, %s116
      %p118 = scmp.eq.s32.totalorder %s17, 0
      %p119 = por %p117, %p118
      %s120 = ssub.s32 %s20, %s29
      %p121 = scmp.eq.s32.totalorder %s120, 0
      %s123 = sadd.s32 %s122, 1
      %s124 = scalar_select %p121, %s122, %s123
      %p127 = pneg %p121
      %p128 = scmp.eq.s32.totalorder %s11, 2
      %p129 = por %p127, %p128
      %p130 = scmp.ne.s32.totalorder %s122, %s125
      %p131 = scmp.eq.s32.totalorder %s11, 0
      %p132 = por %p130, %p131
      %p133 = scmp.ne.s32.totalorder %s122, %s125
      %p134 = scmp.eq.s32.totalorder %s16, 2
      %p135 = por %p133, %p134
      %p136 = scmp.ne.s32.totalorder %s125, %s126
      %p137 = scmp.eq.s32.totalorder %s16, 0
      %p138 = por %p136, %p137
      %p139 = scmp.ne.s32.totalorder %s125, %s126
      %p140 = scmp.eq.s32.totalorder %s17, 2
      %p141 = por %p139, %p140
      %p143 = scmp.ne.s32.totalorder %s126, %s142
      %p144 = scmp.eq.s32.totalorder %s17, 0
      %p145 = por %p143, %p144
      %s146 = ssub.s32 %s20, %s29
      %p147 = scmp.eq.s32.totalorder %s146, 0
      %s149 = sadd.s32 %s148, 1
      %s150 = scalar_select %p147, %s148, %s149
      %p153 = pneg %p147
      %p154 = scmp.eq.s32.totalorder %s11, 2
      %p155 = por %p153, %p154
      %p156 = scmp.ne.s32.totalorder %s148, %s151
      %p157 = scmp.eq.s32.totalorder %s11, 0
      %p158 = por %p156, %p157
      %p159 = scmp.ne.s32.totalorder %s148, %s151
      %p160 = scmp.eq.s32.totalorder %s16, 2
      %p161 = por %p159, %p160
      %p162 = scmp.ne.s32.totalorder %s151, %s152
      %p163 = scmp.eq.s32.totalorder %s16, 0
      %p164 = por %p162, %p163
      %p165 = scmp.ne.s32.totalorder %s151, %s152
      %p166 = scmp.eq.s32.totalorder %s17, 2
      %p167 = por %p165, %p166
      %p169 = scmp.ne.s32.totalorder %s152, %s168
      %p170 = scmp.eq.s32.totalorder %s17, 0
      %p171 = por %p169, %p170
      %s172 = ssub.s32 %s18, %s37
      %s173 = ssub.s32 %s19, %s33
      %s174 = sor.u32 %s172, %s173
      %p175 = scmp.eq.s32.totalorder %s174, 0
      %s177 = sadd.s32 %s176, 1
      %s178 = scalar_select %p175, %s176, %s177
      %p181 = pneg %p175
      %p182 = scmp.eq.s32.totalorder %s11, 2
      %p183 = por %p181, %p182
      %p184 = scmp.ne.s32.totalorder %s176, %s179
      %p185 = scmp.eq.s32.totalorder %s11, 0
      %p186 = por %p184, %p185
      %p187 = scmp.ne.s32.totalorder %s176, %s179
      %p188 = scmp.eq.s32.totalorder %s16, 2
      %p189 = por %p187, %p188
      %p190 = scmp.ne.s32.totalorder %s179, %s180
      %p191 = scmp.eq.s32.totalorder %s16, 0
      %p192 = por %p190, %p191
      %p193 = scmp.ne.s32.totalorder %s179, %s180
      %p194 = scmp.eq.s32.totalorder %s17, 2
      %p195 = por %p193, %p194
      %p197 = scmp.ne.s32.totalorder %s180, %s196
      %p198 = scmp.eq.s32.totalorder %s17, 0
      %p199 = por %p197, %p198
      %p200 = scmp.le.s32.totalorder 1, %s11
      %p201 = scmp.lt.s32.totalorder %s11, 4
      %p202 = pnand %p200, %p201
      %p203 = pneg %p202
      // Predicated region
      $region9: #{encode_image.15} parent=5 // pred_check
        _
      $region10: #{encode_image.15} parent=5 // pred_check_branch
        %205 = sbr.rel (%p202) target = $region12
      $region11: #{encode_image.15} parent=5 // pred_region
        %s206 = ssub.s32 %s11, 1
        // Predicated region
        $region13: #{encode_image.15} parent=11 // pred_check
          %p207 = pneg %p58
        $region14: #{encode_image.15} parent=11 // pred_check_branch
          %209 = sbr.rel (%p207) target = $region16
        $region15: #{encode_image.15} parent=11 // pred_region
          %s210 = smul.u32 2, %s21
          %p211 = scmp.lt.s32.totalorder %s210, 1
          %s212 = scalar_select %p211, %s210, 1
          %p213 = scmp.lt.s32.totalorder %s23, 0
          %s214 = scalar_select %p213, %s23, 0
          %s215 = sadd.s32 %s214, %s212
          %s216 = smul.addr %s215, 4
          %s217 = scalar_lea.vmem %s0, %s216
          %s218 = smul.u32 2, %s21
        $region16: #{encode_image.15} parent=11 // pred_fallthru
          _
        // Predicated region
        $region17: #{encode_image.15} parent=11 // pred_check
          %p219 = pneg %p138
        $region18: #{encode_image.15} parent=11 // pred_check_branch
          %221 = sbr.rel (%p219) target = $region20
        $region19: #{encode_image.15} parent=11 // pred_region
          %p222 = scmp.lt.s32.totalorder %s23, 0
          %s223 = scalar_select %p222, %s23, 0
          %s224 = scalar_lea.vmem %s3, %s223
        $region20: #{encode_image.15} parent=11 // pred_fallthru
          _
        // Predicated region
        $region21: #{encode_image.15} parent=11 // pred_check
          %p225 = pneg %p164
        $region22: #{encode_image.15} parent=11 // pred_check_branch
          %227 = sbr.rel (%p225) target = $region24
        $region23: #{encode_image.15} parent=11 // pred_region
          %p228 = scmp.lt.s32.totalorder %s23, 0
          %s229 = scalar_select %p228, %s23, 0
          %s230 = scalar_lea.vmem %s4, %s229
        $region24: #{encode_image.15} parent=11 // pred_fallthru
          _
      $region12: #{encode_image.15} parent=5 // pred_fallthru
        _
      %p231 = scmp.lt.s32.totalorder %s11, 3
      // Predicated region
      $region25: #{encode_image.15} parent=5 // pred_check
        %p232 = pneg %p231
      $region26: #{encode_image.15} parent=5 // pred_check_branch
        %234 = sbr.rel (%p232) target = $region28
      $region27: #{encode_image.15} parent=5 // pred_region
        // Predicated region
        $region29: #{encode_image.15} parent=27 // pred_check
          %p235 = pneg %p80
        $region30: #{encode_image.15} parent=27 // pred_check_branch
          %237 = sbr.rel (%p235) target = $region32
        $region31: #{encode_image.15} parent=27 // pred_region
          %s238 = sand.u32 %s70, 1
          %s239 = sand.u32 %s70, 1
          %s240 = smul.addr %s239, 64
          %s241 = scalar_lea.vmem [#allocation3], %s240
          %s242 = smul.u32 16, %s20
          %s243 = smul.addr %s242, 3
          %s244 = sadd.s32 %s19, %s243
          %s245 = smul.addr %s244, 4
          %s246 = scalar_lea.vmem %s1, %s245
          // Predicated region
          $region33: #{encode_image.15} parent=31 // pred_check
            _
          $region34: #{encode_image.15} parent=31 // pred_check_branch
            %248 = sbr.rel (0) target = $region36
          $region35: #{encode_image.15} parent=31 // pred_region
            // Predicated region
            $region37: #{encode_image.15} parent=35 // pred_check
              _
            $region38: #{encode_image.15} parent=35 // pred_check_branch
              %250 = sbr.rel target = $region40
            $region39: #{encode_image.15} parent=35 // pred_region
              // Predicated region
              $region52: #{encode_image.15} parent=39 // pred_check
                _
              $region53: #{encode_image.15} parent=39 // pred_check_branch
                %295 = sbr.rel (0) target = $region55
              $region54: #{encode_image.15} parent=39 // pred_region
                loop: start=0, step=1, limit=1
                $region56: #{encode_image.15} parent=54 // loop_pre_header
                  _
                $region57: #{encode_image.15} parent=54 // loop_header
                  %s297 = sphi 0, %s301
                  %p298 = scmp.ge.s32.totalorder %s297, 1
                  %s302 = sphi %s246, %s246
                  %s303 = sphi %s241, %s241
                $region58: #{encode_image.15} parent=54 // loop_header_branch
                  %300 = sbr.rel (%p298) target = $region62
                $region59: #{encode_image.15} parent=54 // loop_body
                  _
                $region60: #{encode_image.15} parent=54 // loop_footer
                  %s301 = sadd.s32 1, %s297
                $region61: #{encode_image.15} parent=54 // loop_footer_branch
                  %296 = sbr.rel target = $region57
                $region62: #{encode_image.15} parent=54 // loop_exit
                  _
                loop: start=0, step=1, limit=1
                $region63: #{encode_image.15} parent=54 // loop_pre_header
                  _
                $region64: #{encode_image.15} parent=54 // loop_header
                  %s306 = sphi 0, %s310
                  %p307 = scmp.ge.s32.totalorder %s306, 1
                  %s311 = sphi %s246, %s246
                  %s312 = sphi %s241, %s241
                $region65: #{encode_image.15} parent=54 // loop_header_branch
                  %309 = sbr.rel (%p307) target = $region69
                $region66: #{encode_image.15} parent=54 // loop_body
                  %v313 = vld [vmem:[%s311] sm:$0xf]
                  %314 = vst [vmem:[%s312] sm:$0xf] %v313
                  %v315 = vld [vmem:[%s311 + $0xc] sm:$0xf]
                  %316 = vst [vmem:[%s312 + $0x4] sm:$0xf] %v315
                  %v317 = vld [vmem:[%s311 + $0x18] sm:$0xf]
                  %318 = vst [vmem:[%s312 + $0x8] sm:$0xf] %v317
                  %v319 = vld [vmem:[%s311 + $0x24] sm:$0xf]
                  %320 = vst [vmem:[%s312 + $0xc] sm:$0xf] %v319
                  %v321 = vld [vmem:[%s311 + $0x30] sm:$0xf]
                  %322 = vst [vmem:[%s312 + $0x10] sm:$0xf] %v321
                  %v323 = vld [vmem:[%s311 + $0x3c] sm:$0xf]
                  %324 = vst [vmem:[%s312 + $0x14] sm:$0xf] %v323
                  %v325 = vld [vmem:[%s311 + $0x48] sm:$0xf]
                  %326 = vst [vmem:[%s312 + $0x18] sm:$0xf] %v325
                  %v327 = vld [vmem:[%s311 + $0x54] sm:$0xf]
                  %328 = vst [vmem:[%s312 + $0x1c] sm:$0xf] %v327
                  %v329 = vld [vmem:[%s311 + $0x60] sm:$0xf]
                  %330 = vst [vmem:[%s312 + $0x20] sm:$0xf] %v329
                  %v331 = vld [vmem:[%s311 + $0x6c] sm:$0xf]
                  %332 = vst [vmem:[%s312 + $0x24] sm:$0xf] %v331
                  %v333 = vld [vmem:[%s311 + $0x78] sm:$0xf]
                  %334 = vst [vmem:[%s312 + $0x28] sm:$0xf] %v333
                  %v335 = vld [vmem:[%s311 + $0x84] sm:$0xf]
                  %336 = vst [vmem:[%s312 + $0x2c] sm:$0xf] %v335
                  %v337 = vld [vmem:[%s311 + $0x90] sm:$0xf]
                  %338 = vst [vmem:[%s312 + $0x30] sm:$0xf] %v337
                  %v339 = vld [vmem:[%s311 + $0x9c] sm:$0xf]
                  %340 = vst [vmem:[%s312 + $0x34] sm:$0xf] %v339
                  %v341 = vld [vmem:[%s311 + $0xa8] sm:$0xf]
                  %342 = vst [vmem:[%s312 + $0x38] sm:$0xf] %v341
                  %v343 = vld [vmem:[%s311 + $0xb4] sm:$0xf]
                  %344 = vst [vmem:[%s312 + $0x3c] sm:$0xf] %v343
                $region67: #{encode_image.15} parent=54 // loop_footer
                  %s310 = sadd.s32 1, %s306
                $region68: #{encode_image.15} parent=54 // loop_footer_branch
                  %305 = sbr.rel target = $region64
                $region69: #{encode_image.15} parent=54 // loop_exit
                  _
              $region55: #{encode_image.15} parent=39 // pred_fallthru
                _
            $region40: #{encode_image.15} parent=35 // pred_fallthru
              _
            // Predicated region
            $region41: #{encode_image.15} parent=35 // pred_check
              _
            $region42: #{encode_image.15} parent=35 // pred_check_branch
              %252 = sbr.rel (0) target = $region44
            $region43: #{encode_image.15} parent=35 // pred_region
              loop: start=0, step=1, limit=1
              $region45: #{encode_image.15} parent=43 // loop_pre_header
                _
              $region46: #{encode_image.15} parent=43 // loop_header
                %s255 = sphi 0, %s259
                %p256 = scmp.ge.s32.totalorder %s255, 1
                %s260 = sphi %s246, %s246
                %s261 = sphi %s241, %s241
              $region47: #{encode_image.15} parent=43 // loop_header_branch
                %258 = sbr.rel (%p256) target = $region51
              $region48: #{encode_image.15} parent=43 // loop_body
                %v262 = vld [vmem:[%s260] sm:$0xf]
                %263 = vst [vmem:[%s261] sm:$0xf] %v262
                %v264 = vld [vmem:[%s260 + $0xc] sm:$0xf]
                %265 = vst [vmem:[%s261 + $0x4] sm:$0xf] %v264
                %v266 = vld [vmem:[%s260 + $0x18] sm:$0xf]
                %267 = vst [vmem:[%s261 + $0x8] sm:$0xf] %v266
                %v268 = vld [vmem:[%s260 + $0x24] sm:$0xf]
                %269 = vst [vmem:[%s261 + $0xc] sm:$0xf] %v268
                %v270 = vld [vmem:[%s260 + $0x30] sm:$0xf]
                %271 = vst [vmem:[%s261 + $0x10] sm:$0xf] %v270
                %v272 = vld [vmem:[%s260 + $0x3c] sm:$0xf]
                %273 = vst [vmem:[%s261 + $0x14] sm:$0xf] %v272
                %v274 = vld [vmem:[%s260 + $0x48] sm:$0xf]
                %275 = vst [vmem:[%s261 + $0x18] sm:$0xf] %v274
                %v276 = vld [vmem:[%s260 + $0x54] sm:$0xf]
                %277 = vst [vmem:[%s261 + $0x1c] sm:$0xf] %v276
                %v278 = vld [vmem:[%s260 + $0x60] sm:$0xf]
                %279 = vst [vmem:[%s261 + $0x20] sm:$0xf] %v278
                %v280 = vld [vmem:[%s260 + $0x6c] sm:$0xf]
                %281 = vst [vmem:[%s261 + $0x24] sm:$0xf] %v280
                %v282 = vld [vmem:[%s260 + $0x78] sm:$0xf]
                %283 = vst [vmem:[%s261 + $0x28] sm:$0xf] %v282
                %v284 = vld [vmem:[%s260 + $0x84] sm:$0xf]
                %285 = vst [vmem:[%s261 + $0x2c] sm:$0xf] %v284
                %v286 = vld [vmem:[%s260 + $0x90] sm:$0xf]
                %287 = vst [vmem:[%s261 + $0x30] sm:$0xf] %v286
                %v288 = vld [vmem:[%s260 + $0x9c] sm:$0xf]
                %289 = vst [vmem:[%s261 + $0x34] sm:$0xf] %v288
                %v290 = vld [vmem:[%s260 + $0xa8] sm:$0xf]
                %291 = vst [vmem:[%s261 + $0x38] sm:$0xf] %v290
                %v292 = vld [vmem:[%s260 + $0xb4] sm:$0xf]
                %293 = vst [vmem:[%s261 + $0x3c] sm:$0xf] %v292
              $region49: #{encode_image.15} parent=43 // loop_footer
                %s259 = sadd.s32 1, %s255
              $region50: #{encode_image.15} parent=43 // loop_footer_branch
                %254 = sbr.rel target = $region46
              $region51: #{encode_image.15} parent=43 // loop_exit
                _
            $region44: #{encode_image.15} parent=35 // pred_fallthru
              _
          $region36: #{encode_image.15} parent=31 // pred_fallthru
            _
          %345 = vnop
        $region32: #{encode_image.15} parent=27 // pred_fallthru
          _
        // Predicated region
        $region70: #{encode_image.15} parent=27 // pred_check
          %p346 = pneg %p106
        $region71: #{encode_image.15} parent=27 // pred_check_branch
          %348 = sbr.rel (%p346) target = $region73
        $region72: #{encode_image.15} parent=27 // pred_region
          %p349 = scmp.lt.s32.totalorder %s19, 2
          %s350 = scalar_select %p349, %s19, 2
          %s351 = scalar_lea.vmem %s2, %s350
        $region73: #{encode_image.15} parent=27 // pred_fallthru
          _
      $region28: #{encode_image.15} parent=5 // pred_fallthru
        _
      %p352 = scmp.le.s32.totalorder 1, %s11
      %p353 = scmp.lt.s32.totalorder %s11, 4
      %p354 = pnand %p352, %p353
      %p355 = pneg %p354
      // Predicated region
      $region74: #{encode_image.15} parent=5 // pred_check
        _
      $region75: #{encode_image.15} parent=5 // pred_check_branch
        %357 = sbr.rel (%p354) target = $region77
      $region76: #{encode_image.15} parent=5 // pred_region
        %s358 = ssub.s32 %s11, 1
        %s359 = sand.u32 %s73, 1
        %s360 = sand.u32 %s73, 1
        %s361 = smul.addr %s360, 64
        %s362 = scalar_lea.vmem [#allocation3], %s361
        // Predicated region
        $region78: #{encode_image.15} parent=76 // pred_check
          %p363 = pneg %p86
        $region79: #{encode_image.15} parent=76 // pred_check_branch
          %365 = sbr.rel (%p363) target = $region81
        $region80: #{encode_image.15} parent=76 // pred_region
          _
        $region81: #{encode_image.15} parent=76 // pred_fallthru
          _
        %s366 = smul.u32 2, %s21
        %p367 = scmp.lt.s32.totalorder %s366, 1
        %s368 = scalar_select %p367, %s366, 1
        %p369 = scmp.lt.s32.totalorder %s23, 0
        %s370 = scalar_select %p369, %s23, 0
        %s371 = sadd.s32 %s370, %s368
        %s372 = smul.addr %s371, 4
        %s373 = scalar_lea.vmem %s0, %s372
        %p374 = pneg %p58
        %p375 = pneg %p55
        %s376 = sand.u32 %s73, 1
        %s377 = sand.u32 %s73, 1
        %s378 = smul.addr %s377, 64
        %s379 = scalar_lea.vmem [#allocation3], %s378
        %p380 = pneg %p86
        %p381 = pneg %p83
        %p382 = scmp.lt.s32.totalorder %s22, 2
        %s383 = scalar_select %p382, %s22, 2
        %s384 = scalar_lea.vmem %s2, %s383
        %p385 = pneg %p112
        %p386 = pneg %p109
        %p387 = scmp.lt.s32.totalorder %s23, 0
        %s388 = scalar_select %p387, %s23, 0
        %s389 = scalar_lea.vmem %s3, %s388
        %p390 = pneg %p138
        %p391 = pneg %p135
        %p392 = scmp.lt.s32.totalorder %s23, 0
        %s393 = scalar_select %p392, %s23, 0
        %s394 = scalar_lea.vmem %s4, %s393
        %p395 = pneg %p164
        %p396 = pneg %p161
        %p397 = pneg %p192
        %p398 = pneg %p189
        %s399 = sand.u32 %s179, 1
        %s400 = sand.u32 %s179, 1
        %s401 = smul.addr %s400, 8
        %s402 = scalar_lea.vmem [#allocation4], %s401
        %s403 = smul.u32 2, %s21
        %p404 = scmp.lt.s32.totalorder %s403, 1
        %s405 = scalar_select %p404, %s403, 1
        %p406 = scmp.lt.s32.totalorder %s23, 0
        %s407 = scalar_select %p406, %s23, 0
        %s408 = sadd.s32 %s407, %s405
        %s409 = smul.addr %s408, 4
        %s410 = scalar_lea.vmem %s0, %s409
        %s411 = smul.u32 2, %s21
        %s412 = smul.u32 16, %s23
        %p413 = scmp.lt.s32.totalorder %s22, 2
        %s414 = scalar_select %p413, %s22, 2
        %s415 = scalar_lea.vmem %s2, %s414
        %p416 = scmp.lt.s32.totalorder %s23, 0
        %s417 = scalar_select %p416, %s23, 0
        %s418 = scalar_lea.vmem %s3, %s417
        %p419 = scmp.lt.s32.totalorder %s23, 0
        %s420 = scalar_select %p419, %s23, 0
        %s421 = scalar_lea.vmem %s4, %s420
        %s422 = smul.u32 2, %s21
        %p424 = scmp.eq.s32.totalorder %s22, 0
        // Predicated region
        $region82: #{encode_image.15} parent=76 // pred_check
          %p425 = pneg %p424
        $region83: #{encode_image.15} parent=76 // pred_check_branch
          %427 = sbr.rel (%p425) target = $region85
        $region84: #{encode_image.15} parent=76 // pred_region
          %v428 = vld [vmem:[%s410] sm:$0xf]
          %v429 = vld [vmem:[%s410 + $0x4] sm:$0xf]
          %v430 = vunpack.c.l.bf16 %v428
          %v431 = vunpack.c.l.bf16 %v429
          %432 = vadd.xlane.f32.xlu0 %v430
          %v433 = vpop.xlane.xlu0 %432
          %434 = vadd.xlane.f32.xlu0 %v431
          %v435 = vpop.xlane.xlu0 %434
          %v436 = vrcp.pop 128.0
          %v437 = vmul.f32 %v433, %v436
          %v438 = vmul.f32 %v435, %v436
          %v439 = vsub.f32 %v430, %v437
          %v440 = vsub.f32 %v431, %v438
          %v441 = vmul.f32 %v439, %v439
          %v442 = vmul.f32 %v440, %v440
          %443 = vadd.xlane.f32.xlu0 %v441
          %v444 = vpop.xlane.xlu0 %443
          %445 = vadd.xlane.f32.xlu0 %v442
          %v446 = vpop.xlane.xlu0 %445
          %v447 = vmul.f32 %v444, %v436
          %v448 = vmul.f32 %v446, %v436
          %v449 = vadd.f32 %v447, 1e-05
          %v450 = vadd.f32 %v448, 1e-05
          %v451 = vrsqrt.pop %v449
          %v452 = vrsqrt.pop %v450
          %v453 = vmul.f32 %v439, %v451
          %v454 = vmul.f32 %v440, %v452
          %v455 = vld [vmem:[%s418] sm:$0x1]
          %v457 = vlaneseq
          %v458 = vshrl.u32 %v457, 7
          %v459 = vsub.s32 0, %v458
          %v460 = vrot.slane %v455, %v459
          %v462 = vmul.f32 %v453, %v460
          %v463 = vmul.f32 %v454, %v460
          %v464 = vld [vmem:[%s421] sm:$0x1]
          %v466 = vlaneseq
          %v467 = vshrl.u32 %v466, 7
          %v468 = vsub.s32 0, %v467
          %v469 = vrot.slane %v464, %v468
          %v471 = vadd.f32 %v462, %v469
          %v472 = vadd.f32 %v463, %v469
          %v473 = vpack.c.bf16 %v472, %v471
          %474 = vst [vmem:[#allocation2] sm:$0xff] %v473
        $region85: #{encode_image.15} parent=76 // pred_fallthru
          _
        %v475 = vld [vmem:[#allocation2] sm:$0xff]
        %v476 = vld [vmem:[%s362] sm:$0xf]
        %v477 = vld [vmem:[%s362 + $0x4] sm:$0xf]
        %v478 = vld [vmem:[%s362 + $0x8] sm:$0xf]
        %v479 = vld [vmem:[%s362 + $0xc] sm:$0xf]
        %v480 = vld [vmem:[%s362 + $0x10] sm:$0xf]
        %v481 = vld [vmem:[%s362 + $0x14] sm:$0xf]
        %v482 = vld [vmem:[%s362 + $0x18] sm:$0xf]
        %v483 = vld [vmem:[%s362 + $0x1c] sm:$0xf]
        %v484 = vld [vmem:[%s362 + $0x20] sm:$0xf]
        %v485 = vld [vmem:[%s362 + $0x24] sm:$0xf]
        %v486 = vld [vmem:[%s362 + $0x28] sm:$0xf]
        %v487 = vld [vmem:[%s362 + $0x2c] sm:$0xf]
        %v488 = vld [vmem:[%s362 + $0x30] sm:$0xf]
        %v489 = vld [vmem:[%s362 + $0x34] sm:$0xf]
        %v490 = vld [vmem:[%s362 + $0x38] sm:$0xf]
        %v491 = vld [vmem:[%s362 + $0x3c] sm:$0xf]
        %v492 = vld [vmem:[%s415] sm:$0x1]
        %v494 = vlaneseq
        %v495 = vshrl.u32 %v494, 7
        %v496 = vsub.s32 0, %v495
        %v497 = vrot.slane %v492, %v496
        %v515 = vunpack.c.l.b16 %v476
        %v516 = vunpack.c.l.b16 %v477
        %v517 = vunpack.c.l.b16 %v478
        %v518 = vunpack.c.l.b16 %v479
        %v519 = vunpack.c.l.b16 %v480
        %v520 = vunpack.c.l.b16 %v481
        %v521 = vunpack.c.l.b16 %v482
        %v522 = vunpack.c.l.b16 %v483
        %v523 = vunpack.c.l.b16 %v484
        %v524 = vunpack.c.l.b16 %v485
        %v525 = vunpack.c.l.b16 %v486
        %v526 = vunpack.c.l.b16 %v487
        %v527 = vunpack.c.l.b16 %v488
        %v528 = vunpack.c.l.b16 %v489
        %v529 = vunpack.c.l.b16 %v490
        %v530 = vunpack.c.l.b16 %v491
        %v531 = vpack.c.b16 %v516, %v515
        %v532 = vpack.c.b16 %v518, %v517
        %v533 = vpack.c.b16 %v520, %v519
        %v534 = vpack.c.b16 %v522, %v521
        %v535 = vpack.c.b16 %v524, %v523
        %v536 = vpack.c.b16 %v526, %v525
        %v537 = vpack.c.b16 %v528, %v527
        %v538 = vpack.c.b16 %v530, %v529
        %547 = vmatprep.subr.bf16.mxu0 0
        %548 = vmatpush1.bf16.msra.mxu0 %v531
        %549 = vmatprep.subr.bf16.mxu0 0
        %550 = vmatpush1.bf16.msra.mxu0 %v532
        %551 = vmatprep.subr.bf16.mxu0 0
        %552 = vmatpush1.bf16.msra.mxu0 %v533
        %553 = vmatprep.subr.bf16.mxu0 0
        %554 = vmatpush1.bf16.msra.mxu0 %v534
        %555 = vmatprep.subr.bf16.mxu0 0
        %556 = vmatpush1.bf16.msra.mxu0 %v535
        %557 = vmatprep.subr.bf16.mxu0 0
        %558 = vmatpush1.bf16.msra.mxu0 %v536
        %559 = vmatprep.subr.bf16.mxu0 0
        %560 = vmatpush1.bf16.msra.mxu0 %v537
        %561 = vmatprep.subr.bf16.mxu0 0
        %562 = vmatpush1.bf16.msra.mxu0 %v538
        %563 = vmatprep.subr.bf16.mxu0 0
        %564 = vmatpush1.bf16.msra.mxu0 0
        %565 = vmatprep.subr.bf16.mxu0 0
        %566 = vmatpush1.bf16.msra.mxu0 0
        %567 = vmatprep.subr.bf16.mxu0 0
        %568 = vmatpush1.bf16.msra.mxu0 0
        %569 = vmatprep.subr.bf16.mxu0 0
        %570 = vmatpush1.bf16.msra.mxu0 0
        %571 = vmatprep.subr.bf16.mxu0 0
        %572 = vmatpush1.bf16.msra.mxu0 0
        %573 = vmatprep.subr.bf16.mxu0 0
        %574 = vmatpush1.bf16.msra.mxu0 0
        %575 = vmatprep.subr.bf16.mxu0 0
        %576 = vmatpush1.bf16.msra.mxu0 0
        %577 = vmatprep.subr.bf16.mxu0 0
        %578 = vmatpush1.bf16.msra.mxu0 0
        %579 = vmatprep.mubr.bf16.mxu0 0
        %580 = vmatmul.mubr.bf16.gmra.mrb[0].mxu0 %v475
        %v581 = vpop.f32.mrb[0].mxu0
        %v582 = vadd.f32 %v497, %v581
        %v583 = vpop.f32.mrb[0].mxu0
        %v584 = vpop.f32.mrb[0].mxu0
        %v585 = vadd.f32 %v497, %v584
        %v586 = vpop.f32.mrb[0].mxu0
        %587 = vdwg.mxu0
        %v588 = vpack.c.bf16 %v585, %v582
        %v590 = vunpack.c.l.b16 %v588
        %v591 = vunpack.c.h.b16 %v588
        %v592 = vpack.c.b16 %v590, %v590
        %v593 = vpack.c.b16 %v591, %v591
        %596 = vst [vmem:[%s402] sm:$0xf] %v592
        %597 = vst [vmem:[%s402 + $0x4] sm:$0xf] %v593
        %s598 = sand.u32 %s179, 1
        %s599 = sand.u32 %s179, 1
        %s600 = smul.addr %s599, 8
        %s601 = scalar_lea.vmem [#allocation4], %s600
        // Predicated region
        $region86: #{encode_image.15} parent=76 // pred_check
          %p602 = pneg %p189
        $region87: #{encode_image.15} parent=76 // pred_check_branch
          %604 = sbr.rel (%p602) target = $region89
        $region88: #{encode_image.15} parent=76 // pred_region
          %s605 = smul.u32 2, %s21
          %s606 = smul.addr %s605, 3
          %s607 = sadd.s32 %s22, %s606
          %s608 = smul.addr %s607, 4
          %s609 = scalar_lea.vmem %s5, %s608
          // Predicated region
          $region90: #{encode_image.15} parent=88 // pred_check
            _
          $region91: #{encode_image.15} parent=88 // pred_check_branch
            %611 = sbr.rel (0) target = $region93
          $region92: #{encode_image.15} parent=88 // pred_region
            // Predicated region
            $region94: #{encode_image.15} parent=92 // pred_check
              _
            $region95: #{encode_image.15} parent=92 // pred_check_branch
              %613 = sbr.rel target = $region97
            $region96: #{encode_image.15} parent=92 // pred_region
              // Predicated region
              $region109: #{encode_image.15} parent=96 // pred_check
                _
              $region110: #{encode_image.15} parent=96 // pred_check_branch
                %630 = sbr.rel (0) target = $region112
              $region111: #{encode_image.15} parent=96 // pred_region
                loop: start=0, step=1, limit=1
                $region113: #{encode_image.15} parent=111 // loop_pre_header
                  _
                $region114: #{encode_image.15} parent=111 // loop_header
                  %s632 = sphi 0, %s636
                  %p633 = scmp.ge.s32.totalorder %s632, 1
                  %s637 = sphi %s601, %s601
                  %s638 = sphi %s609, %s609
                $region115: #{encode_image.15} parent=111 // loop_header_branch
                  %635 = sbr.rel (%p633) target = $region119
                $region116: #{encode_image.15} parent=111 // loop_body
                  _
                $region117: #{encode_image.15} parent=111 // loop_footer
                  %s636 = sadd.s32 1, %s632
                $region118: #{encode_image.15} parent=111 // loop_footer_branch
                  %631 = sbr.rel target = $region114
                $region119: #{encode_image.15} parent=111 // loop_exit
                  _
                loop: start=0, step=1, limit=1
                $region120: #{encode_image.15} parent=111 // loop_pre_header
                  _
                $region121: #{encode_image.15} parent=111 // loop_header
                  %s641 = sphi 0, %s645
                  %p642 = scmp.ge.s32.totalorder %s641, 1
                  %s646 = sphi %s601, %s601
                  %s647 = sphi %s609, %s609
                $region122: #{encode_image.15} parent=111 // loop_header_branch
                  %644 = sbr.rel (%p642) target = $region126
                $region123: #{encode_image.15} parent=111 // loop_body
                  %v648 = vld [vmem:[%s646] sm:$0xf]
                  %649 = vst [vmem:[%s647] sm:$0xf] %v648
                  %v650 = vld [vmem:[%s646 + $0x4] sm:$0xf]
                  %651 = vst [vmem:[%s647 + $0xc] sm:$0xf] %v650
                $region124: #{encode_image.15} parent=111 // loop_footer
                  %s645 = sadd.s32 1, %s641
                $region125: #{encode_image.15} parent=111 // loop_footer_branch
                  %640 = sbr.rel target = $region121
                $region126: #{encode_image.15} parent=111 // loop_exit
                  _
              $region112: #{encode_image.15} parent=96 // pred_fallthru
                _
            $region97: #{encode_image.15} parent=92 // pred_fallthru
              _
            // Predicated region
            $region98: #{encode_image.15} parent=92 // pred_check
              _
            $region99: #{encode_image.15} parent=92 // pred_check_branch
              %615 = sbr.rel (0) target = $region101
            $region100: #{encode_image.15} parent=92 // pred_region
              loop: start=0, step=1, limit=1
              $region102: #{encode_image.15} parent=100 // loop_pre_header
                _
              $region103: #{encode_image.15} parent=100 // loop_header
                %s618 = sphi 0, %s622
                %p619 = scmp.ge.s32.totalorder %s618, 1
                %s623 = sphi %s601, %s601
                %s624 = sphi %s609, %s609
              $region104: #{encode_image.15} parent=100 // loop_header_branch
                %621 = sbr.rel (%p619) target = $region108
              $region105: #{encode_image.15} parent=100 // loop_body
                %v625 = vld [vmem:[%s623] sm:$0xf]
                %626 = vst [vmem:[%s624] sm:$0xf] %v625
                %v627 = vld [vmem:[%s623 + $0x4] sm:$0xf]
                %628 = vst [vmem:[%s624 + $0xc] sm:$0xf] %v627
              $region106: #{encode_image.15} parent=100 // loop_footer
                %s622 = sadd.s32 1, %s618
              $region107: #{encode_image.15} parent=100 // loop_footer_branch
                %617 = sbr.rel target = $region103
              $region108: #{encode_image.15} parent=100 // loop_exit
                _
            $region101: #{encode_image.15} parent=92 // pred_fallthru
              _
          $region93: #{encode_image.15} parent=88 // pred_fallthru
            _
          %652 = vnop
        $region89: #{encode_image.15} parent=76 // pred_fallthru
          _
      $region77: #{encode_image.15} parent=5 // pred_fallthru
        _
      %p653 = scmp.le.s32.totalorder 2, %s11
      // Predicated region
      $region127: #{encode_image.15} parent=5 // pred_check
        %p654 = pneg %p653
      $region128: #{encode_image.15} parent=5 // pred_check_branch
        %656 = sbr.rel (%p654) target = $region130
      $region129: #{encode_image.15} parent=5 // pred_region
        %s657 = ssub.s32 %s11, 2
        // Predicated region
        $region131: #{encode_image.15} parent=129 // pred_check
          %p658 = pneg %p195
        $region132: #{encode_image.15} parent=129 // pred_check_branch
          %660 = sbr.rel (%p658) target = $region134
        $region133: #{encode_image.15} parent=129 // pred_region
          %s661 = sand.u32 %s180, 1
          %s662 = sand.u32 %s180, 1
          %s663 = smul.addr %s662, 8
          %s664 = scalar_lea.vmem [#allocation4], %s663
        $region134: #{encode_image.15} parent=129 // pred_fallthru
          _
      $region130: #{encode_image.15} parent=5 // pred_fallthru
        _
    $region6: #{encode_image.15} parent=1 // loop_footer
      %s15 = sadd.s32 1, %s11
    $region7: #{encode_image.15} parent=1 // loop_footer_branch
      %10 = sbr.rel target = $region3
    $region8: #{encode_image.15} parent=1 // loop_exit
      _

// kernel: encode_image.14
$region0: #{encode_image.14}
  #allocation0 [shape = 'u32[]', space=smem, size = 0x4, offset = 0x4, fixed_abs, tag = 'smem constant byte address 0x4 - core index']
  #allocation1 [shape = 'u32[144,128]{1,0:T(1,128)}', space=vmem, size = 0x12000, scoped, tag = 'internal scratch']
  %s0 = inlined_call_operand.vmem [shape: bf16[2,8,128], index: 0, kind: input, shape index: {}]
  %s1 = inlined_call_operand.vmem [shape: f32[8,128], index: 1, kind: input, shape index: {}]
  %s2 = inlined_call_operand.vmem [shape: f32[1,128], index: 2, kind: input, shape index: {}]
  %s3 = inlined_call_operand.vmem [shape: f32[1,128], index: 3, kind: input, shape index: {}]
  %s4 = inlined_call_operand.vmem [shape: bf16[2,8,128], index: 4, kind: output, shape index: {}]
  %s5 = sld [smem:[#allocation0]]
  $region49: #{encode_image.14} parent=0
    _
  %s7 = ssub.s32 1, %s5
  %s8 = scalar_select 0, %s7, %s5
  loop: start=0, step=1, limit=4
  $region2: #{encode_image.14} parent=0 // loop_pre_header
    _
  $region3: #{encode_image.14} parent=0 // loop_header
    %s10 = sphi 0, %s14
    %p11 = scmp.ge.s32.totalorder %s10, 4
    %s20 = sphi 0, %s22
    %s23 = sphi 0, %s20
    %s24 = sphi 0, %s23
    %s40 = sphi 0, %s24
    %s44 = sphi 0, %s44
    %s46 = sphi 0, %s44
    %s47 = sphi 0, %s46
    %s61 = sphi 0, %s47
    %s65 = sphi 0, %s65
    %s67 = sphi 0, %s65
    %s68 = sphi 0, %s67
    %s82 = sphi 0, %s68
    %s86 = sphi 0, %s86
    %s88 = sphi 0, %s86
    %s89 = sphi 0, %s88
    %s103 = sphi 0, %s89
    %s109 = sphi 0, %s111
    %s112 = sphi 0, %s109
    %s113 = sphi 0, %s112
    %s129 = sphi 0, %s113
  $region4: #{encode_image.14} parent=0 // loop_header_branch
    %13 = sbr.rel (%p11) target = $region8
  $region5: #{encode_image.14} parent=0 // loop_body
    %s15 = ssub.s32 %s10, 1
    %s16 = ssub.s32 %s10, 2
    %s17 = sadd.s32 %s10, 1
    %s18 = ssub.s32 %s10, %s17
    %p19 = scmp.eq.s32.totalorder %s18, 0
    %s21 = sadd.s32 %s20, 1
    %s22 = scalar_select %p19, %s20, %s21
    %p25 = pneg %p19
    %p26 = scmp.eq.s32.totalorder %s10, 1
    %p27 = por %p25, %p26
    %p28 = scmp.ne.s32.totalorder %s20, %s23
    %p29 = scmp.eq.s32.totalorder %s10, 0
    %p30 = por %p28, %p29
    %p31 = scmp.ne.s32.totalorder %s20, %s23
    %p32 = scmp.eq.s32.totalorder %s15, 1
    %p33 = por %p31, %p32
    %p34 = scmp.ne.s32.totalorder %s23, %s24
    %p35 = scmp.eq.s32.totalorder %s15, 0
    %p36 = por %p34, %p35
    %p37 = scmp.ne.s32.totalorder %s23, %s24
    %p38 = scmp.eq.s32.totalorder %s16, 1
    %p39 = por %p37, %p38
    %p41 = scmp.ne.s32.totalorder %s24, %s40
    %p42 = scmp.eq.s32.totalorder %s16, 0
    %p43 = por %p41, %p42
    %s45 = sadd.s32 %s44, 1
    %p48 = scmp.eq.s32.totalorder %s10, 1
    %p49 = scmp.ne.s32.totalorder %s44, %s46
    %p50 = scmp.eq.s32.totalorder %s10, 0
    %p51 = por %p49, %p50
    %p52 = scmp.ne.s32.totalorder %s44, %s46
    %p53 = scmp.eq.s32.totalorder %s15, 1
    %p54 = por %p52, %p53
    %p55 = scmp.ne.s32.totalorder %s46, %s47
    %p56 = scmp.eq.s32.totalorder %s15, 0
    %p57 = por %p55, %p56
    %p58 = scmp.ne.s32.totalorder %s46, %s47
    %p59 = scmp.eq.s32.totalorder %s16, 1
    %p60 = por %p58, %p59
    %p62 = scmp.ne.s32.totalorder %s47, %s61
    %p63 = scmp.eq.s32.totalorder %s16, 0
    %p64 = por %p62, %p63
    %s66 = sadd.s32 %s65, 1
    %p69 = scmp.eq.s32.totalorder %s10, 1
    %p70 = scmp.ne.s32.totalorder %s65, %s67
    %p71 = scmp.eq.s32.totalorder %s10, 0
    %p72 = por %p70, %p71
    %p73 = scmp.ne.s32.totalorder %s65, %s67
    %p74 = scmp.eq.s32.totalorder %s15, 1
    %p75 = por %p73, %p74
    %p76 = scmp.ne.s32.totalorder %s67, %s68
    %p77 = scmp.eq.s32.totalorder %s15, 0
    %p78 = por %p76, %p77
    %p79 = scmp.ne.s32.totalorder %s67, %s68
    %p80 = scmp.eq.s32.totalorder %s16, 1
    %p81 = por %p79, %p80
    %p83 = scmp.ne.s32.totalorder %s68, %s82
    %p84 = scmp.eq.s32.totalorder %s16, 0
    %p85 = por %p83, %p84
    %s87 = sadd.s32 %s86, 1
    %p90 = scmp.eq.s32.totalorder %s10, 1
    %p91 = scmp.ne.s32.totalorder %s86, %s88
    %p92 = scmp.eq.s32.totalorder %s10, 0
    %p93 = por %p91, %p92
    %p94 = scmp.ne.s32.totalorder %s86, %s88
    %p95 = scmp.eq.s32.totalorder %s15, 1
    %p96 = por %p94, %p95
    %p97 = scmp.ne.s32.totalorder %s88, %s89
    %p98 = scmp.eq.s32.totalorder %s15, 0
    %p99 = por %p97, %p98
    %p100 = scmp.ne.s32.totalorder %s88, %s89
    %p101 = scmp.eq.s32.totalorder %s16, 1
    %p102 = por %p100, %p101
    %p104 = scmp.ne.s32.totalorder %s89, %s103
    %p105 = scmp.eq.s32.totalorder %s16, 0
    %p106 = por %p104, %p105
    %s107 = ssub.s32 %s10, %s17
    %p108 = scmp.eq.s32.totalorder %s107, 0
    %s110 = sadd.s32 %s109, 1
    %s111 = scalar_select %p108, %s109, %s110
    %p114 = pneg %p108
    %p115 = scmp.eq.s32.totalorder %s10, 1
    %p116 = por %p114, %p115
    %p117 = scmp.ne.s32.totalorder %s109, %s112
    %p118 = scmp.eq.s32.totalorder %s10, 0
    %p119 = por %p117, %p118
    %p120 = scmp.ne.s32.totalorder %s109, %s112
    %p121 = scmp.eq.s32.totalorder %s15, 1
    %p122 = por %p120, %p121
    %p123 = scmp.ne.s32.totalorder %s112, %s113
    %p124 = scmp.eq.s32.totalorder %s15, 0
    %p125 = por %p123, %p124
    %p126 = scmp.ne.s32.totalorder %s112, %s113
    %p127 = scmp.eq.s32.totalorder %s16, 1
    %p128 = por %p126, %p127
    %p130 = scmp.ne.s32.totalorder %s113, %s129
    %p131 = scmp.eq.s32.totalorder %s16, 0
    %p132 = por %p130, %p131
    %p133 = scmp.le.s32.totalorder 1, %s10
    %p134 = scmp.lt.s32.totalorder %s10, 3
    %p135 = pnand %p133, %p134
    %p136 = pneg %p135
    // Predicated region
    $region9: #{encode_image.14} parent=5 // pred_check
      _
    $region10: #{encode_image.14} parent=5 // pred_check_branch
      %138 = sbr.rel (%p135) target = $region12
    $region11: #{encode_image.14} parent=5 // pred_region
      %s139 = ssub.s32 %s10, 1
      // Predicated region
      $region13: #{encode_image.14} parent=11 // pred_check
        %p140 = pneg %p57
      $region14: #{encode_image.14} parent=11 // pred_check_branch
        %142 = sbr.rel (%p140) target = $region16
      $region15: #{encode_image.14} parent=11 // pred_region
        _
      $region16: #{encode_image.14} parent=11 // pred_fallthru
        _
      // Predicated region
      $region17: #{encode_image.14} parent=11 // pred_check
        %p143 = pneg %p78
      $region18: #{encode_image.14} parent=11 // pred_check_branch
        %145 = sbr.rel (%p143) target = $region20
      $region19: #{encode_image.14} parent=11 // pred_region
        _
      $region20: #{encode_image.14} parent=11 // pred_fallthru
        _
      // Predicated region
      $region21: #{encode_image.14} parent=11 // pred_check
        %p146 = pneg %p99
      $region22: #{encode_image.14} parent=11 // pred_check_branch
        %148 = sbr.rel (%p146) target = $region24
      $region23: #{encode_image.14} parent=11 // pred_region
        _
      $region24: #{encode_image.14} parent=11 // pred_fallthru
        _
    $region12: #{encode_image.14} parent=5 // pred_fallthru
      _
    %p149 = scmp.lt.s32.totalorder %s10, 2
    // Predicated region
    $region25: #{encode_image.14} parent=5 // pred_check
      %p150 = pneg %p149
    $region26: #{encode_image.14} parent=5 // pred_check_branch
      %152 = sbr.rel (%p150) target = $region28
    $region27: #{encode_image.14} parent=5 // pred_region
      // Predicated region
      $region29: #{encode_image.14} parent=27 // pred_check
        %p153 = pneg %p30
      $region30: #{encode_image.14} parent=27 // pred_check_branch
        %155 = sbr.rel (%p153) target = $region32
      $region31: #{encode_image.14} parent=27 // pred_region
        %p156 = scmp.lt.s32.totalorder %s10, 1
        %s157 = scalar_select %p156, %s10, 1
        %s158 = smul.addr %s157, 4
        %s159 = scalar_lea.vmem %s0, %s158
      $region32: #{encode_image.14} parent=27 // pred_fallthru
        _
    $region28: #{encode_image.14} parent=5 // pred_fallthru
      _
    %p160 = scmp.le.s32.totalorder 1, %s10
    %p161 = scmp.lt.s32.totalorder %s10, 3
    %p162 = pnand %p160, %p161
    %p163 = pneg %p162
    // Predicated region
    $region33: #{encode_image.14} parent=5 // pred_check
      _
    $region34: #{encode_image.14} parent=5 // pred_check_branch
      %165 = sbr.rel (%p162) target = $region36
    $region35: #{encode_image.14} parent=5 // pred_region
      %s166 = ssub.s32 %s10, 1
      %p167 = scmp.lt.s32.totalorder %s15, 1
      %s168 = scalar_select %p167, %s15, 1
      %s169 = smul.addr %s168, 4
      %s170 = scalar_lea.vmem %s0, %s169
      %p171 = pneg %p36
      %p172 = pneg %p33
      %p173 = pneg %p57
      %p174 = pneg %p54
      %p175 = pneg %p78
      %p176 = pneg %p75
      %p177 = pneg %p99
      %p178 = pneg %p96
      %p179 = pneg %p125
      %p180 = pneg %p122
      %p181 = scmp.lt.s32.totalorder %s15, 1
      %s182 = scalar_select %p181, %s15, 1
      %s183 = smul.addr %s182, 4
      %s184 = scalar_lea.vmem %s4, %s183
      %p185 = scmp.lt.s32.totalorder %s15, 1
      %s186 = scalar_select %p185, %s15, 1
      %s187 = smul.addr %s186, 4
      %s188 = scalar_lea.vmem %s0, %s187
      %p189 = scmp.lt.s32.totalorder %s15, 1
      %s190 = scalar_select %p189, %s15, 1
      %s191 = smul.addr %s190, 4
      %s192 = scalar_lea.vmem %s4, %s191
      %v193 = vld [vmem:[%s188] sm:$0xf]
      %v194 = vunpack.c.l.bf16 %v193
      %v195 = vld [vmem:[%s1] sm:$0xff]
      %v196 = vadd.f32 %v194, %v195
      %197 = vadd.xlane.f32.xlu0 %v196
      %v198 = vpop.xlane.xlu0 %197
      %v199 = vrcp.pop 128.0
      %v200 = vmul.f32 %v198, %v199
      %v201 = vsub.f32 %v196, %v200
      %v202 = vmul.f32 %v201, %v201
      %203 = vadd.xlane.f32.xlu0 %v202
      %v204 = vpop.xlane.xlu0 %203
      %v205 = vmul.f32 %v204, %v199
      %v206 = vadd.f32 %v205, 1e-05
      %v207 = vrsqrt.pop %v206
      %v208 = vmul.f32 %v201, %v207
      %v209 = vld [vmem:[%s2] sm:$0x1]
      %v211 = vlaneseq
      %v212 = vshrl.u32 %v211, 7
      %v213 = vsub.s32 0, %v212
      %v214 = vrot.slane %v209, %v213
      %v216 = vmul.f32 %v208, %v214
      %v217 = vld [vmem:[%s3] sm:$0x1]
      %v219 = vlaneseq
      %v220 = vshrl.u32 %v219, 7
      %v221 = vsub.s32 0, %v220
      %v222 = vrot.slane %v217, %v221
      %v224 = vadd.f32 %v216, %v222
      %v225 = vpack.c.bf16 %v224, %v224
      %226 = vst [vmem:[%s192] sm:$0xf] %v225
      %p227 = scmp.lt.s32.totalorder %s15, 1
      %s228 = scalar_select %p227, %s15, 1
      %s229 = smul.addr %s228, 4
      %s230 = scalar_lea.vmem %s4, %s229
      // Predicated region
      $region37: #{encode_image.14} parent=35 // pred_check
        %p231 = pneg %p122
      $region38: #{encode_image.14} parent=35 // pred_check_branch
        %233 = sbr.rel (%p231) target = $region40
      $region39: #{encode_image.14} parent=35 // pred_region
        _
      $region40: #{encode_image.14} parent=35 // pred_fallthru
        _
    $region36: #{encode_image.14} parent=5 // pred_fallthru
      _
    %p234 = scmp.le.s32.totalorder 2, %s10
    // Predicated region
    $region41: #{encode_image.14} parent=5 // pred_check
      %p235 = pneg %p234
    $region42: #{encode_image.14} parent=5 // pred_check_branch
      %237 = sbr.rel (%p235) target = $region44
    $region43: #{encode_image.14} parent=5 // pred_region
      %s238 = ssub.s32 %s10, 2
      // Predicated region
      $region45: #{encode_image.14} parent=43 // pred_check
        %p239 = pneg %p128
      $region46: #{encode_image.14} parent=43 // pred_check_branch
        %241 = sbr.rel (%p239) target = $region48
      $region47: #{encode_image.14} parent=43 // pred_region
        %p242 = scmp.lt.s32.totalorder %s16, 1
        %s243 = scalar_select %p242, %s16, 1
        %s244 = smul.addr %s243, 4
        %s245 = scalar_lea.vmem %s4, %s244
      $region48: #{encode_image.14} parent=43 // pred_fallthru
        _
    $region44: #{encode_image.14} parent=5 // pred_fallthru
      _
  $region6: #{encode_image.14} parent=0 // loop_footer
    %s14 = sadd.s32 1, %s10
  $region7: #{encode_image.14} parent=0 // loop_footer_branch
    %9 = sbr.rel target = $region3
  $region8: #{encode_image.14} parent=0 // loop_exit
    _

// kernel: encode_image.17
$region0: #{encode_image.17}
  #allocation0 [shape = 'u32[]', space=smem, size = 0x4, offset = 0x4, fixed_abs, tag = 'smem constant byte address 0x4 - core index']
  #allocation1 [shape = 'u32[144,128]{1,0:T(1,128)}', space=vmem, size = 0x12000, scoped, tag = 'internal scratch']
  %s0 = inlined_call_operand.vmem [shape: bf16[16,128], index: 0, kind: input, shape index: {}]
  %s1 = inlined_call_operand.vmem [shape: bf16[128,128], index: 1, kind: input, shape index: {}]
  %s2 = inlined_call_operand.vmem [shape: f32[1,128], index: 2, kind: input, shape index: {}]
  %s3 = inlined_call_operand.vmem [shape: bf16[16,128], index: 3, kind: input, shape index: {}]
  %s4 = inlined_call_operand.vmem [shape: bf16[16,128], index: 4, kind: output, shape index: {}]
  %s5 = sld [smem:[#allocation0]]
  $region26: #{encode_image.17} parent=0
    _
  %s7 = ssub.s32 1, %s5
  %s8 = scalar_select 0, %s7, %s5
  // Predicated region
  $region2: #{encode_image.17} parent=0 // pred_check
    _
  $region3: #{encode_image.17} parent=0 // pred_check_branch
    %10 = sbr.rel (0) target = $region5
  $region4: #{encode_image.17} parent=0 // pred_region
    _
  $region5: #{encode_image.17} parent=0 // pred_fallthru
    _
  // Predicated region
  $region6: #{encode_image.17} parent=0 // pred_check
    _
  $region7: #{encode_image.17} parent=0 // pred_check_branch
    %12 = sbr.rel (0) target = $region9
  $region8: #{encode_image.17} parent=0 // pred_region
    _
  $region9: #{encode_image.17} parent=0 // pred_fallthru
    _
  // Predicated region
  $region10: #{encode_image.17} parent=0 // pred_check
    _
  $region11: #{encode_image.17} parent=0 // pred_check_branch
    %14 = sbr.rel (0) target = $region13
  $region12: #{encode_image.17} parent=0 // pred_region
    _
  $region13: #{encode_image.17} parent=0 // pred_fallthru
    _
  // Predicated region
  $region14: #{encode_image.17} parent=0 // pred_check
    _
  $region15: #{encode_image.17} parent=0 // pred_check_branch
    %16 = sbr.rel (0) target = $region17
  $region16: #{encode_image.17} parent=0 // pred_region
    _
  $region17: #{encode_image.17} parent=0 // pred_fallthru
    _
  %v18 = vld [vmem:[%s0] sm:$0xf]
  %v19 = vld [vmem:[%s0 + $0x4] sm:$0xf]
  %v20 = vld [vmem:[%s1] sm:$0xf]
  %v21 = vld [vmem:[%s1 + $0x4] sm:$0xf]
  %v22 = vld [vmem:[%s1 + $0x8] sm:$0xf]
  %v23 = vld [vmem:[%s1 + $0xc] sm:$0xf]
  %v24 = vld [vmem:[%s1 + $0x10] sm:$0xf]
  %v25 = vld [vmem:[%s1 + $0x14] sm:$0xf]
  %v26 = vld [vmem:[%s1 + $0x18] sm:$0xf]
  %v27 = vld [vmem:[%s1 + $0x1c] sm:$0xf]
  %v28 = vld [vmem:[%s1 + $0x20] sm:$0xf]
  %v29 = vld [vmem:[%s1 + $0x24] sm:$0xf]
  %v30 = vld [vmem:[%s1 + $0x28] sm:$0xf]
  %v31 = vld [vmem:[%s1 + $0x2c] sm:$0xf]
  %v32 = vld [vmem:[%s1 + $0x30] sm:$0xf]
  %v33 = vld [vmem:[%s1 + $0x34] sm:$0xf]
  %v34 = vld [vmem:[%s1 + $0x38] sm:$0xf]
  %v35 = vld [vmem:[%s1 + $0x3c] sm:$0xf]
  %v36 = vld [vmem:[%s2] sm:$0x1]
  %v38 = vlaneseq
  %v39 = vshrl.u32 %v38, 7
  %v40 = vsub.s32 0, %v39
  %v41 = vrot.slane %v36, %v40
  %v45 = vunpack.c.l.b16 %v18
  %v46 = vunpack.c.l.b16 %v19
  %v47 = vpack.c.b16 %v46, %v45
  %v65 = vunpack.c.l.b16 %v20
  %v66 = vunpack.c.l.b16 %v21
  %v67 = vunpack.c.l.b16 %v22
  %v68 = vunpack.c.l.b16 %v23
  %v69 = vunpack.c.l.b16 %v24
  %v70 = vunpack.c.l.b16 %v25
  %v71 = vunpack.c.l.b16 %v26
  %v72 = vunpack.c.l.b16 %v27
  %v73 = vunpack.c.l.b16 %v28
  %v74 = vunpack.c.l.b16 %v29
  %v75 = vunpack.c.l.b16 %v30
  %v76 = vunpack.c.l.b16 %v31
  %v77 = vunpack.c.l.b16 %v32
  %v78 = vunpack.c.l.b16 %v33
  %v79 = vunpack.c.l.b16 %v34
  %v80 = vunpack.c.l.b16 %v35
  %v81 = vpack.c.b16 %v66, %v65
  %v82 = vpack.c.b16 %v68, %v67
  %v83 = vpack.c.b16 %v70, %v69
  %v84 = vpack.c.b16 %v72, %v71
  %v85 = vpack.c.b16 %v74, %v73
  %v86 = vpack.c.b16 %v76, %v75
  %v87 = vpack.c.b16 %v78, %v77
  %v88 = vpack.c.b16 %v80, %v79
  %97 = vmatprep.subr.bf16.mxu0 0
  %98 = vmatpush1.bf16.msra.mxu0 %v81
  %99 = vmatprep.subr.bf16.mxu0 0
  %100 = vmatpush1.bf16.msra.mxu0 %v82
  %101 = vmatprep.subr.bf16.mxu0 0
  %102 = vmatpush1.bf16.msra.mxu0 %v83
  %103 = vmatprep.subr.bf16.mxu0 0
  %104 = vmatpush1.bf16.msra.mxu0 %v84
  %105 = vmatprep.subr.bf16.mxu0 0
  %106 = vmatpush1.bf16.msra.mxu0 %v85
  %107 = vmatprep.subr.bf16.mxu0 0
  %108 = vmatpush1.bf16.msra.mxu0 %v86
  %109 = vmatprep.subr.bf16.mxu0 0
  %110 = vmatpush1.bf16.msra.mxu0 %v87
  %111 = vmatprep.subr.bf16.mxu0 0
  %112 = vmatpush1.bf16.msra.mxu0 %v88
  %113 = vmatprep.subr.bf16.mxu0 0
  %114 = vmatpush1.bf16.msra.mxu0 0
  %115 = vmatprep.subr.bf16.mxu0 0
  %116 = vmatpush1.bf16.msra.mxu0 0
  %117 = vmatprep.subr.bf16.mxu0 0
  %118 = vmatpush1.bf16.msra.mxu0 0
  %119 = vmatprep.subr.bf16.mxu0 0
  %120 = vmatpush1.bf16.msra.mxu0 0
  %121 = vmatprep.subr.bf16.mxu0 0
  %122 = vmatpush1.bf16.msra.mxu0 0
  %123 = vmatprep.subr.bf16.mxu0 0
  %124 = vmatpush1.bf16.msra.mxu0 0
  %125 = vmatprep.subr.bf16.mxu0 0
  %126 = vmatpush1.bf16.msra.mxu0 0
  %127 = vmatprep.subr.bf16.mxu0 0
  %128 = vmatpush1.bf16.msra.mxu0 0
  %129 = vmatprep.mubr.bf16.mxu0 0
  %130 = vmatmul.mubr.bf16.gmra.mrb[0].mxu0 %v47
  %v131 = vpop.f32.mrb[0].mxu0
  %v132 = vadd.f32 %v41, %v131
  %v133 = vpop.f32.mrb[0].mxu0
  %v134 = vpop.f32.mrb[0].mxu0
  %v135 = vadd.f32 %v41, %v134
  %v136 = vpop.f32.mrb[0].mxu0
  %137 = vdwg.mxu0
  %v138 = vld [vmem:[%s3] sm:$0xf]
  %v139 = vld [vmem:[%s3 + $0x4] sm:$0xf]
  %v140 = vunpack.c.l.bf16 %v138
  %v141 = vunpack.c.l.bf16 %v139
  %v142 = vadd.f32 %v132, %v140
  %v143 = vadd.f32 %v135, %v141
  %v144 = vpack.c.bf16 %v143, %v142
  %v146 = vunpack.c.l.b16 %v144
  %v147 = vunpack.c.h.b16 %v144
  %v148 = vpack.c.b16 %v146, %v146
  %v149 = vpack.c.b16 %v147, %v147
  %152 = vst [vmem:[%s4] sm:$0xf] %v148
  %153 = vst [vmem:[%s4 + $0x4] sm:$0xf] %v149
  // Predicated region
  $region18: #{encode_image.17} parent=0 // pred_check
    _
  $region19: #{encode_image.17} parent=0 // pred_check_branch
    %155 = sbr.rel (0) target = $region21
  $region20: #{encode_image.17} parent=0 // pred_region
    _
  $region21: #{encode_image.17} parent=0 // pred_fallthru
    _
  // Predicated region
  $region22: #{encode_image.17} parent=0 // pred_check
    _
  $region23: #{encode_image.17} parent=0 // pred_check_branch
    %157 = sbr.rel (0) target = $region25
  $region24: #{encode_image.17} parent=0 // pred_region
    _
  $region25: #{encode_image.17} parent=0 // pred_fallthru
    _

// kernel: encode_image.16
$region0: #{encode_image.16}
  #allocation0 [shape = 'u32[]', space=smem, size = 0x4, offset = 0x4, fixed_abs, tag = 'smem constant byte address 0x4 - core index']
  #allocation1 [shape = 'u32[144,128]{1,0:T(1,128)}', space=vmem, size = 0x12000, scoped, tag = 'internal scratch']
  %s0 = inlined_call_operand.vmem [shape: bf16[2,8,384], index: 0, kind: input, shape index: {}, may-alias: {0,1,2}]
  %s1 = inlined_call_operand.vmem [shape: bf16[2,8,384], index: 1, kind: input, shape index: {}, may-alias: {0,1,2}]
  %s2 = inlined_call_operand.vmem [shape: bf16[2,8,384], index: 2, kind: input, shape index: {}, may-alias: {0,1,2}]
  %s3 = inlined_call_operand.vmem [shape: bf16[2,8,128], index: 3, kind: output, shape index: {}]
  %s4 = sld [smem:[#allocation0]]
  $region45: #{encode_image.16} parent=0
    _
  %s6 = ssub.s32 1, %s4
  %s7 = scalar_select 0, %s6, %s4
  loop: start=0, step=1, limit=4
  $region2: #{encode_image.16} parent=0 // loop_pre_header
    _
  $region3: #{encode_image.16} parent=0 // loop_header
    %s9 = sphi 0, %s13
    %p10 = scmp.ge.s32.totalorder %s9, 4
    %s16 = sphi 0, %s28
    %s17 = sphi 0, %s24
    %s18 = sphi 0, %s16
    %s19 = sphi 0, %s17
    %s20 = sphi 0, %s18
    %s21 = sphi 0, %s19
    %s33 = sphi 0, %s35
    %s36 = sphi 0, %s33
    %s37 = sphi 0, %s36
    %s53 = sphi 0, %s37
    %s63 = sphi 0, %s65
    %s66 = sphi 0, %s63
    %s67 = sphi 0, %s66
    %s83 = sphi 0, %s67
    %s93 = sphi 0, %s95
    %s96 = sphi 0, %s93
    %s97 = sphi 0, %s96
    %s113 = sphi 0, %s97
    %s121 = sphi 0, %s123
    %s124 = sphi 0, %s121
    %s125 = sphi 0, %s124
    %s141 = sphi 0, %s125
  $region4: #{encode_image.16} parent=0 // loop_header_branch
    %12 = sbr.rel (%p10) target = $region8
  $region5: #{encode_image.16} parent=0 // loop_body
    %s14 = ssub.s32 %s9, 1
    %s15 = ssub.s32 %s9, 2
    %s22 = sadd.s32 1, %s17
    %p23 = scmp.ge.s32.totalorder %s22, 1
    %s24 = scalar_select %p23, 0, %s22
    %s25 = sadd.s32 1, %s16
    %s26 = scalar_select %p23, %s25, %s16
    %p27 = scmp.ge.s32.totalorder %s26, 2
    %s28 = scalar_select %p27, 0, %s26
    %s29 = ssub.s32 %s16, %s28
    %s30 = ssub.s32 %s17, %s24
    %s31 = sor.u32 %s29, %s30
    %p32 = scmp.eq.s32.totalorder %s31, 0
    %s34 = sadd.s32 %s33, 1
    %s35 = scalar_select %p32, %s33, %s34
    %p38 = pneg %p32
    %p39 = scmp.eq.s32.totalorder %s9, 1
    %p40 = por %p38, %p39
    %p41 = scmp.ne.s32.totalorder %s33, %s36
    %p42 = scmp.eq.s32.totalorder %s9, 0
    %p43 = por %p41, %p42
    %p44 = scmp.ne.s32.totalorder %s33, %s36
    %p45 = scmp.eq.s32.totalorder %s14, 1
    %p46 = por %p44, %p45
    %p47 = scmp.ne.s32.totalorder %s36, %s37
    %p48 = scmp.eq.s32.totalorder %s14, 0
    %p49 = por %p47, %p48
    %p50 = scmp.ne.s32.totalorder %s36, %s37
    %p51 = scmp.eq.s32.totalorder %s15, 1
    %p52 = por %p50, %p51
    %p54 = scmp.ne.s32.totalorder %s37, %s53
    %p55 = scmp.eq.s32.totalorder %s15, 0
    %p56 = por %p54, %p55
    %s57 = sadd.s32 %s17, 1
    %s58 = sadd.s32 %s24, 1
    %s59 = ssub.s32 %s16, %s28
    %s60 = ssub.s32 %s57, %s58
    %s61 = sor.u32 %s59, %s60
    %p62 = scmp.eq.s32.totalorder %s61, 0
    %s64 = sadd.s32 %s63, 1
    %s65 = scalar_select %p62, %s63, %s64
    %p68 = pneg %p62
    %p69 = scmp.eq.s32.totalorder %s9, 1
    %p70 = por %p68, %p69
    %p71 = scmp.ne.s32.totalorder %s63, %s66
    %p72 = scmp.eq.s32.totalorder %s9, 0
    %p73 = por %p71, %p72
    %p74 = scmp.ne.s32.totalorder %s63, %s66
    %p75 = scmp.eq.s32.totalorder %s14, 1
    %p76 = por %p74, %p75
    %p77 = scmp.ne.s32.totalorder %s66, %s67
    %p78 = scmp.eq.s32.totalorder %s14, 0
    %p79 = por %p77, %p78
    %p80 = scmp.ne.s32.totalorder %s66, %s67
    %p81 = scmp.eq.s32.totalorder %s15, 1
    %p82 = por %p80, %p81
    %p84 = scmp.ne.s32.totalorder %s67, %s83
    %p85 = scmp.eq.s32.totalorder %s15, 0
    %p86 = por %p84, %p85
    %s87 = sadd.s32 %s17, 2
    %s88 = sadd.s32 %s24, 2
    %s89 = ssub.s32 %s16, %s28
    %s90 = ssub.s32 %s87, %s88
    %s91 = sor.u32 %s89, %s90
    %p92 = scmp.eq.s32.totalorder %s91, 0
    %s94 = sadd.s32 %s93, 1
    %s95 = scalar_select %p92, %s93, %s94
    %p98 = pneg %p92
    %p99 = scmp.eq.s32.totalorder %s9, 1
    %p100 = por %p98, %p99
    %p101 = scmp.ne.s32.totalorder %s93, %s96
    %p102 = scmp.eq.s32.totalorder %s9, 0
    %p103 = por %p101, %p102
    %p104 = scmp.ne.s32.totalorder %s93, %s96
    %p105 = scmp.eq.s32.totalorder %s14, 1
    %p106 = por %p104, %p105
    %p107 = scmp.ne.s32.totalorder %s96, %s97
    %p108 = scmp.eq.s32.totalorder %s14, 0
    %p109 = por %p107, %p108
    %p110 = scmp.ne.s32.totalorder %s96, %s97
    %p111 = scmp.eq.s32.totalorder %s15, 1
    %p112 = por %p110, %p111
    %p114 = scmp.ne.s32.totalorder %s97, %s113
    %p115 = scmp.eq.s32.totalorder %s15, 0
    %p116 = por %p114, %p115
    %s117 = ssub.s32 %s16, %s28
    %s118 = ssub.s32 %s17, %s24
    %s119 = sor.u32 %s117, %s118
    %p120 = scmp.eq.s32.totalorder %s119, 0
    %s122 = sadd.s32 %s121, 1
    %s123 = scalar_select %p120, %s121, %s122
    %p126 = pneg %p120
    %p127 = scmp.eq.s32.totalorder %s9, 1
    %p128 = por %p126, %p127
    %p129 = scmp.ne.s32.totalorder %s121, %s124
    %p130 = scmp.eq.s32.totalorder %s9, 0
    %p131 = por %p129, %p130
    %p132 = scmp.ne.s32.totalorder %s121, %s124
    %p133 = scmp.eq.s32.totalorder %s14, 1
    %p134 = por %p132, %p133
    %p135 = scmp.ne.s32.totalorder %s124, %s125
    %p136 = scmp.eq.s32.totalorder %s14, 0
    %p137 = por %p135, %p136
    %p138 = scmp.ne.s32.totalorder %s124, %s125
    %p139 = scmp.eq.s32.totalorder %s15, 1
    %p140 = por %p138, %p139
    %p142 = scmp.ne.s32.totalorder %s125, %s141
    %p143 = scmp.eq.s32.totalorder %s15, 0
    %p144 = por %p142, %p143
    %p145 = scmp.le.s32.totalorder 1, %s9
    %p146 = scmp.lt.s32.totalorder %s9, 3
    %p147 = pnand %p145, %p146
    %p148 = pneg %p147
    // Predicated region
    $region9: #{encode_image.16} parent=5 // pred_check
      _
    $region10: #{encode_image.16} parent=5 // pred_check_branch
      %150 = sbr.rel (%p147) target = $region12
    $region11: #{encode_image.16} parent=5 // pred_region
      %s151 = ssub.s32 %s9, 1
    $region12: #{encode_image.16} parent=5 // pred_fallthru
      _
    %p152 = scmp.lt.s32.totalorder %s9, 2
    // Predicated region
    $region13: #{encode_image.16} parent=5 // pred_check
      %p153 = pneg %p152
    $region14: #{encode_image.16} parent=5 // pred_check_branch
      %155 = sbr.rel (%p153) target = $region16
    $region15: #{encode_image.16} parent=5 // pred_region
      // Predicated region
      $region17: #{encode_image.16} parent=15 // pred_check
        %p156 = pneg %p43
      $region18: #{encode_image.16} parent=15 // pred_check_branch
        %158 = sbr.rel (%p156) target = $region20
      $region19: #{encode_image.16} parent=15 // pred_region
        %p159 = scmp.lt.s32.totalorder %s16, 1
        %s160 = scalar_select %p159, %s16, 1
        %p161 = scmp.lt.s32.totalorder %s17, 2
        %s162 = scalar_select %p161, %s17, 2
        %s163 = smul.addr %s160, 3
        %s164 = sadd.s32 %s162, %s163
        %s165 = smul.addr %s164, 4
        %s166 = scalar_lea.vmem %s0, %s165
      $region20: #{encode_image.16} parent=15 // pred_fallthru
        _
      // Predicated region
      $region21: #{encode_image.16} parent=15 // pred_check
        %p167 = pneg %p73
      $region22: #{encode_image.16} parent=15 // pred_check_branch
        %169 = sbr.rel (%p167) target = $region24
      $region23: #{encode_image.16} parent=15 // pred_region
        %s170 = sadd.s32 %s17, 1
        %p171 = scmp.lt.s32.totalorder %s16, 1
        %s172 = scalar_select %p171, %s16, 1
        %p173 = scmp.lt.s32.totalorder %s170, 2
        %s174 = scalar_select %p173, %s170, 2
        %s175 = smul.addr %s172, 3
        %s176 = sadd.s32 %s174, %s175
        %s177 = smul.addr %s176, 4
        %s178 = scalar_lea.vmem %s1, %s177
        %s179 = sadd.s32 %s17, 1
      $region24: #{encode_image.16} parent=15 // pred_fallthru
        _
      // Predicated region
      $region25: #{encode_image.16} parent=15 // pred_check
        %p180 = pneg %p103
      $region26: #{encode_image.16} parent=15 // pred_check_branch
        %182 = sbr.rel (%p180) target = $region28
      $region27: #{encode_image.16} parent=15 // pred_region
        %s183 = sadd.s32 %s17, 2
        %p184 = scmp.lt.s32.totalorder %s16, 1
        %s185 = scalar_select %p184, %s16, 1
        %p186 = scmp.lt.s32.totalorder %s183, 2
        %s187 = scalar_select %p186, %s183, 2
        %s188 = smul.addr %s185, 3
        %s189 = sadd.s32 %s187, %s188
        %s190 = smul.addr %s189, 4
        %s191 = scalar_lea.vmem %s2, %s190
        %s192 = sadd.s32 %s17, 2
      $region28: #{encode_image.16} parent=15 // pred_fallthru
        _
    $region16: #{encode_image.16} parent=5 // pred_fallthru
      _
    %p193 = scmp.le.s32.totalorder 1, %s9
    %p194 = scmp.lt.s32.totalorder %s9, 3
    %p195 = pnand %p193, %p194
    %p196 = pneg %p195
    // Predicated region
    $region29: #{encode_image.16} parent=5 // pred_check
      _
    $region30: #{encode_image.16} parent=5 // pred_check_branch
      %198 = sbr.rel (%p195) target = $region32
    $region31: #{encode_image.16} parent=5 // pred_region
      %s199 = ssub.s32 %s9, 1
      %p200 = scmp.lt.s32.totalorder %s18, 1
      %s201 = scalar_select %p200, %s18, 1
      %p202 = scmp.lt.s32.totalorder %s19, 2
      %s203 = scalar_select %p202, %s19, 2
      %s204 = smul.addr %s201, 3
      %s205 = sadd.s32 %s203, %s204
      %s206 = smul.addr %s205, 4
      %s207 = scalar_lea.vmem %s0, %s206
      %p208 = pneg %p49
      %p209 = pneg %p46
      %s210 = sadd.s32 %s19, 1
      %p211 = scmp.lt.s32.totalorder %s18, 1
      %s212 = scalar_select %p211, %s18, 1
      %p213 = scmp.lt.s32.totalorder %s210, 2
      %s214 = scalar_select %p213, %s210, 2
      %s215 = smul.addr %s212, 3
      %s216 = sadd.s32 %s214, %s215
      %s217 = smul.addr %s216, 4
      %s218 = scalar_lea.vmem %s1, %s217
      %p219 = pneg %p79
      %p220 = pneg %p76
      %s221 = sadd.s32 %s19, 2
      %p222 = scmp.lt.s32.totalorder %s18, 1
      %s223 = scalar_select %p222, %s18, 1
      %p224 = scmp.lt.s32.totalorder %s221, 2
      %s225 = scalar_select %p224, %s221, 2
      %s226 = smul.addr %s223, 3
      %s227 = sadd.s32 %s225, %s226
      %s228 = smul.addr %s227, 4
      %s229 = scalar_lea.vmem %s2, %s228
      %p230 = pneg %p109
      %p231 = pneg %p106
      %p232 = pneg %p137
      %p233 = pneg %p134
      %p234 = scmp.lt.s32.totalorder %s18, 1
      %s235 = scalar_select %p234, %s18, 1
      %p236 = scmp.lt.s32.totalorder %s19, 0
      %s237 = scalar_select %p236, %s19, 0
      %s238 = sadd.s32 %s237, %s235
      %s239 = smul.addr %s238, 4
      %s240 = scalar_lea.vmem %s3, %s239
      %p241 = scmp.lt.s32.totalorder %s18, 1
      %s242 = scalar_select %p241, %s18, 1
      %p243 = scmp.lt.s32.totalorder %s19, 2
      %s244 = scalar_select %p243, %s19, 2
      %s245 = smul.addr %s242, 3
      %s246 = sadd.s32 %s244, %s245
      %s247 = smul.addr %s246, 4
      %s248 = scalar_lea.vmem %s0, %s247
      %s249 = sadd.s32 %s19, 1
      %p250 = scmp.lt.s32.totalorder %s18, 1
      %s251 = scalar_select %p250, %s18, 1
      %p252 = scmp.lt.s32.totalorder %s249, 2
      %s253 = scalar_select %p252, %s249, 2
      %s254 = smul.addr %s251, 3
      %s255 = sadd.s32 %s253, %s254
      %s256 = smul.addr %s255, 4
      %s257 = scalar_lea.vmem %s1, %s256
      %s258 = sadd.s32 %s19, 1
      %s259 = sadd.s32 %s19, 2
      %p260 = scmp.lt.s32.totalorder %s18, 1
      %s261 = scalar_select %p260, %s18, 1
      %p262 = scmp.lt.s32.totalorder %s259, 2
      %s263 = scalar_select %p262, %s259, 2
      %s264 = smul.addr %s261, 3
      %s265 = sadd.s32 %s263, %s264
      %s266 = smul.addr %s265, 4
      %s267 = scalar_lea.vmem %s2, %s266
      %s268 = sadd.s32 %s19, 2
      %p269 = scmp.lt.s32.totalorder %s18, 1
      %s270 = scalar_select %p269, %s18, 1
      %p271 = scmp.lt.s32.totalorder %s19, 0
      %s272 = scalar_select %p271, %s19, 0
      %s273 = sadd.s32 %s272, %s270
      %s274 = smul.addr %s273, 4
      %s275 = scalar_lea.vmem %s3, %s274
      %v277 = vlaneseq
      %v278 = vand.u32 %v277, 127
      %v279 = vld [vmem:[%s248] sm:$0xf]
      %v280 = vld [vmem:[%s257] sm:$0xf]
      %v281 = vld [vmem:[%s267] sm:$0xf]
      %vm282 = vcmask 261120
      %v284 = vsel %vm282, %v279, 0
      %v287 = vsel %vm282, %v280, 0
      %289 = vmatprep.subr.bf16.mxu0 0
      %290 = vmatpush1.bf16.xpose.msra.mxu0 %v287
      %291 = vmatprep.subr.bf16.mxu0 0
      %292 = vmatpush1.bf16.xpose.msra.mxu0 0
      %293 = vmatprep.subr.bf16.mxu0 0
      %294 = vmatpush1.bf16.xpose.msra.mxu0 0
      %295 = vmatprep.subr.bf16.mxu0 0
      %296 = vmatpush1.bf16.xpose.msra.mxu0 0
      %297 = vmatprep.subr.bf16.mxu0 0
      %298 = vmatpush1.bf16.xpose.msra.mxu0 0
      %299 = vmatprep.subr.bf16.mxu0 0
      %300 = vmatpush1.bf16.xpose.msra.mxu0 0
      %301 = vmatprep.subr.bf16.mxu0 0
      %302 = vmatpush1.bf16.xpose.msra.mxu0 0
      %303 = vmatprep.subr.bf16.mxu0 0
      %304 = vmatpush1.bf16.xpose.msra.mxu0 0
      %305 = vmatprep.subr.bf16.mxu0 0
      %306 = vmatpush1.bf16.xpose.msra.mxu0 0
      %307 = vmatprep.subr.bf16.mxu0 0
      %308 = vmatpush1.bf16.xpose.msra.mxu0 0
      %309 = vmatprep.subr.bf16.mxu0 0
      %310 = vmatpush1.bf16.xpose.msra.mxu0 0
      %311 = vmatprep.subr.bf16.mxu0 0
      %312 = vmatpush1.bf16.xpose.msra.mxu0 0
      %313 = vmatprep.subr.bf16.mxu0 0
      %314 = vmatpush1.bf16.xpose.msra.mxu0 0
      %315 = vmatprep.subr.bf16.mxu0 0
      %316 = vmatpush1.bf16.xpose.msra.mxu0 0
      %317 = vmatprep.subr.bf16.mxu0 0
      %318 = vmatpush1.bf16.xpose.msra.mxu0 0
      %319 = vmatprep.subr.bf16.mxu0 0
      %320 = vmatpush1.bf16.xpose.msra.mxu0 0
      %321 = vmatprep.mubr.bf16.mxu0 0
      %322 = vmatmul.mubr.bf16.gmra.mrb[0].mxu0 %v284
      %v323 = vpop.f32.mrb[0].mxu0
      %v324 = vadd.f32 0.0, %v323
      %v325 = vpop.f32.mrb[0].mxu0
      %v326 = vpop.f32.mrb[0].mxu0
      %v327 = vpop.f32.mrb[0].mxu0
      %328 = vdwg.mxu0
      %v329 = vmul.f32 %v324, 0.17677669
      %vm330 = vcmp.lt.s32.totalorder %v278, 5
      %v331 = vsel %vm330, %v329, -1e+30
      %vm332 = vcmask 64512
      %v333 = vsel %vm332, %v331, -inf
      %334 = vmax.xlane.f32.xlu0 %v333
      %v335 = vpop.xlane.xlu0 %334
      %v336 = vsub.f32 %v331, %v335
      %v337 = vmul.f32 %v336, 1.442695
      %v338 = vpow.pop %v337
      %v339 = vsel %vm332, %v338, 0.0
      %340 = vadd.xlane.f32.xlu0 %v339
      %v341 = vpop.xlane.xlu0 %340
      %v342 = vrcp.pop %v341
      %v343 = vmul.f32 %v338, %v342
      %v344 = vpack.c.bf16 %v343, %v343
      %v346 = vsel %vm332, %v344, 0
      %vm348 = vcmask 1043456
      %v350 = vsel %vm348, %v281, 0
      %352 = vmatprep.subr.bf16.mxu0 0
      %353 = vmatpush1.bf16.msra.mxu0 %v350
      %354 = vmatprep.subr.bf16.mxu0 0
      %355 = vmatpush1.bf16.msra.mxu0 0
      %356 = vmatprep.subr.bf16.mxu0 0
      %357 = vmatpush1.bf16.msra.mxu0 0
      %358 = vmatprep.subr.bf16.mxu0 0
      %359 = vmatpush1.bf16.msra.mxu0 0
      %360 = vmatprep.subr.bf16.mxu0 0
      %361 = vmatpush1.bf16.msra.mxu0 0
      %362 = vmatprep.subr.bf16.mxu0 0
      %363 = vmatpush1.bf16.msra.mxu0 0
      %364 = vmatprep.subr.bf16.mxu0 0
      %365 = vmatpush1.bf16.msra.mxu0 0
      %366 = vmatprep.subr.bf16.mxu0 0
      %367 = vmatpush1.bf16.msra.mxu0 0
      %368 = vmatprep.subr.bf16.mxu0 0
      %369 = vmatpush1.bf16.msra.mxu0 0
      %370 = vmatprep.subr.bf16.mxu0 0
      %371 = vmatpush1.bf16.msra.mxu0 0
      %372 = vmatprep.subr.bf16.mxu0 0
      %373 = vmatpush1.bf16.msra.mxu0 0
      %374 = vmatprep.subr.bf16.mxu0 0
      %375 = vmatpush1.bf16.msra.mxu0 0
      %376 = vmatprep.subr.bf16.mxu0 0
      %377 = vmatpush1.bf16.msra.mxu0 0
      %378 = vmatprep.subr.bf16.mxu0 0
      %379 = vmatpush1.bf16.msra.mxu0 0
      %380 = vmatprep.subr.bf16.mxu0 0
      %381 = vmatpush1.bf16.msra.mxu0 0
      %382 = vmatprep.subr.bf16.mxu0 0
      %383 = vmatpush1.bf16.msra.mxu0 0
      %384 = vmatprep.mubr.bf16.mxu0 0
      %385 = vmatmul.mubr.bf16.gmra.mrb[0].mxu0 %v346
      %v386 = vpop.f32.mrb[0].mxu0
      %v387 = vadd.f32 0.0, %v386
      %v388 = vpop.f32.mrb[0].mxu0
      %v389 = vpop.f32.mrb[0].mxu0
      %v390 = vpop.f32.mrb[0].mxu0
      %391 = vdwg.mxu0
      %v392 = vpack.c.bf16 %v387, %v387
      %vm393 = vcmask 257024
      %394 = vst.msk [vmem:[%s275] sm:$0xf] %vm393, %v392
      %v395 = vld [vmem:[%s248] sm:$0xf]
      %v396 = vld [vmem:[%s257] sm:$0xf]
      %v397 = vld [vmem:[%s267] sm:$0xf]
      %v399 = vunpack.c.l.b16 %v395
      %v400 = vpack.c.b16 %v399, %v399
      %401 = vrot.lane.b32.xlu0 %v400, 96
      %v402 = vpop.permute.xlu0 %401
      %v404 = vunpack.c.l.b16 %v396
      %v405 = vpack.c.b16 %v404, %v404
      %406 = vrot.lane.b32.xlu0 %v405, 96
      %v407 = vpop.permute.xlu0 %406
      %v409 = vsel %vm282, %v402, 0
      %v412 = vsel %vm282, %v407, 0
      %414 = vmatprep.subr.bf16.mxu0 0
      %415 = vmatpush1.bf16.xpose.msra.mxu0 %v412
      %416 = vmatprep.subr.bf16.mxu0 0
      %417 = vmatpush1.bf16.xpose.msra.mxu0 0
      %418 = vmatprep.subr.bf16.mxu0 0
      %419 = vmatpush1.bf16.xpose.msra.mxu0 0
      %420 = vmatprep.subr.bf16.mxu0 0
      %421 = vmatpush1.bf16.xpose.msra.mxu0 0
      %422 = vmatprep.subr.bf16.mxu0 0
      %423 = vmatpush1.bf16.xpose.msra.mxu0 0
      %424 = vmatprep.subr.bf16.mxu0 0
      %425 = vmatpush1.bf16.xpose.msra.mxu0 0
      %426 = vmatprep.subr.bf16.mxu0 0
      %427 = vmatpush1.bf16.xpose.msra.mxu0 0
      %428 = vmatprep.subr.bf16.mxu0 0
      %429 = vmatpush1.bf16.xpose.msra.mxu0 0
      %430 = vmatprep.subr.bf16.mxu0 0
      %431 = vmatpush1.bf16.xpose.msra.mxu0 0
      %432 = vmatprep.subr.bf16.mxu0 0
      %433 = vmatpush1.bf16.xpose.msra.mxu0 0
      %434 = vmatprep.subr.bf16.mxu0 0
      %435 = vmatpush1.bf16.xpose.msra.mxu0 0
      %436 = vmatprep.subr.bf16.mxu0 0
      %437 = vmatpush1.bf16.xpose.msra.mxu0 0
      %438 = vmatprep.subr.bf16.mxu0 0
      %439 = vmatpush1.bf16.xpose.msra.mxu0 0
      %440 = vmatprep.subr.bf16.mxu0 0
      %441 = vmatpush1.bf16.xpose.msra.mxu0 0
      %442 = vmatprep.subr.bf16.mxu0 0
      %443 = vmatpush1.bf16.xpose.msra.mxu0 0
      %444 = vmatprep.subr.bf16.mxu0 0
      %445 = vmatpush1.bf16.xpose.msra.mxu0 0
      %446 = vmatprep.mubr.bf16.mxu0 0
      %447 = vmatmul.mubr.bf16.gmra.mrb[0].mxu0 %v409
      %v448 = vpop.f32.mrb[0].mxu0
      %v449 = vadd.f32 0.0, %v448
      %v450 = vpop.f32.mrb[0].mxu0
      %v451 = vpop.f32.mrb[0].mxu0
      %v452 = vpop.f32.mrb[0].mxu0
      %453 = vdwg.mxu0
      %v454 = vmul.f32 %v449, 0.17677669
      %v455 = vsel %vm330, %v454, -1e+30
      %v456 = vsel %vm332, %v455, -inf
      %457 = vmax.xlane.f32.xlu0 %v456
      %v458 = vpop.xlane.xlu0 %457
      %v459 = vsub.f32 %v455, %v458
      %v460 = vmul.f32 %v459, 1.442695
      %v461 = vpow.pop %v460
      %v462 = vsel %vm332, %v461, 0.0
      %463 = vadd.xlane.f32.xlu0 %v462
      %v464 = vpop.xlane.xlu0 %463
      %v465 = vrcp.pop %v464
      %v466 = vmul.f32 %v461, %v465
      %v467 = vpack.c.bf16 %v466, %v466
      %v469 = vunpack.c.l.b16 %v397
      %v470 = vpack.c.b16 %v469, %v469
      %471 = vrot.lane.b32.xlu0 %v470, 96
      %v472 = vpop.permute.xlu0 %471
      %v474 = vsel %vm332, %v467, 0
      %v477 = vsel %vm348, %v472, 0
      %479 = vmatprep.subr.bf16.mxu0 0
      %480 = vmatpush1.bf16.msra.mxu0 %v477
      %481 = vmatprep.subr.bf16.mxu0 0
      %482 = vmatpush1.bf16.msra.mxu0 0
      %483 = vmatprep.subr.bf16.mxu0 0
      %484 = vmatpush1.bf16.msra.mxu0 0
      %485 = vmatprep.subr.bf16.mxu0 0
      %486 = vmatpush1.bf16.msra.mxu0 0
      %487 = vmatprep.subr.bf16.mxu0 0
      %488 = vmatpush1.bf16.msra.mxu0 0
      %489 = vmatprep.subr.bf16.mxu0 0
      %490 = vmatpush1.bf16.msra.mxu0 0
      %491 = vmatprep.subr.bf16.mxu0 0
      %492 = vmatpush1.bf16.msra.mxu0 0
      %493 = vmatprep.subr.bf16.mxu0 0
      %494 = vmatpush1.bf16.msra.mxu0 0
      %495 = vmatprep.subr.bf16.mxu0 0
      %496 = vmatpush1.bf16.msra.mxu0 0
      %497 = vmatprep.subr.bf16.mxu0 0
      %498 = vmatpush1.bf16.msra.mxu0 0
      %499 = vmatprep.subr.bf16.mxu0 0
      %500 = vmatpush1.bf16.msra.mxu0 0
      %501 = vmatprep.subr.bf16.mxu0 0
      %502 = vmatpush1.bf16.msra.mxu0 0
      %503 = vmatprep.subr.bf16.mxu0 0
      %504 = vmatpush1.bf16.msra.mxu0 0
      %505 = vmatprep.subr.bf16.mxu0 0
      %506 = vmatpush1.bf16.msra.mxu0 0
      %507 = vmatprep.subr.bf16.mxu0 0
      %508 = vmatpush1.bf16.msra.mxu0 0
      %509 = vmatprep.subr.bf16.mxu0 0
      %510 = vmatpush1.bf16.msra.mxu0 0
      %511 = vmatprep.mubr.bf16.mxu0 0
      %512 = vmatmul.mubr.bf16.gmra.mrb[0].mxu0 %v474
      %v513 = vpop.f32.mrb[0].mxu0
      %v514 = vadd.f32 0.0, %v513
      %v515 = vpop.f32.mrb[0].mxu0
      %v516 = vpop.f32.mrb[0].mxu0
      %v517 = vpop.f32.mrb[0].mxu0
      %518 = vdwg.mxu0
      %v519 = vpack.c.bf16 %v514, %v514
      %v521 = vunpack.c.l.b16 %v519
      %v522 = vpack.c.b16 %v521, %v521
      %523 = vrot.lane.b32.xlu0 %v522, 32
      %v524 = vpop.permute.xlu0 %523
      %vm526 = vcmask 519424
      %527 = vst.msk [vmem:[%s275] sm:$0xf] %vm526, %v524
      %v528 = vld [vmem:[%s248] sm:$0xf]
      %v529 = vld [vmem:[%s257] sm:$0xf]
      %v530 = vld [vmem:[%s267] sm:$0xf]
      %v532 = vunpack.c.l.b16 %v528
      %v533 = vpack.c.b16 %v532, %v532
      %534 = vrot.lane.b32.xlu0 %v533, 64
      %v535 = vpop.permute.xlu0 %534
      %v537 = vunpack.c.l.b16 %v529
      %v538 = vpack.c.b16 %v537, %v537
      %539 = vrot.lane.b32.xlu0 %v538, 64
      %v540 = vpop.permute.xlu0 %539
      %v542 = vsel %vm282, %v535, 0
      %v545 = vsel %vm282, %v540, 0
      %547 = vmatprep.subr.bf16.mxu0 0
      %548 = vmatpush1.bf16.xpose.msra.mxu0 %v545
      %549 = vmatprep.subr.bf16.mxu0 0
      %550 = vmatpush1.bf16.xpose.msra.mxu0 0
      %551 = vmatprep.subr.bf16.mxu0 0
      %552 = vmatpush1.bf16.xpose.msra.mxu0 0
      %553 = vmatprep.subr.bf16.mxu0 0
      %554 = vmatpush1.bf16.xpose.msra.mxu0 0
      %555 = vmatprep.subr.bf16.mxu0 0
      %556 = vmatpush1.bf16.xpose.msra.mxu0 0
      %557 = vmatprep.subr.bf16.mxu0 0
      %558 = vmatpush1.bf16.xpose.msra.mxu0 0
      %559 = vmatprep.subr.bf16.mxu0 0
      %560 = vmatpush1.bf16.xpose.msra.mxu0 0
      %561 = vmatprep.subr.bf16.mxu0 0
      %562 = vmatpush1.bf16.xpose.msra.mxu0 0
      %563 = vmatprep.subr.bf16.mxu0 0
      %564 = vmatpush1.bf16.xpose.msra.mxu0 0
      %565 = vmatprep.subr.bf16.mxu0 0
      %566 = vmatpush1.bf16.xpose.msra.mxu0 0
      %567 = vmatprep.subr.bf16.mxu0 0
      %568 = vmatpush1.bf16.xpose.msra.mxu0 0
      %569 = vmatprep.subr.bf16.mxu0 0
      %570 = vmatpush1.bf16.xpose.msra.mxu0 0
      %571 = vmatprep.subr.bf16.mxu0 0
      %572 = vmatpush1.bf16.xpose.msra.mxu0 0
      %573 = vmatprep.subr.bf16.mxu0 0
      %574 = vmatpush1.bf16.xpose.msra.mxu0 0
      %575 = vmatprep.subr.bf16.mxu0 0
      %576 = vmatpush1.bf16.xpose.msra.mxu0 0
      %577 = vmatprep.subr.bf16.mxu0 0
      %578 = vmatpush1.bf16.xpose.msra.mxu0 0
      %579 = vmatprep.mubr.bf16.mxu0 0
      %580 = vmatmul.mubr.bf16.gmra.mrb[0].mxu0 %v542
      %v581 = vpop.f32.mrb[0].mxu0
      %v582 = vadd.f32 0.0, %v581
      %v583 = vpop.f32.mrb[0].mxu0
      %v584 = vpop.f32.mrb[0].mxu0
      %v585 = vpop.f32.mrb[0].mxu0
      %586 = vdwg.mxu0
      %v587 = vmul.f32 %v582, 0.17677669
      %v588 = vsel %vm330, %v587, -1e+30
      %v589 = vsel %vm332, %v588, -inf
      %590 = vmax.xlane.f32.xlu0 %v589
      %v591 = vpop.xlane.xlu0 %590
      %v592 = vsub.f32 %v588, %v591
      %v593 = vmul.f32 %v592, 1.442695
      %v594 = vpow.pop %v593
      %v595 = vsel %vm332, %v594, 0.0
      %596 = vadd.xlane.f32.xlu0 %v595
      %v597 = vpop.xlane.xlu0 %596
      %v598 = vrcp.pop %v597
      %v599 = vmul.f32 %v594, %v598
      %v600 = vpack.c.bf16 %v599, %v599
      %v602 = vunpack.c.l.b16 %v530
      %v603 = vpack.c.b16 %v602, %v602
      %604 = vrot.lane.b32.xlu0 %v603, 64
      %v605 = vpop.permute.xlu0 %604
      %v607 = vsel %vm332, %v600, 0
      %v610 = vsel %vm348, %v605, 0
      %612 = vmatprep.subr.bf16.mxu0 0
      %613 = vmatpush1.bf16.msra.mxu0 %v610
      %614 = vmatprep.subr.bf16.mxu0 0
      %615 = vmatpush1.bf16.msra.mxu0 0
      %616 = vmatprep.subr.bf16.mxu0 0
      %617 = vmatpush1.bf16.msra.mxu0 0
      %618 = vmatprep.subr.bf16.mxu0 0
      %619 = vmatpush1.bf16.msra.mxu0 0
      %620 = vmatprep.subr.bf16.mxu0 0
      %621 = vmatpush1.bf16.msra.mxu0 0
      %622 = vmatprep.subr.bf16.mxu0 0
      %623 = vmatpush1.bf16.msra.mxu0 0
      %624 = vmatprep.subr.bf16.mxu0 0
      %625 = vmatpush1.bf16.msra.mxu0 0
      %626 = vmatprep.subr.bf16.mxu0 0
      %627 = vmatpush1.bf16.msra.mxu0 0
      %628 = vmatprep.subr.bf16.mxu0 0
      %629 = vmatpush1.bf16.msra.mxu0 0
      %630 = vmatprep.subr.bf16.mxu0 0
      %631 = vmatpush1.bf16.msra.mxu0 0
      %632 = vmatprep.subr.bf16.mxu0 0
      %633 = vmatpush1.bf16.msra.mxu0 0
      %634 = vmatprep.subr.bf16.mxu0 0
      %635 = vmatpush1.bf16.msra.mxu0 0
      %636 = vmatprep.subr.bf16.mxu0 0
      %637 = vmatpush1.bf16.msra.mxu0 0
      %638 = vmatprep.subr.bf16.mxu0 0
      %639 = vmatpush1.bf16.msra.mxu0 0
      %640 = vmatprep.subr.bf16.mxu0 0
      %641 = vmatpush1.bf16.msra.mxu0 0
      %642 = vmatprep.subr.bf16.mxu0 0
      %643 = vmatpush1.bf16.msra.mxu0 0
      %644 = vmatprep.mubr.bf16.mxu0 0
      %645 = vmatmul.mubr.bf16.gmra.mrb[0].mxu0 %v607
      %v646 = vpop.f32.mrb[0].mxu0
      %v647 = vadd.f32 0.0, %v646
      %v648 = vpop.f32.mrb[0].mxu0
      %v649 = vpop.f32.mrb[0].mxu0
      %v650 = vpop.f32.mrb[0].mxu0
      %651 = vdwg.mxu0
      %v652 = vpack.c.bf16 %v647, %v647
      %v654 = vunpack.c.l.b16 %v652
      %v655 = vpack.c.b16 %v654, %v654
      %656 = vrot.lane.b32.xlu0 %v655, 64
      %v657 = vpop.permute.xlu0 %656
      %vm659 = vcmask 781824
      %660 = vst.msk [vmem:[%s275] sm:$0xf] %vm659, %v657
      %v661 = vld [vmem:[%s248] sm:$0xf]
      %v662 = vld [vmem:[%s257] sm:$0xf]
      %v663 = vld [vmem:[%s267] sm:$0xf]
      %v665 = vunpack.c.l.b16 %v661
      %v666 = vpack.c.b16 %v665, %v665
      %667 = vrot.lane.b32.xlu0 %v666, 32
      %v668 = vpop.permute.xlu0 %667
      %v670 = vunpack.c.l.b16 %v662
      %v671 = vpack.c.b16 %v670, %v670
      %672 = vrot.lane.b32.xlu0 %v671, 32
      %v673 = vpop.permute.xlu0 %672
      %v675 = vsel %vm282, %v668, 0
      %v678 = vsel %vm282, %v673, 0
      %680 = vmatprep.subr.bf16.mxu0 0
      %681 = vmatpush1.bf16.xpose.msra.mxu0 %v678
      %682 = vmatprep.subr.bf16.mxu0 0
      %683 = vmatpush1.bf16.xpose.msra.mxu0 0
      %684 = vmatprep.subr.bf16.mxu0 0
      %685 = vmatpush1.bf16.xpose.msra.mxu0 0
      %686 = vmatprep.subr.bf16.mxu0 0
      %687 = vmatpush1.bf16.xpose.msra.mxu0 0
      %688 = vmatprep.subr.bf16.mxu0 0
      %689 = vmatpush1.bf16.xpose.msra.mxu0 0
      %690 = vmatprep.subr.bf16.mxu0 0
      %691 = vmatpush1.bf16.xpose.msra.mxu0 0
      %692 = vmatprep.subr.bf16.mxu0 0
      %693 = vmatpush1.bf16.xpose.msra.mxu0 0
      %694 = vmatprep.subr.bf16.mxu0 0
      %695 = vmatpush1.bf16.xpose.msra.mxu0 0
      %696 = vmatprep.subr.bf16.mxu0 0
      %697 = vmatpush1.bf16.xpose.msra.mxu0 0
      %698 = vmatprep.subr.bf16.mxu0 0
      %699 = vmatpush1.bf16.xpose.msra.mxu0 0
      %700 = vmatprep.subr.bf16.mxu0 0
      %701 = vmatpush1.bf16.xpose.msra.mxu0 0
      %702 = vmatprep.subr.bf16.mxu0 0
      %703 = vmatpush1.bf16.xpose.msra.mxu0 0
      %704 = vmatprep.subr.bf16.mxu0 0
      %705 = vmatpush1.bf16.xpose.msra.mxu0 0
      %706 = vmatprep.subr.bf16.mxu0 0
      %707 = vmatpush1.bf16.xpose.msra.mxu0 0
      %708 = vmatprep.subr.bf16.mxu0 0
      %709 = vmatpush1.bf16.xpose.msra.mxu0 0
      %710 = vmatprep.subr.bf16.mxu0 0
      %711 = vmatpush1.bf16.xpose.msra.mxu0 0
      %712 = vmatprep.mubr.bf16.mxu0 0
      %713 = vmatmul.mubr.bf16.gmra.mrb[0].mxu0 %v675
      %v714 = vpop.f32.mrb[0].mxu0
      %v715 = vadd.f32 0.0, %v714
      %v716 = vpop.f32.mrb[0].mxu0
      %v717 = vpop.f32.mrb[0].mxu0
      %v718 = vpop.f32.mrb[0].mxu0
      %719 = vdwg.mxu0
      %v720 = vmul.f32 %v715, 0.17677669
      %v721 = vsel %vm330, %v720, -1e+30
      %v722 = vsel %vm332, %v721, -inf
      %723 = vmax.xlane.f32.xlu0 %v722
      %v724 = vpop.xlane.xlu0 %723
      %v725 = vsub.f32 %v721, %v724
      %v726 = vmul.f32 %v725, 1.442695
      %v727 = vpow.pop %v726
      %v728 = vsel %vm332, %v727, 0.0
      %729 = vadd.xlane.f32.xlu0 %v728
      %v730 = vpop.xlane.xlu0 %729
      %v731 = vrcp.pop %v730
      %v732 = vmul.f32 %v727, %v731
      %v733 = vpack.c.bf16 %v732, %v732
      %v735 = vunpack.c.l.b16 %v663
      %v736 = vpack.c.b16 %v735, %v735
      %737 = vrot.lane.b32.xlu0 %v736, 32
      %v738 = vpop.permute.xlu0 %737
      %v740 = vsel %vm332, %v733, 0
      %v743 = vsel %vm348, %v738, 0
      %745 = vmatprep.subr.bf16.mxu0 0
      %746 = vmatpush1.bf16.msra.mxu0 %v743
      %747 = vmatprep.subr.bf16.mxu0 0
      %748 = vmatpush1.bf16.msra.mxu0 0
      %749 = vmatprep.subr.bf16.mxu0 0
      %750 = vmatpush1.bf16.msra.mxu0 0
      %751 = vmatprep.subr.bf16.mxu0 0
      %752 = vmatpush1.bf16.msra.mxu0 0
      %753 = vmatprep.subr.bf16.mxu0 0
      %754 = vmatpush1.bf16.msra.mxu0 0
      %755 = vmatprep.subr.bf16.mxu0 0
      %756 = vmatpush1.bf16.msra.mxu0 0
      %757 = vmatprep.subr.bf16.mxu0 0
      %758 = vmatpush1.bf16.msra.mxu0 0
      %759 = vmatprep.subr.bf16.mxu0 0
      %760 = vmatpush1.bf16.msra.mxu0 0
      %761 = vmatprep.subr.bf16.mxu0 0
      %762 = vmatpush1.bf16.msra.mxu0 0
      %763 = vmatprep.subr.bf16.mxu0 0
      %764 = vmatpush1.bf16.msra.mxu0 0
      %765 = vmatprep.subr.bf16.mxu0 0
      %766 = vmatpush1.bf16.msra.mxu0 0
      %767 = vmatprep.subr.bf16.mxu0 0
      %768 = vmatpush1.bf16.msra.mxu0 0
      %769 = vmatprep.subr.bf16.mxu0 0
      %770 = vmatpush1.bf16.msra.mxu0 0
      %771 = vmatprep.subr.bf16.mxu0 0
      %772 = vmatpush1.bf16.msra.mxu0 0
      %773 = vmatprep.subr.bf16.mxu0 0
      %774 = vmatpush1.bf16.msra.mxu0 0
      %775 = vmatprep.subr.bf16.mxu0 0
      %776 = vmatpush1.bf16.msra.mxu0 0
      %777 = vmatprep.mubr.bf16.mxu0 0
      %778 = vmatmul.mubr.bf16.gmra.mrb[0].mxu0 %v740
      %v779 = vpop.f32.mrb[0].mxu0
      %v780 = vadd.f32 0.0, %v779
      %v781 = vpop.f32.mrb[0].mxu0
      %v782 = vpop.f32.mrb[0].mxu0
      %v783 = vpop.f32.mrb[0].mxu0
      %784 = vdwg.mxu0
      %v785 = vpack.c.bf16 %v780, %v780
      %v787 = vunpack.c.l.b16 %v785
      %v788 = vpack.c.b16 %v787, %v787
      %789 = vrot.lane.b32.xlu0 %v788, 96
      %v790 = vpop.permute.xlu0 %789
      %vm792 = vcmask 1044224
      %793 = vst.msk [vmem:[%s275] sm:$0xf] %vm792, %v790
      %p794 = scmp.lt.s32.totalorder %s18, 1
      %s795 = scalar_select %p794, %s18, 1
      %p796 = scmp.lt.s32.totalorder %s19, 0
      %s797 = scalar_select %p796, %s19, 0
      %s798 = sadd.s32 %s797, %s795
      %s799 = smul.addr %s798, 4
      %s800 = scalar_lea.vmem %s3, %s799
      // Predicated region
      $region33: #{encode_image.16} parent=31 // pred_check
        %p801 = pneg %p134
      $region34: #{encode_image.16} parent=31 // pred_check_branch
        %803 = sbr.rel (%p801) target = $region36
      $region35: #{encode_image.16} parent=31 // pred_region
        _
      $region36: #{encode_image.16} parent=31 // pred_fallthru
        _
    $region32: #{encode_image.16} parent=5 // pred_fallthru
      _
    %p804 = scmp.le.s32.totalorder 2, %s9
    // Predicated region
    $region37: #{encode_image.16} parent=5 // pred_check
      %p805 = pneg %p804
    $region38: #{encode_image.16} parent=5 // pred_check_branch
      %807 = sbr.rel (%p805) target = $region40
    $region39: #{encode_image.16} parent=5 // pred_region
      %s808 = ssub.s32 %s9, 2
      // Predicated region
      $region41: #{encode_image.16} parent=39 // pred_check
        %p809 = pneg %p140
      $region42: #{encode_image.16} parent=39 // pred_check_branch
        %811 = sbr.rel (%p809) target = $region44
      $region43: #{encode_image.16} parent=39 // pred_region
        %p812 = scmp.lt.s32.totalorder %s20, 1
        %s813 = scalar_select %p812, %s20, 1
        %p814 = scmp.lt.s32.totalorder %s21, 0
        %s815 = scalar_select %p814, %s21, 0
        %s816 = sadd.s32 %s815, %s813
        %s817 = smul.addr %s816, 4
        %s818 = scalar_lea.vmem %s3, %s817
      $region44: #{encode_image.16} parent=39 // pred_fallthru
        _
    $region40: #{encode_image.16} parent=5 // pred_fallthru
      _
  $region6: #{encode_image.16} parent=0 // loop_footer
    %s13 = sadd.s32 1, %s9
  $region7: #{encode_image.16} parent=0 // loop_footer_branch
    %8 = sbr.rel target = $region3
  $region8: #{encode_image.16} parent=0 // loop_exit
    _

// kernel: encode_image.18
$region0: #{encode_image.18}
  #allocation0 [shape = 'u32[]', space=smem, size = 0x4, offset = 0x4, fixed_abs, tag = 'smem constant byte address 0x4 - core index']
  #allocation1 [shape = 'u32[144,128]{1,0:T(1,128)}', space=vmem, size = 0x12000, scoped, tag = 'internal scratch']
  #allocation2 [shape = 'bf16[16,128]{1,0:T(16,128)(2,1)}', space=vmem, size = 0x1000, scoped, tag = 'scratch operand']
  %s0 = inlined_call_operand.vmem [shape: bf16[16,128], index: 0, kind: input, shape index: {}]
  %s1 = inlined_call_operand.vmem [shape: bf16[128,512], index: 1, kind: input, shape index: {}]
  %s2 = inlined_call_operand.vmem [shape: f32[1,512], index: 2, kind: input, shape index: {}]
  %s3 = inlined_call_operand.vmem [shape: f32[1,128], index: 3, kind: input, shape index: {}]
  %s4 = inlined_call_operand.vmem [shape: f32[1,128], index: 4, kind: input, shape index: {}]
  %s5 = inlined_call_operand.vmem [shape: bf16[16,512], index: 5, kind: output, shape index: {}]
  %s6 = sld [smem:[#allocation0]]
  $region129: #{encode_image.18} parent=0
    _
  %s8 = ssub.s32 1, %s6
  %s9 = scalar_select 0, %s8, %s6
  $region1: #{encode_image.18} parent=0
    #allocation3 [shape = 'u8[131072]{0}', space=vmem, size = 0x20000, scoped, tag = 'input window, operand 1']
    #allocation4 [shape = 'u8[16384]{0}', space=vmem, size = 0x4000, scoped, tag = 'output window, operand 0']
    loop: start=0, step=1, limit=4
    $region2: #{encode_image.18} parent=1 // loop_pre_header
      _
    $region3: #{encode_image.18} parent=1 // loop_header
      %s11 = sphi 0, %s15
      %p12 = scmp.ge.s32.totalorder %s11, 4
      %s18 = sphi 0, %s37
      %s19 = sphi 0, %s33
      %s20 = sphi 0, %s29
      %s21 = sphi 0, %s18
      %s22 = sphi 0, %s19
      %s23 = sphi 0, %s20
      %s24 = sphi 0, %s21
      %s25 = sphi 0, %s22
      %s26 = sphi 0, %s23
      %s42 = sphi 0, %s44
      %s45 = sphi 0, %s42
      %s46 = sphi 0, %s45
      %s62 = sphi 0, %s46
      %s70 = sphi 0, %s72
      %s73 = sphi 0, %s70
      %s74 = sphi 0, %s73
      %s90 = sphi 0, %s74
      %s96 = sphi 0, %s98
      %s99 = sphi 0, %s96
      %s100 = sphi 0, %s99
      %s116 = sphi 0, %s100
      %s122 = sphi 0, %s124
      %s125 = sphi 0, %s122
      %s126 = sphi 0, %s125
      %s142 = sphi 0, %s126
      %s148 = sphi 0, %s150
      %s151 = sphi 0, %s148
      %s152 = sphi 0, %s151
      %s168 = sphi 0, %s152
      %s176 = sphi 0, %s178
      %s179 = sphi 0, %s176
      %s180 = sphi 0, %s179
      %s196 = sphi 0, %s180
    $region4: #{encode_image.18} parent=1 // loop_header_branch
      %14 = sbr.rel (%p12) target = $region8
    $region5: #{encode_image.18} parent=1 // loop_body
      %s16 = ssub.s32 %s11, 1
      %s17 = ssub.s32 %s11, 2
      %s27 = sadd.s32 1, %s20
      %p28 = scmp.ge.s32.totalorder %s27, 1
      %s29 = scalar_select %p28, 0, %s27
      %s30 = sadd.s32 1, %s19
      %s31 = scalar_select %p28, %s30, %s19
      %p32 = scmp.ge.s32.totalorder %s31, 2
      %s33 = scalar_select %p32, 0, %s31
      %s34 = sadd.s32 1, %s18
      %s35 = scalar_select %p32, %s34, %s18
      %p36 = scmp.ge.s32.totalorder %s35, 1
      %s37 = scalar_select %p36, 0, %s35
      %s38 = ssub.s32 %s18, %s37
      %s39 = ssub.s32 %s20, %s29
      %s40 = sor.u32 %s38, %s39
      %p41 = scmp.eq.s32.totalorder %s40, 0
      %s43 = sadd.s32 %s42, 1
      %s44 = scalar_select %p41, %s42, %s43
      %p47 = pneg %p41
      %p48 = scmp.eq.s32.totalorder %s11, 1
      %p49 = por %p47, %p48
      %p50 = scmp.ne.s32.totalorder %s42, %s45
      %p51 = scmp.eq.s32.totalorder %s11, 0
      %p52 = por %p50, %p51
      %p53 = scmp.ne.s32.totalorder %s42, %s45
      %p54 = scmp.eq.s32.totalorder %s16, 1
      %p55 = por %p53, %p54
      %p56 = scmp.ne.s32.totalorder %s45, %s46
      %p57 = scmp.eq.s32.totalorder %s16, 0
      %p58 = por %p56, %p57
      %p59 = scmp.ne.s32.totalorder %s45, %s46
      %p60 = scmp.eq.s32.totalorder %s17, 1
      %p61 = por %p59, %p60
      %p63 = scmp.ne.s32.totalorder %s46, %s62
      %p64 = scmp.eq.s32.totalorder %s17, 0
      %p65 = por %p63, %p64
      %s66 = ssub.s32 %s20, %s29
      %s67 = ssub.s32 %s19, %s33
      %s68 = sor.u32 %s66, %s67
      %p69 = scmp.eq.s32.totalorder %s68, 0
      %s71 = sadd.s32 %s70, 1
      %s72 = scalar_select %p69, %s70, %s71
      %p75 = pneg %p69
      %p76 = scmp.eq.s32.totalorder %s11, 1
      %p77 = por %p75, %p76
      %p78 = scmp.ne.s32.totalorder %s70, %s73
      %p79 = scmp.eq.s32.totalorder %s11, 0
      %p80 = por %p78, %p79
      %p81 = scmp.ne.s32.totalorder %s70, %s73
      %p82 = scmp.eq.s32.totalorder %s16, 1
      %p83 = por %p81, %p82
      %p84 = scmp.ne.s32.totalorder %s73, %s74
      %p85 = scmp.eq.s32.totalorder %s16, 0
      %p86 = por %p84, %p85
      %p87 = scmp.ne.s32.totalorder %s73, %s74
      %p88 = scmp.eq.s32.totalorder %s17, 1
      %p89 = por %p87, %p88
      %p91 = scmp.ne.s32.totalorder %s74, %s90
      %p92 = scmp.eq.s32.totalorder %s17, 0
      %p93 = por %p91, %p92
      %s94 = ssub.s32 %s19, %s33
      %p95 = scmp.eq.s32.totalorder %s94, 0
      %s97 = sadd.s32 %s96, 1
      %s98 = scalar_select %p95, %s96, %s97
      %p101 = pneg %p95
      %p102 = scmp.eq.s32.totalorder %s11, 1
      %p103 = por %p101, %p102
      %p104 = scmp.ne.s32.totalorder %s96, %s99
      %p105 = scmp.eq.s32.totalorder %s11, 0
      %p106 = por %p104, %p105
      %p107 = scmp.ne.s32.totalorder %s96, %s99
      %p108 = scmp.eq.s32.totalorder %s16, 1
      %p109 = por %p107, %p108
      %p110 = scmp.ne.s32.totalorder %s99, %s100
      %p111 = scmp.eq.s32.totalorder %s16, 0
      %p112 = por %p110, %p111
      %p113 = scmp.ne.s32.totalorder %s99, %s100
      %p114 = scmp.eq.s32.totalorder %s17, 1
      %p115 = por %p113, %p114
      %p117 = scmp.ne.s32.totalorder %s100, %s116
      %p118 = scmp.eq.s32.totalorder %s17, 0
      %p119 = por %p117, %p118
      %s120 = ssub.s32 %s20, %s29
      %p121 = scmp.eq.s32.totalorder %s120, 0
      %s123 = sadd.s32 %s122, 1
      %s124 = scalar_select %p121, %s122, %s123
      %p127 = pneg %p121
      %p128 = scmp.eq.s32.totalorder %s11, 1
      %p129 = por %p127, %p128
      %p130 = scmp.ne.s32.totalorder %s122, %s125
      %p131 = scmp.eq.s32.totalorder %s11, 0
      %p132 = por %p130, %p131
      %p133 = scmp.ne.s32.totalorder %s122, %s125
      %p134 = scmp.eq.s32.totalorder %s16, 1
      %p135 = por %p133, %p134
      %p136 = scmp.ne.s32.totalorder %s125, %s126
      %p137 = scmp.eq.s32.totalorder %s16, 0
      %p138 = por %p136, %p137
      %p139 = scmp.ne.s32.totalorder %s125, %s126
      %p140 = scmp.eq.s32.totalorder %s17, 1
      %p141 = por %p139, %p140
      %p143 = scmp.ne.s32.totalorder %s126, %s142
      %p144 = scmp.eq.s32.totalorder %s17, 0
      %p145 = por %p143, %p144
      %s146 = ssub.s32 %s20, %s29
      %p147 = scmp.eq.s32.totalorder %s146, 0
      %s149 = sadd.s32 %s148, 1
      %s150 = scalar_select %p147, %s148, %s149
      %p153 = pneg %p147
      %p154 = scmp.eq.s32.totalorder %s11, 1
      %p155 = por %p153, %p154
      %p156 = scmp.ne.s32.totalorder %s148, %s151
      %p157 = scmp.eq.s32.totalorder %s11, 0
      %p158 = por %p156, %p157
      %p159 = scmp.ne.s32.totalorder %s148, %s151
      %p160 = scmp.eq.s32.totalorder %s16, 1
      %p161 = por %p159, %p160
      %p162 = scmp.ne.s32.totalorder %s151, %s152
      %p163 = scmp.eq.s32.totalorder %s16, 0
      %p164 = por %p162, %p163
      %p165 = scmp.ne.s32.totalorder %s151, %s152
      %p166 = scmp.eq.s32.totalorder %s17, 1
      %p167 = por %p165, %p166
      %p169 = scmp.ne.s32.totalorder %s152, %s168
      %p170 = scmp.eq.s32.totalorder %s17, 0
      %p171 = por %p169, %p170
      %s172 = ssub.s32 %s18, %s37
      %s173 = ssub.s32 %s19, %s33
      %s174 = sor.u32 %s172, %s173
      %p175 = scmp.eq.s32.totalorder %s174, 0
      %s177 = sadd.s32 %s176, 1
      %s178 = scalar_select %p175, %s176, %s177
      %p181 = pneg %p175
      %p182 = scmp.eq.s32.totalorder %s11, 1
      %p183 = por %p181, %p182
      %p184 = scmp.ne.s32.totalorder %s176, %s179
      %p185 = scmp.eq.s32.totalorder %s11, 0
      %p186 = por %p184, %p185
      %p187 = scmp.ne.s32.totalorder %s176, %s179
      %p188 = scmp.eq.s32.totalorder %s16, 1
      %p189 = por %p187, %p188
      %p190 = scmp.ne.s32.totalorder %s179, %s180
      %p191 = scmp.eq.s32.totalorder %s16, 0
      %p192 = por %p190, %p191
      %p193 = scmp.ne.s32.totalorder %s179, %s180
      %p194 = scmp.eq.s32.totalorder %s17, 1
      %p195 = por %p193, %p194
      %p197 = scmp.ne.s32.totalorder %s180, %s196
      %p198 = scmp.eq.s32.totalorder %s17, 0
      %p199 = por %p197, %p198
      %p200 = scmp.le.s32.totalorder 1, %s11
      %p201 = scmp.lt.s32.totalorder %s11, 3
      %p202 = pnand %p200, %p201
      %p203 = pneg %p202
      // Predicated region
      $region9: #{encode_image.18} parent=5 // pred_check
        _
      $region10: #{encode_image.18} parent=5 // pred_check_branch
        %205 = sbr.rel (%p202) target = $region12
      $region11: #{encode_image.18} parent=5 // pred_region
        %s206 = ssub.s32 %s11, 1
        // Predicated region
        $region13: #{encode_image.18} parent=11 // pred_check
          %p207 = pneg %p58
        $region14: #{encode_image.18} parent=11 // pred_check_branch
          %209 = sbr.rel (%p207) target = $region16
        $region15: #{encode_image.18} parent=11 // pred_region
          %s210 = smul.u32 2, %s21
          %p211 = scmp.lt.s32.totalorder %s210, 1
          %s212 = scalar_select %p211, %s210, 1
          %p213 = scmp.lt.s32.totalorder %s23, 0
          %s214 = scalar_select %p213, %s23, 0
          %s215 = sadd.s32 %s214, %s212
          %s216 = smul.addr %s215, 4
          %s217 = scalar_lea.vmem %s0, %s216
          %s218 = smul.u32 2, %s21
        $region16: #{encode_image.18} parent=11 // pred_fallthru
          _
        // Predicated region
        $region17: #{encode_image.18} parent=11 // pred_check
          %p219 = pneg %p138
        $region18: #{encode_image.18} parent=11 // pred_check_branch
          %221 = sbr.rel (%p219) target = $region20
        $region19: #{encode_image.18} parent=11 // pred_region
          %p222 = scmp.lt.s32.totalorder %s23, 0
          %s223 = scalar_select %p222, %s23, 0
          %s224 = scalar_lea.vmem %s3, %s223
        $region20: #{encode_image.18} parent=11 // pred_fallthru
          _
        // Predicated region
        $region21: #{encode_image.18} parent=11 // pred_check
          %p225 = pneg %p164
        $region22: #{encode_image.18} parent=11 // pred_check_branch
          %227 = sbr.rel (%p225) target = $region24
        $region23: #{encode_image.18} parent=11 // pred_region
          %p228 = scmp.lt.s32.totalorder %s23, 0
          %s229 = scalar_select %p228, %s23, 0
          %s230 = scalar_lea.vmem %s4, %s229
        $region24: #{encode_image.18} parent=11 // pred_fallthru
          _
      $region12: #{encode_image.18} parent=5 // pred_fallthru
        _
      %p231 = scmp.lt.s32.totalorder %s11, 2
      // Predicated region
      $region25: #{encode_image.18} parent=5 // pred_check
        %p232 = pneg %p231
      $region26: #{encode_image.18} parent=5 // pred_check_branch
        %234 = sbr.rel (%p232) target = $region28
      $region27: #{encode_image.18} parent=5 // pred_region
        // Predicated region
        $region29: #{encode_image.18} parent=27 // pred_check
          %p235 = pneg %p80
        $region30: #{encode_image.18} parent=27 // pred_check_branch
          %237 = sbr.rel (%p235) target = $region32
        $region31: #{encode_image.18} parent=27 // pred_region
          %s238 = sand.u32 %s70, 1
          %s239 = sand.u32 %s70, 1
          %s240 = smul.addr %s239, 128
          %s241 = scalar_lea.vmem [#allocation3], %s240
          %s242 = smul.u32 16, %s20
          %s243 = smul.u32 2, %s19
          %s244 = smul.addr %s242, 4
          %s245 = sadd.s32 %s243, %s244
          %s246 = smul.addr %s245, 4
          %s247 = scalar_lea.vmem %s1, %s246
          // Predicated region
          $region33: #{encode_image.18} parent=31 // pred_check
            _
          $region34: #{encode_image.18} parent=31 // pred_check_branch
            %249 = sbr.rel (0) target = $region36
          $region35: #{encode_image.18} parent=31 // pred_region
            // Predicated region
            $region37: #{encode_image.18} parent=35 // pred_check
              _
            $region38: #{encode_image.18} parent=35 // pred_check_branch
              %251 = sbr.rel (0) target = $region40
            $region39: #{encode_image.18} parent=35 // pred_region
              // Predicated region
              $region52: #{encode_image.18} parent=39 // pred_check
                _
              $region53: #{encode_image.18} parent=39 // pred_check_branch
                %296 = sbr.rel (0) target = $region55
              $region54: #{encode_image.18} parent=39 // pred_region
                loop: start=0, step=1, limit=1
                $region56: #{encode_image.18} parent=54 // loop_pre_header
                  _
                $region57: #{encode_image.18} parent=54 // loop_header
                  %s298 = sphi 0, %s302
                  %p299 = scmp.ge.s32.totalorder %s298, 1
                  %s303 = sphi %s247, %s247
                  %s304 = sphi %s241, %s241
                $region58: #{encode_image.18} parent=54 // loop_header_branch
                  %301 = sbr.rel (%p299) target = $region62
                $region59: #{encode_image.18} parent=54 // loop_body
                  %v305 = vld [vmem:[%s303] sm:$0xff]
                  %306 = vst [vmem:[%s304] sm:$0xff] %v305
                  %v307 = vld [vmem:[%s303 + $0x10] sm:$0xff]
                  %308 = vst [vmem:[%s304 + $0x8] sm:$0xff] %v307
                  %v309 = vld [vmem:[%s303 + $0x20] sm:$0xff]
                  %310 = vst [vmem:[%s304 + $0x10] sm:$0xff] %v309
                  %v311 = vld [vmem:[%s303 + $0x30] sm:$0xff]
                  %312 = vst [vmem:[%s304 + $0x18] sm:$0xff] %v311
                  %v313 = vld [vmem:[%s303 + $0x40] sm:$0xff]
                  %314 = vst [vmem:[%s304 + $0x20] sm:$0xff] %v313
                  %v315 = vld [vmem:[%s303 + $0x50] sm:$0xff]
                  %316 = vst [vmem:[%s304 + $0x28] sm:$0xff] %v315
                  %v317 = vld [vmem:[%s303 + $0x60] sm:$0xff]
                  %318 = vst [vmem:[%s304 + $0x30] sm:$0xff] %v317
                  %v319 = vld [vmem:[%s303 + $0x70] sm:$0xff]
                  %320 = vst [vmem:[%s304 + $0x38] sm:$0xff] %v319
                  %v321 = vld [vmem:[%s303 + $0x80] sm:$0xff]
                  %322 = vst [vmem:[%s304 + $0x40] sm:$0xff] %v321
                  %v323 = vld [vmem:[%s303 + $0x90] sm:$0xff]
                  %324 = vst [vmem:[%s304 + $0x48] sm:$0xff] %v323
                  %v325 = vld [vmem:[%s303 + $0xa0] sm:$0xff]
                  %326 = vst [vmem:[%s304 + $0x50] sm:$0xff] %v325
                  %v327 = vld [vmem:[%s303 + $0xb0] sm:$0xff]
                  %328 = vst [vmem:[%s304 + $0x58] sm:$0xff] %v327
                  %v329 = vld [vmem:[%s303 + $0xc0] sm:$0xff]
                  %330 = vst [vmem:[%s304 + $0x60] sm:$0xff] %v329
                  %v331 = vld [vmem:[%s303 + $0xd0] sm:$0xff]
                  %332 = vst [vmem:[%s304 + $0x68] sm:$0xff] %v331
                  %v333 = vld [vmem:[%s303 + $0xe0] sm:$0xff]
                  %334 = vst [vmem:[%s304 + $0x70] sm:$0xff] %v333
                  %v335 = vld [vmem:[%s303 + $0xf0] sm:$0xff]
                  %336 = vst [vmem:[%s304 + $0x78] sm:$0xff] %v335
                $region60: #{encode_image.18} parent=54 // loop_footer
                  %s302 = sadd.s32 1, %s298
                $region61: #{encode_image.18} parent=54 // loop_footer_branch
                  %297 = sbr.rel target = $region57
                $region62: #{encode_image.18} parent=54 // loop_exit
                  _
              $region55: #{encode_image.18} parent=39 // pred_fallthru
                _
              // Predicated region
              $region63: #{encode_image.18} parent=39 // pred_check
                _
              $region64: #{encode_image.18} parent=39 // pred_check_branch
                %338 = sbr.rel target = $region66
              $region65: #{encode_image.18} parent=39 // pred_region
                _
              $region66: #{encode_image.18} parent=39 // pred_fallthru
                _
            $region40: #{encode_image.18} parent=35 // pred_fallthru
              _
            // Predicated region
            $region41: #{encode_image.18} parent=35 // pred_check
              _
            $region42: #{encode_image.18} parent=35 // pred_check_branch
              %253 = sbr.rel target = $region44
            $region43: #{encode_image.18} parent=35 // pred_region
              loop: start=0, step=1, limit=1
              $region45: #{encode_image.18} parent=43 // loop_pre_header
                _
              $region46: #{encode_image.18} parent=43 // loop_header
                %s256 = sphi 0, %s260
                %p257 = scmp.ge.s32.totalorder %s256, 1
                %s261 = sphi %s247, %s247
                %s262 = sphi %s241, %s241
              $region47: #{encode_image.18} parent=43 // loop_header_branch
                %259 = sbr.rel (%p257) target = $region51
              $region48: #{encode_image.18} parent=43 // loop_body
                %v263 = vld [vmem:[%s261] sm:$0xff]
                %264 = vst [vmem:[%s262] sm:$0xff] %v263
                %v265 = vld [vmem:[%s261 + $0x10] sm:$0xff]
                %266 = vst [vmem:[%s262 + $0x8] sm:$0xff] %v265
                %v267 = vld [vmem:[%s261 + $0x20] sm:$0xff]
                %268 = vst [vmem:[%s262 + $0x10] sm:$0xff] %v267
                %v269 = vld [vmem:[%s261 + $0x30] sm:$0xff]
                %270 = vst [vmem:[%s262 + $0x18] sm:$0xff] %v269
                %v271 = vld [vmem:[%s261 + $0x40] sm:$0xff]
                %272 = vst [vmem:[%s262 + $0x20] sm:$0xff] %v271
                %v273 = vld [vmem:[%s261 + $0x50] sm:$0xff]
                %274 = vst [vmem:[%s262 + $0x28] sm:$0xff] %v273
                %v275 = vld [vmem:[%s261 + $0x60] sm:$0xff]
                %276 = vst [vmem:[%s262 + $0x30] sm:$0xff] %v275
                %v277 = vld [vmem:[%s261 + $0x70] sm:$0xff]
                %278 = vst [vmem:[%s262 + $0x38] sm:$0xff] %v277
                %v279 = vld [vmem:[%s261 + $0x80] sm:$0xff]
                %280 = vst [vmem:[%s262 + $0x40] sm:$0xff] %v279
                %v281 = vld [vmem:[%s261 + $0x90] sm:$0xff]
                %282 = vst [vmem:[%s262 + $0x48] sm:$0xff] %v281
                %v283 = vld [vmem:[%s261 + $0xa0] sm:$0xff]
                %284 = vst [vmem:[%s262 + $0x50] sm:$0xff] %v283
                %v285 = vld [vmem:[%s261 + $0xb0] sm:$0xff]
                %286 = vst [vmem:[%s262 + $0x58] sm:$0xff] %v285
                %v287 = vld [vmem:[%s261 + $0xc0] sm:$0xff]
                %288 = vst [vmem:[%s262 + $0x60] sm:$0xff] %v287
                %v289 = vld [vmem:[%s261 + $0xd0] sm:$0xff]
                %290 = vst [vmem:[%s262 + $0x68] sm:$0xff] %v289
                %v291 = vld [vmem:[%s261 + $0xe0] sm:$0xff]
                %292 = vst [vmem:[%s262 + $0x70] sm:$0xff] %v291
                %v293 = vld [vmem:[%s261 + $0xf0] sm:$0xff]
                %294 = vst [vmem:[%s262 + $0x78] sm:$0xff] %v293
              $region49: #{encode_image.18} parent=43 // loop_footer
                %s260 = sadd.s32 1, %s256
              $region50: #{encode_image.18} parent=43 // loop_footer_branch
                %255 = sbr.rel target = $region46
              $region51: #{encode_image.18} parent=43 // loop_exit
                _
            $region44: #{encode_image.18} parent=35 // pred_fallthru
              _
          $region36: #{encode_image.18} parent=31 // pred_fallthru
            _
          %339 = vnop
        $region32: #{encode_image.18} parent=27 // pred_fallthru
          _
        // Predicated region
        $region67: #{encode_image.18} parent=27 // pred_check
          %p340 = pneg %p106
        $region68: #{encode_image.18} parent=27 // pred_check_branch
          %342 = sbr.rel (%p340) target = $region70
        $region69: #{encode_image.18} parent=27 // pred_region
          %s343 = smul.u32 2, %s19
          %p344 = scmp.lt.s32.totalorder %s343, 3
          %s345 = scalar_select %p344, %s343, 3
          %s346 = scalar_lea.vmem %s2, %s345
          %s347 = smul.u32 2, %s19
        $region70: #{encode_image.18} parent=27 // pred_fallthru
          _
      $region28: #{encode_image.18} parent=5 // pred_fallthru
        _
      %p348 = scmp.le.s32.totalorder 1, %s11
      %p349 = scmp.lt.s32.totalorder %s11, 3
      %p350 = pnand %p348, %p349
      %p351 = pneg %p350
      // Predicated region
      $region71: #{encode_image.18} parent=5 // pred_check
        _
      $region72: #{encode_image.18} parent=5 // pred_check_branch
        %353 = sbr.rel (%p350) target = $region74
      $region73: #{encode_image.18} parent=5 // pred_region
        %s354 = ssub.s32 %s11, 1
        %s355 = sand.u32 %s73, 1
        %s356 = sand.u32 %s73, 1
        %s357 = smul.addr %s356, 128
        %s358 = scalar_lea.vmem [#allocation3], %s357
        // Predicated region
        $region75: #{encode_image.18} parent=73 // pred_check
          %p359 = pneg %p86
        $region76: #{encode_image.18} parent=73 // pred_check_branch
          %361 = sbr.rel (%p359) target = $region78
        $region77: #{encode_image.18} parent=73 // pred_region
          _
        $region78: #{encode_image.18} parent=73 // pred_fallthru
          _
        %s362 = smul.u32 2, %s21
        %p363 = scmp.lt.s32.totalorder %s362, 1
        %s364 = scalar_select %p363, %s362, 1
        %p365 = scmp.lt.s32.totalorder %s23, 0
        %s366 = scalar_select %p365, %s23, 0
        %s367 = sadd.s32 %s366, %s364
        %s368 = smul.addr %s367, 4
        %s369 = scalar_lea.vmem %s0, %s368
        %p370 = pneg %p58
        %p371 = pneg %p55
        %s372 = sand.u32 %s73, 1
        %s373 = sand.u32 %s73, 1
        %s374 = smul.addr %s373, 128
        %s375 = scalar_lea.vmem [#allocation3], %s374
        %p376 = pneg %p86
        %p377 = pneg %p83
        %s378 = smul.u32 2, %s22
        %p379 = scmp.lt.s32.totalorder %s378, 3
        %s380 = scalar_select %p379, %s378, 3
        %s381 = scalar_lea.vmem %s2, %s380
        %p382 = pneg %p112
        %p383 = pneg %p109
        %p384 = scmp.lt.s32.totalorder %s23, 0
        %s385 = scalar_select %p384, %s23, 0
        %s386 = scalar_lea.vmem %s3, %s385
        %p387 = pneg %p138
        %p388 = pneg %p135
        %p389 = scmp.lt.s32.totalorder %s23, 0
        %s390 = scalar_select %p389, %s23, 0
        %s391 = scalar_lea.vmem %s4, %s390
        %p392 = pneg %p164
        %p393 = pneg %p161
        %p394 = pneg %p192
        %p395 = pneg %p189
        %s396 = sand.u32 %s179, 1
        %s397 = sand.u32 %s179, 1
        %s398 = smul.addr %s397, 16
        %s399 = scalar_lea.vmem [#allocation4], %s398
        %s400 = smul.u32 2, %s21
        %p401 = scmp.lt.s32.totalorder %s400, 1
        %s402 = scalar_select %p401, %s400, 1
        %p403 = scmp.lt.s32.totalorder %s23, 0
        %s404 = scalar_select %p403, %s23, 0
        %s405 = sadd.s32 %s404, %s402
        %s406 = smul.addr %s405, 4
        %s407 = scalar_lea.vmem %s0, %s406
        %s408 = smul.u32 2, %s21
        %s409 = smul.u32 16, %s23
        %s410 = smul.u32 2, %s22
        %s411 = smul.u32 2, %s22
        %p412 = scmp.lt.s32.totalorder %s411, 3
        %s413 = scalar_select %p412, %s411, 3
        %s414 = scalar_lea.vmem %s2, %s413
        %s415 = smul.u32 2, %s22
        %p416 = scmp.lt.s32.totalorder %s23, 0
        %s417 = scalar_select %p416, %s23, 0
        %s418 = scalar_lea.vmem %s3, %s417
        %p419 = scmp.lt.s32.totalorder %s23, 0
        %s420 = scalar_select %p419, %s23, 0
        %s421 = scalar_lea.vmem %s4, %s420
        %s422 = smul.u32 2, %s21
        %s423 = smul.u32 2, %s22
        %p425 = scmp.eq.s32.totalorder %s22, 0
        // Predicated region
        $region79: #{encode_image.18} parent=73 // pred_check
          %p426 = pneg %p425
        $region80: #{encode_image.18} parent=73 // pred_check_branch
          %428 = sbr.rel (%p426) target = $region82
        $region81: #{encode_image.18} parent=73 // pred_region
          %v429 = vld [vmem:[%s407] sm:$0xf]
          %v430 = vld [vmem:[%s407 + $0x4] sm:$0xf]
          %v431 = vunpack.c.l.bf16 %v429
          %v432 = vunpack.c.l.bf16 %v430
          %433 = vadd.xlane.f32.xlu0 %v431
          %v434 = vpop.xlane.xlu0 %433
          %435 = vadd.xlane.f32.xlu0 %v432
          %v436 = vpop.xlane.xlu0 %435
          %v437 = vrcp.pop 128.0
          %v438 = vmul.f32 %v434, %v437
          %v439 = vmul.f32 %v436, %v437
          %v440 = vsub.f32 %v431, %v438
          %v441 = vsub.f32 %v432, %v439
          %v442 = vmul.f32 %v440, %v440
          %v443 = vmul.f32 %v441, %v441
          %444 = vadd.xlane.f32.xlu0 %v442
          %v445 = vpop.xlane.xlu0 %444
          %446 = vadd.xlane.f32.xlu0 %v443
          %v447 = vpop.xlane.xlu0 %446
          %v448 = vmul.f32 %v445, %v437
          %v449 = vmul.f32 %v447, %v437
          %v450 = vadd.f32 %v448, 1e-05
          %v451 = vadd.f32 %v449, 1e-05
          %v452 = vrsqrt.pop %v450
          %v453 = vrsqrt.pop %v451
          %v454 = vmul.f32 %v440, %v452
          %v455 = vmul.f32 %v441, %v453
          %v456 = vld [vmem:[%s418] sm:$0x1]
          %v458 = vlaneseq
          %v459 = vshrl.u32 %v458, 7
          %v460 = vsub.s32 0, %v459
          %v461 = vrot.slane %v456, %v460
          %v463 = vmul.f32 %v454, %v461
          %v464 = vmul.f32 %v455, %v461
          %v465 = vld [vmem:[%s421] sm:$0x1]
          %v467 = vlaneseq
          %v468 = vshrl.u32 %v467, 7
          %v469 = vsub.s32 0, %v468
          %v470 = vrot.slane %v465, %v469
          %v472 = vadd.f32 %v463, %v470
          %v473 = vadd.f32 %v464, %v470
          %v474 = vpack.c.bf16 %v473, %v472
          %475 = vst [vmem:[#allocation2] sm:$0xff] %v474
        $region82: #{encode_image.18} parent=73 // pred_fallthru
          _
        %v476 = vld [vmem:[#allocation2] sm:$0xff]
        %v477 = vld [vmem:[%s358] sm:$0xff]
        %v478 = vld [vmem:[%s358 + $0x8] sm:$0xff]
        %v479 = vld [vmem:[%s358 + $0x10] sm:$0xff]
        %v480 = vld [vmem:[%s358 + $0x18] sm:$0xff]
        %v481 = vld [vmem:[%s358 + $0x20] sm:$0xff]
        %v482 = vld [vmem:[%s358 + $0x28] sm:$0xff]
        %v483 = vld [vmem:[%s358 + $0x30] sm:$0xff]
        %v484 = vld [vmem:[%s358 + $0x38] sm:$0xff]
        %v485 = vld [vmem:[%s358 + $0x40] sm:$0xff]
        %v486 = vld [vmem:[%s358 + $0x48] sm:$0xff]
        %v487 = vld [vmem:[%s358 + $0x50] sm:$0xff]
        %v488 = vld [vmem:[%s358 + $0x58] sm:$0xff]
        %v489 = vld [vmem:[%s358 + $0x60] sm:$0xff]
        %v490 = vld [vmem:[%s358 + $0x68] sm:$0xff]
        %v491 = vld [vmem:[%s358 + $0x70] sm:$0xff]
        %v492 = vld [vmem:[%s358 + $0x78] sm:$0xff]
        %v493 = vld [vmem:[%s414] sm:$0x3]
        %v495 = vlaneseq
        %v496 = vshrl.u32 %v495, 7
        %v497 = vsub.s32 0, %v496
        %v498 = vrot.slane %v493, %v497
        %v499 = vlaneseq
        %v500 = vshrl.u32 %v499, 7
        %v501 = vsub.s32 1, %v500
        %v502 = vrot.slane %v493, %v501
        %v521 = vunpack.c.l.b16 %v477
        %v522 = vunpack.c.h.b16 %v477
        %v523 = vunpack.c.l.b16 %v478
        %v524 = vunpack.c.h.b16 %v478
        %v525 = vunpack.c.l.b16 %v479
        %v526 = vunpack.c.h.b16 %v479
        %v527 = vunpack.c.l.b16 %v480
        %v528 = vunpack.c.h.b16 %v480
        %v529 = vunpack.c.l.b16 %v481
        %v530 = vunpack.c.h.b16 %v481
        %v531 = vunpack.c.l.b16 %v482
        %v532 = vunpack.c.h.b16 %v482
        %v533 = vunpack.c.l.b16 %v483
        %v534 = vunpack.c.h.b16 %v483
        %v535 = vunpack.c.l.b16 %v484
        %v536 = vunpack.c.h.b16 %v484
        %v537 = vunpack.c.l.b16 %v485
        %v538 = vunpack.c.h.b16 %v485
        %v539 = vunpack.c.l.b16 %v486
        %v540 = vunpack.c.h.b16 %v486
        %v541 = vunpack.c.l.b16 %v487
        %v542 = vunpack.c.h.b16 %v487
        %v543 = vunpack.c.l.b16 %v488
        %v544 = vunpack.c.h.b16 %v488
        %v545 = vunpack.c.l.b16 %v489
        %v546 = vunpack.c.h.b16 %v489
        %v547 = vunpack.c.l.b16 %v490
        %v548 = vunpack.c.h.b16 %v490
        %v549 = vunpack.c.l.b16 %v491
        %v550 = vunpack.c.h.b16 %v491
        %v551 = vunpack.c.l.b16 %v492
        %v552 = vunpack.c.h.b16 %v492
        %v553 = vpack.c.b16 %v523, %v521
        %v554 = vpack.c.b16 %v524, %v522
        %v555 = vpack.c.b16 %v527, %v525
        %v556 = vpack.c.b16 %v528, %v526
        %v557 = vpack.c.b16 %v531, %v529
        %v558 = vpack.c.b16 %v532, %v530
        %v559 = vpack.c.b16 %v535, %v533
        %v560 = vpack.c.b16 %v536, %v534
        %v561 = vpack.c.b16 %v539, %v537
        %v562 = vpack.c.b16 %v540, %v538
        %v563 = vpack.c.b16 %v543, %v541
        %v564 = vpack.c.b16 %v544, %v542
        %v565 = vpack.c.b16 %v547, %v545
        %v566 = vpack.c.b16 %v548, %v546
        %v567 = vpack.c.b16 %v551, %v549
        %v568 = vpack.c.b16 %v552, %v550
        %585 = vmatprep.subr.bf16.mxu0 %v554
        %586 = vmatpush1.bf16.msra.mxu0 %v553
        %587 = vmatprep.subr.bf16.mxu0 %v556
        %588 = vmatpush1.bf16.msra.mxu0 %v555
        %589 = vmatprep.subr.bf16.mxu0 %v558
        %590 = vmatpush1.bf16.msra.mxu0 %v557
        %591 = vmatprep.subr.bf16.mxu0 %v560
        %592 = vmatpush1.bf16.msra.mxu0 %v559
        %593 = vmatprep.subr.bf16.mxu0 %v562
        %594 = vmatpush1.bf16.msra.mxu0 %v561
        %595 = vmatprep.subr.bf16.mxu0 %v564
        %596 = vmatpush1.bf16.msra.mxu0 %v563
        %597 = vmatprep.subr.bf16.mxu0 %v566
        %598 = vmatpush1.bf16.msra.mxu0 %v565
        %599 = vmatprep.subr.bf16.mxu0 %v568
        %600 = vmatpush1.bf16.msra.mxu0 %v567
        %601 = vmatprep.subr.bf16.mxu0 0
        %602 = vmatpush1.bf16.msra.mxu0 0
        %603 = vmatprep.subr.bf16.mxu0 0
        %604 = vmatpush1.bf16.msra.mxu0 0
        %605 = vmatprep.subr.bf16.mxu0 0
        %606 = vmatpush1.bf16.msra.mxu0 0
        %607 = vmatprep.subr.bf16.mxu0 0
        %608 = vmatpush1.bf16.msra.mxu0 0
        %609 = vmatprep.subr.bf16.mxu0 0
        %610 = vmatpush1.bf16.msra.mxu0 0
        %611 = vmatprep.subr.bf16.mxu0 0
        %612 = vmatpush1.bf16.msra.mxu0 0
        %613 = vmatprep.subr.bf16.mxu0 0
        %614 = vmatpush1.bf16.msra.mxu0 0
        %615 = vmatprep.subr.bf16.mxu0 0
        %616 = vmatpush1.bf16.msra.mxu0 0
        %617 = vmatprep.mubr.bf16.mxu0 0
        %618 = vmatmul.mubr.bf16.gmra.mrb[0].mxu0 %v476
        %v619 = vpop.f32.mrb[0].mxu0
        %v620 = vadd.f32 %v498, %v619
        %v621 = vpop.f32.mrb[0].mxu0
        %v622 = vadd.f32 %v502, %v621
        %v623 = vpop.f32.mrb[0].mxu0
        %v624 = vadd.f32 %v498, %v623
        %v625 = vpop.f32.mrb[0].mxu0
        %v626 = vadd.f32 %v502, %v625
        %627 = vdwg.mxu0
        %v628 = vmul.f32 %v620, 1.702
        %v629 = vmul.f32 %v622, 1.702
        %v630 = vmul.f32 %v624, 1.702
        %v631 = vmul.f32 %v626, 1.702
        %v632 = vxor.u32 %v628, 2147483648
        %v633 = vxor.u32 %v629, 2147483648
        %v634 = vxor.u32 %v630, 2147483648
        %v635 = vxor.u32 %v631, 2147483648
        %v636 = vmul.f32 %v632, 1.442695
        %v637 = vpow.pop %v636
        %v638 = vmul.f32 %v633, 1.442695
        %v639 = vpow.pop %v638
        %v640 = vmul.f32 %v634, 1.442695
        %v641 = vpow.pop %v640
        %v642 = vmul.f32 %v635, 1.442695
        %v643 = vpow.pop %v642
        %v644 = vadd.f32 %v637, 1.0
        %v645 = vadd.f32 %v639, 1.0
        %v646 = vadd.f32 %v641, 1.0
        %v647 = vadd.f32 %v643, 1.0
        %v648 = vrcp.pop %v644
        %v649 = vmul.f32 1.0, %v648
        %v650 = vrcp.pop %v645
        %v651 = vmul.f32 1.0, %v650
        %v652 = vrcp.pop %v646
        %v653 = vmul.f32 1.0, %v652
        %v654 = vrcp.pop %v647
        %v655 = vmul.f32 1.0, %v654
        %v656 = vmul.f32 %v620, %v649
        %v657 = vmul.f32 %v622, %v651
        %v658 = vmul.f32 %v624, %v653
        %v659 = vmul.f32 %v626, %v655
        %v660 = vpack.c.bf16 %v658, %v656
        %v661 = vpack.c.bf16 %v659, %v657
        %v664 = vunpack.c.l.b16 %v660
        %v665 = vunpack.c.l.b16 %v661
        %v666 = vunpack.c.h.b16 %v660
        %v667 = vunpack.c.h.b16 %v661
        %v668 = vpack.c.b16 %v665, %v664
        %v669 = vpack.c.b16 %v667, %v666
        %672 = vst [vmem:[%s399] sm:$0xff] %v668
        %673 = vst [vmem:[%s399 + $0x8] sm:$0xff] %v669
        %s674 = sand.u32 %s179, 1
        %s675 = sand.u32 %s179, 1
        %s676 = smul.addr %s675, 16
        %s677 = scalar_lea.vmem [#allocation4], %s676
        // Predicated region
        $region83: #{encode_image.18} parent=73 // pred_check
          %p678 = pneg %p189
        $region84: #{encode_image.18} parent=73 // pred_check_branch
          %680 = sbr.rel (%p678) target = $region86
        $region85: #{encode_image.18} parent=73 // pred_region
          %s681 = smul.u32 2, %s21
          %s682 = smul.u32 2, %s22
          %s683 = smul.addr %s681, 4
          %s684 = sadd.s32 %s682, %s683
          %s685 = smul.addr %s684, 4
          %s686 = scalar_lea.vmem %s5, %s685
          // Predicated region
          $region87: #{encode_image.18} parent=85 // pred_check
            _
          $region88: #{encode_image.18} parent=85 // pred_check_branch
            %688 = sbr.rel (0) target = $region90
          $region89: #{encode_image.18} parent=85 // pred_region
            // Predicated region
            $region91: #{encode_image.18} parent=89 // pred_check
              _
            $region92: #{encode_image.18} parent=89 // pred_check_branch
              %690 = sbr.rel (0) target = $region94
            $region93: #{encode_image.18} parent=89 // pred_region
              // Predicated region
              $region106: #{encode_image.18} parent=93 // pred_check
                _
              $region107: #{encode_image.18} parent=93 // pred_check_branch
                %707 = sbr.rel (0) target = $region109
              $region108: #{encode_image.18} parent=93 // pred_region
                loop: start=0, step=1, limit=1
                $region110: #{encode_image.18} parent=108 // loop_pre_header
                  _
                $region111: #{encode_image.18} parent=108 // loop_header
                  %s709 = sphi 0, %s713
                  %p710 = scmp.ge.s32.totalorder %s709, 1
                  %s714 = sphi %s677, %s677
                  %s715 = sphi %s686, %s686
                $region112: #{encode_image.18} parent=108 // loop_header_branch
                  %712 = sbr.rel (%p710) target = $region116
                $region113: #{encode_image.18} parent=108 // loop_body
                  %v716 = vld [vmem:[%s714] sm:$0xff]
                  %717 = vst [vmem:[%s715] sm:$0xff] %v716
                  %v718 = vld [vmem:[%s714 + $0x8] sm:$0xff]
                  %719 = vst [vmem:[%s715 + $0x10] sm:$0xff] %v718
                $region114: #{encode_image.18} parent=108 // loop_footer
                  %s713 = sadd.s32 1, %s709
                $region115: #{encode_image.18} parent=108 // loop_footer_branch
                  %708 = sbr.rel target = $region111
                $region116: #{encode_image.18} parent=108 // loop_exit
                  _
              $region109: #{encode_image.18} parent=93 // pred_fallthru
                _
              // Predicated region
              $region117: #{encode_image.18} parent=93 // pred_check
                _
              $region118: #{encode_image.18} parent=93 // pred_check_branch
                %721 = sbr.rel target = $region120
              $region119: #{encode_image.18} parent=93 // pred_region
                _
              $region120: #{encode_image.18} parent=93 // pred_fallthru
                _
            $region94: #{encode_image.18} parent=89 // pred_fallthru
              _
            // Predicated region
            $region95: #{encode_image.18} parent=89 // pred_check
              _
            $region96: #{encode_image.18} parent=89 // pred_check_branch
              %692 = sbr.rel target = $region98
            $region97: #{encode_image.18} parent=89 // pred_region
              loop: start=0, step=1, limit=1
              $region99: #{encode_image.18} parent=97 // loop_pre_header
                _
              $region100: #{encode_image.18} parent=97 // loop_header
                %s695 = sphi 0, %s699
                %p696 = scmp.ge.s32.totalorder %s695, 1
                %s700 = sphi %s677, %s677
                %s701 = sphi %s686, %s686
              $region101: #{encode_image.18} parent=97 // loop_header_branch
                %698 = sbr.rel (%p696) target = $region105
              $region102: #{encode_image.18} parent=97 // loop_body
                %v702 = vld [vmem:[%s700] sm:$0xff]
                %703 = vst [vmem:[%s701] sm:$0xff] %v702
                %v704 = vld [vmem:[%s700 + $0x8] sm:$0xff]
                %705 = vst [vmem:[%s701 + $0x10] sm:$0xff] %v704
              $region103: #{encode_image.18} parent=97 // loop_footer
                %s699 = sadd.s32 1, %s695
              $region104: #{encode_image.18} parent=97 // loop_footer_branch
                %694 = sbr.rel target = $region100
              $region105: #{encode_image.18} parent=97 // loop_exit
                _
            $region98: #{encode_image.18} parent=89 // pred_fallthru
              _
          $region90: #{encode_image.18} parent=85 // pred_fallthru
            _
          %722 = vnop
        $region86: #{encode_image.18} parent=73 // pred_fallthru
          _
      $region74: #{encode_image.18} parent=5 // pred_fallthru
        _
      %p723 = scmp.le.s32.totalorder 2, %s11
      // Predicated region
      $region121: #{encode_image.18} parent=5 // pred_check
        %p724 = pneg %p723
      $region122: #{encode_image.18} parent=5 // pred_check_branch
        %726 = sbr.rel (%p724) target = $region124
      $region123: #{encode_image.18} parent=5 // pred_region
        %s727 = ssub.s32 %s11, 2
        // Predicated region
        $region125: #{encode_image.18} parent=123 // pred_check
          %p728 = pneg %p195
        $region126: #{encode_image.18} parent=123 // pred_check_branch
          %730 = sbr.rel (%p728) target = $region128
        $region127: #{encode_image.18} parent=123 // pred_region
          %s731 = sand.u32 %s180, 1
          %s732 = sand.u32 %s180, 1
          %s733 = smul.addr %s732, 16
          %s734 = scalar_lea.vmem [#allocation4], %s733
        $region128: #{encode_image.18} parent=123 // pred_fallthru
          _
      $region124: #{encode_image.18} parent=5 // pred_fallthru
        _
    $region6: #{encode_image.18} parent=1 // loop_footer
      %s15 = sadd.s32 1, %s11
    $region7: #{encode_image.18} parent=1 // loop_footer_branch
      %10 = sbr.rel target = $region3
    $region8: #{encode_image.18} parent=1 // loop_exit
      _

// kernel: encode_image.19
$region0: #{encode_image.19}
  #allocation0 [shape = 'u32[]', space=smem, size = 0x4, offset = 0x4, fixed_abs, tag = 'smem constant byte address 0x4 - core index']
  #allocation1 [shape = 'u32[144,128]{1,0:T(1,128)}', space=vmem, size = 0x12000, scoped, tag = 'internal scratch']
  %s0 = inlined_call_operand.vmem [shape: bf16[16,512], index: 0, kind: input, shape index: {}]
  %s1 = inlined_call_operand.vmem [shape: bf16[512,128], index: 1, kind: input, shape index: {}]
  %s2 = inlined_call_operand.vmem [shape: f32[1,128], index: 2, kind: input, shape index: {}]
  %s3 = inlined_call_operand.vmem [shape: bf16[16,128], index: 3, kind: input, shape index: {}]
  %s4 = inlined_call_operand.vmem [shape: bf16[16,128], index: 4, kind: output, shape index: {}]
  %s5 = sld [smem:[#allocation0]]
  $region26: #{encode_image.19} parent=0
    _
  %s7 = ssub.s32 1, %s5
  %s8 = scalar_select 0, %s7, %s5
  // Predicated region
  $region2: #{encode_image.19} parent=0 // pred_check
    _
  $region3: #{encode_image.19} parent=0 // pred_check_branch
    %10 = sbr.rel (0) target = $region5
  $region4: #{encode_image.19} parent=0 // pred_region
    _
  $region5: #{encode_image.19} parent=0 // pred_fallthru
    _
  // Predicated region
  $region6: #{encode_image.19} parent=0 // pred_check
    _
  $region7: #{encode_image.19} parent=0 // pred_check_branch
    %12 = sbr.rel (0) target = $region9
  $region8: #{encode_image.19} parent=0 // pred_region
    _
  $region9: #{encode_image.19} parent=0 // pred_fallthru
    _
  // Predicated region
  $region10: #{encode_image.19} parent=0 // pred_check
    _
  $region11: #{encode_image.19} parent=0 // pred_check_branch
    %14 = sbr.rel (0) target = $region13
  $region12: #{encode_image.19} parent=0 // pred_region
    _
  $region13: #{encode_image.19} parent=0 // pred_fallthru
    _
  // Predicated region
  $region14: #{encode_image.19} parent=0 // pred_check
    _
  $region15: #{encode_image.19} parent=0 // pred_check_branch
    %16 = sbr.rel (0) target = $region17
  $region16: #{encode_image.19} parent=0 // pred_region
    _
  $region17: #{encode_image.19} parent=0 // pred_fallthru
    _
  %v18 = vld [vmem:[%s0] sm:$0xff]
  %v19 = vld [vmem:[%s0 + $0x8] sm:$0xff]
  %v20 = vld [vmem:[%s0 + $0x10] sm:$0xff]
  %v21 = vld [vmem:[%s0 + $0x18] sm:$0xff]
  %v22 = vld [vmem:[%s1] sm:$0xf]
  %v23 = vld [vmem:[%s1 + $0x4] sm:$0xf]
  %v24 = vld [vmem:[%s1 + $0x8] sm:$0xf]
  %v25 = vld [vmem:[%s1 + $0xc] sm:$0xf]
  %v26 = vld [vmem:[%s1 + $0x10] sm:$0xf]
  %v27 = vld [vmem:[%s1 + $0x14] sm:$0xf]
  %v28 = vld [vmem:[%s1 + $0x18] sm:$0xf]
  %v29 = vld [vmem:[%s1 + $0x1c] sm:$0xf]
  %v30 = vld [vmem:[%s1 + $0x20] sm:$0xf]
  %v31 = vld [vmem:[%s1 + $0x24] sm:$0xf]
  %v32 = vld [vmem:[%s1 + $0x28] sm:$0xf]
  %v33 = vld [vmem:[%s1 + $0x2c] sm:$0xf]
  %v34 = vld [vmem:[%s1 + $0x30] sm:$0xf]
  %v35 = vld [vmem:[%s1 + $0x34] sm:$0xf]
  %v36 = vld [vmem:[%s1 + $0x38] sm:$0xf]
  %v37 = vld [vmem:[%s1 + $0x3c] sm:$0xf]
  %v38 = vld [vmem:[%s1 + $0x40] sm:$0xf]
  %v39 = vld [vmem:[%s1 + $0x44] sm:$0xf]
  %v40 = vld [vmem:[%s1 + $0x48] sm:$0xf]
  %v41 = vld [vmem:[%s1 + $0x4c] sm:$0xf]
  %v42 = vld [vmem:[%s1 + $0x50] sm:$0xf]
  %v43 = vld [vmem:[%s1 + $0x54] sm:$0xf]
  %v44 = vld [vmem:[%s1 + $0x58] sm:$0xf]
  %v45 = vld [vmem:[%s1 + $0x5c] sm:$0xf]
  %v46 = vld [vmem:[%s1 + $0x60] sm:$0xf]
  %v47 = vld [vmem:[%s1 + $0x64] sm:$0xf]
  %v48 = vld [vmem:[%s1 + $0x68] sm:$0xf]
  %v49 = vld [vmem:[%s1 + $0x6c] sm:$0xf]
  %v50 = vld [vmem:[%s1 + $0x70] sm:$0xf]
  %v51 = vld [vmem:[%s1 + $0x74] sm:$0xf]
  %v52 = vld [vmem:[%s1 + $0x78] sm:$0xf]
  %v53 = vld [vmem:[%s1 + $0x7c] sm:$0xf]
  %v54 = vld [vmem:[%s1 + $0x80] sm:$0xf]
  %v55 = vld [vmem:[%s1 + $0x84] sm:$0xf]
  %v56 = vld [vmem:[%s1 + $0x88] sm:$0xf]
  %v57 = vld [vmem:[%s1 + $0x8c] sm:$0xf]
  %v58 = vld [vmem:[%s1 + $0x90] sm:$0xf]
  %v59 = vld [vmem:[%s1 + $0x94] sm:$0xf]
  %v60 = vld [vmem:[%s1 + $0x98] sm:$0xf]
  %v61 = vld [vmem:[%s1 + $0x9c] sm:$0xf]
  %v62 = vld [vmem:[%s1 + $0xa0] sm:$0xf]
  %v63 = vld [vmem:[%s1 + $0xa4] sm:$0xf]
  %v64 = vld [vmem:[%s1 + $0xa8] sm:$0xf]
  %v65 = vld [vmem:[%s1 + $0xac] sm:$0xf]
  %v66 = vld [vmem:[%s1 + $0xb0] sm:$0xf]
  %v67 = vld [vmem:[%s1 + $0xb4] sm:$0xf]
  %v68 = vld [vmem:[%s1 + $0xb8] sm:$0xf]
  %v69 = vld [vmem:[%s1 + $0xbc] sm:$0xf]
  %v70 = vld [vmem:[%s1 + $0xc0] sm:$0xf]
  %v71 = vld [vmem:[%s1 + $0xc4] sm:$0xf]
  %v72 = vld [vmem:[%s1 + $0xc8] sm:$0xf]
  %v73 = vld [vmem:[%s1 + $0xcc] sm:$0xf]
  %v74 = vld [vmem:[%s1 + $0xd0] sm:$0xf]
  %v75 = vld [vmem:[%s1 + $0xd4] sm:$0xf]
  %v76 = vld [vmem:[%s1 + $0xd8] sm:$0xf]
  %v77 = vld [vmem:[%s1 + $0xdc] sm:$0xf]
  %v78 = vld [vmem:[%s1 + $0xe0] sm:$0xf]
  %v79 = vld [vmem:[%s1 + $0xe4] sm:$0xf]
  %v80 = vld [vmem:[%s1 + $0xe8] sm:$0xf]
  %v81 = vld [vmem:[%s1 + $0xec] sm:$0xf]
  %v82 = vld [vmem:[%s1 + $0xf0] sm:$0xf]
  %v83 = vld [vmem:[%s1 + $0xf4] sm:$0xf]
  %v84 = vld [vmem:[%s1 + $0xf8] sm:$0xf]
  %v85 = vld [vmem:[%s1 + $0xfc] sm:$0xf]
  %v86 = vld [vmem:[%s2] sm:$0x1]
  %v88 = vlaneseq
  %v89 = vshrl.u32 %v88, 7
  %v90 = vsub.s32 0, %v89
  %v91 = vrot.slane %v86, %v90
  %v97 = vunpack.c.l.b16 %v18
  %v98 = vunpack.c.h.b16 %v18
  %v99 = vunpack.c.l.b16 %v19
  %v100 = vunpack.c.h.b16 %v19
  %v101 = vunpack.c.l.b16 %v20
  %v102 = vunpack.c.h.b16 %v20
  %v103 = vunpack.c.l.b16 %v21
  %v104 = vunpack.c.h.b16 %v21
  %v105 = vpack.c.b16 %v101, %v97
  %v106 = vpack.c.b16 %v102, %v98
  %v107 = vpack.c.b16 %v103, %v99
  %v108 = vpack.c.b16 %v104, %v100
  %v177 = vunpack.c.l.b16 %v22
  %v178 = vunpack.c.l.b16 %v23
  %v179 = vunpack.c.l.b16 %v24
  %v180 = vunpack.c.l.b16 %v25
  %v181 = vunpack.c.l.b16 %v26
  %v182 = vunpack.c.l.b16 %v27
  %v183 = vunpack.c.l.b16 %v28
  %v184 = vunpack.c.l.b16 %v29
  %v185 = vunpack.c.l.b16 %v30
  %v186 = vunpack.c.l.b16 %v31
  %v187 = vunpack.c.l.b16 %v32
  %v188 = vunpack.c.l.b16 %v33
  %v189 = vunpack.c.l.b16 %v34
  %v190 = vunpack.c.l.b16 %v35
  %v191 = vunpack.c.l.b16 %v36
  %v192 = vunpack.c.l.b16 %v37
  %v193 = vunpack.c.l.b16 %v38
  %v194 = vunpack.c.l.b16 %v39
  %v195 = vunpack.c.l.b16 %v40
  %v196 = vunpack.c.l.b16 %v41
  %v197 = vunpack.c.l.b16 %v42
  %v198 = vunpack.c.l.b16 %v43
  %v199 = vunpack.c.l.b16 %v44
  %v200 = vunpack.c.l.b16 %v45
  %v201 = vunpack.c.l.b16 %v46
  %v202 = vunpack.c.l.b16 %v47
  %v203 = vunpack.c.l.b16 %v48
  %v204 = vunpack.c.l.b16 %v49
  %v205 = vunpack.c.l.b16 %v50
  %v206 = vunpack.c.l.b16 %v51
  %v207 = vunpack.c.l.b16 %v52
  %v208 = vunpack.c.l.b16 %v53
  %v209 = vunpack.c.l.b16 %v54
  %v210 = vunpack.c.l.b16 %v55
  %v211 = vunpack.c.l.b16 %v56
  %v212 = vunpack.c.l.b16 %v57
  %v213 = vunpack.c.l.b16 %v58
  %v214 = vunpack.c.l.b16 %v59
  %v215 = vunpack.c.l.b16 %v60
  %v216 = vunpack.c.l.b16 %v61
  %v217 = vunpack.c.l.b16 %v62
  %v218 = vunpack.c.l.b16 %v63
  %v219 = vunpack.c.l.b16 %v64
  %v220 = vunpack.c.l.b16 %v65
  %v221 = vunpack.c.l.b16 %v66
  %v222 = vunpack.c.l.b16 %v67
  %v223 = vunpack.c.l.b16 %v68
  %v224 = vunpack.c.l.b16 %v69
  %v225 = vunpack.c.l.b16 %v70
  %v226 = vunpack.c.l.b16 %v71
  %v227 = vunpack.c.l.b16 %v72
  %v228 = vunpack.c.l.b16 %v73
  %v229 = vunpack.c.l.b16 %v74
  %v230 = vunpack.c.l.b16 %v75
  %v231 = vunpack.c.l.b16 %v76
  %v232 = vunpack.c.l.b16 %v77
  %v233 = vunpack.c.l.b16 %v78
  %v234 = vunpack.c.l.b16 %v79
  %v235 = vunpack.c.l.b16 %v80
  %v236 = vunpack.c.l.b16 %v81
  %v237 = vunpack.c.l.b16 %v82
  %v238 = vunpack.c.l.b16 %v83
  %v239 = vunpack.c.l.b16 %v84
  %v240 = vunpack.c.l.b16 %v85
  %v241 = vpack.c.b16 %v178, %v177
  %v242 = vpack.c.b16 %v180, %v179
  %v243 = vpack.c.b16 %v182, %v181
  %v244 = vpack.c.b16 %v184, %v183
  %v245 = vpack.c.b16 %v186, %v185
  %v246 = vpack.c.b16 %v188, %v187
  %v247 = vpack.c.b16 %v190, %v189
  %v248 = vpack.c.b16 %v192, %v191
  %v249 = vpack.c.b16 %v194, %v193
  %v250 = vpack.c.b16 %v196, %v195
  %v251 = vpack.c.b16 %v198, %v197
  %v252 = vpack.c.b16 %v200, %v199
  %v253 = vpack.c.b16 %v202, %v201
  %v254 = vpack.c.b16 %v204, %v203
  %v255 = vpack.c.b16 %v206, %v205
  %v256 = vpack.c.b16 %v208, %v207
  %v257 = vpack.c.b16 %v210, %v209
  %v258 = vpack.c.b16 %v212, %v211
  %v259 = vpack.c.b16 %v214, %v213
  %v260 = vpack.c.b16 %v216, %v215
  %v261 = vpack.c.b16 %v218, %v217
  %v262 = vpack.c.b16 %v220, %v219
  %v263 = vpack.c.b16 %v222, %v221
  %v264 = vpack.c.b16 %v224, %v223
  %v265 = vpack.c.b16 %v226, %v225
  %v266 = vpack.c.b16 %v228, %v227
  %v267 = vpack.c.b16 %v230, %v229
  %v268 = vpack.c.b16 %v232, %v231
  %v269 = vpack.c.b16 %v234, %v233
  %v270 = vpack.c.b16 %v236, %v235
  %v271 = vpack.c.b16 %v238, %v237
  %v272 = vpack.c.b16 %v240, %v239
  %305 = vmatprep.subr.bf16.mxu0 0
  %306 = vmatpush1.bf16.msra.mxu0 %v241
  %307 = vmatprep.subr.bf16.mxu0 0
  %308 = vmatpush1.bf16.msra.mxu0 %v242
  %309 = vmatprep.subr.bf16.mxu0 0
  %310 = vmatpush1.bf16.msra.mxu0 %v243
  %311 = vmatprep.subr.bf16.mxu0 0
  %312 = vmatpush1.bf16.msra.mxu0 %v244
  %313 = vmatprep.subr.bf16.mxu0 0
  %314 = vmatpush1.bf16.msra.mxu0 %v245
  %315 = vmatprep.subr.bf16.mxu0 0
  %316 = vmatpush1.bf16.msra.mxu0 %v246
  %317 = vmatprep.subr.bf16.mxu0 0
  %318 = vmatpush1.bf16.msra.mxu0 %v247
  %319 = vmatprep.subr.bf16.mxu0 0
  %320 = vmatpush1.bf16.msra.mxu0 %v248
  %321 = vmatprep.subr.bf16.mxu0 0
  %322 = vmatpush1.bf16.msra.mxu0 %v249
  %323 = vmatprep.subr.bf16.mxu0 0
  %324 = vmatpush1.bf16.msra.mxu0 %v250
  %325 = vmatprep.subr.bf16.mxu0 0
  %326 = vmatpush1.bf16.msra.mxu0 %v251
  %327 = vmatprep.subr.bf16.mxu0 0
  %328 = vmatpush1.bf16.msra.mxu0 %v252
  %329 = vmatprep.subr.bf16.mxu0 0
  %330 = vmatpush1.bf16.msra.mxu0 %v253
  %331 = vmatprep.subr.bf16.mxu0 0
  %332 = vmatpush1.bf16.msra.mxu0 %v254
  %333 = vmatprep.subr.bf16.mxu0 0
  %334 = vmatpush1.bf16.msra.mxu0 %v255
  %335 = vmatprep.subr.bf16.mxu0 0
  %336 = vmatpush1.bf16.msra.mxu0 %v256
  %337 = vmatprep.mubr.bf16.mxu0 %v106
  %338 = vmatmul.mubr.bf16.gmra.mrb[0].mxu0 %v105
  %v339 = vpop.f32.mrb[0].mxu0
  %v340 = vadd.f32 %v91, %v339
  %v341 = vpop.f32.mrb[0].mxu0
  %v342 = vpop.f32.mrb[0].mxu0
  %v343 = vadd.f32 %v91, %v342
  %v344 = vpop.f32.mrb[0].mxu0
  %345 = vdwg.mxu0
  %346 = vmatprep.subr.bf16.mxu0 0
  %347 = vmatpush1.bf16.msra.mxu0 %v257
  %348 = vmatprep.subr.bf16.mxu0 0
  %349 = vmatpush1.bf16.msra.mxu0 %v258
  %350 = vmatprep.subr.bf16.mxu0 0
  %351 = vmatpush1.bf16.msra.mxu0 %v259
  %352 = vmatprep.subr.bf16.mxu0 0
  %353 = vmatpush1.bf16.msra.mxu0 %v260
  %354 = vmatprep.subr.bf16.mxu0 0
  %355 = vmatpush1.bf16.msra.mxu0 %v261
  %356 = vmatprep.subr.bf16.mxu0 0
  %357 = vmatpush1.bf16.msra.mxu0 %v262
  %358 = vmatprep.subr.bf16.mxu0 0
  %359 = vmatpush1.bf16.msra.mxu0 %v263
  %360 = vmatprep.subr.bf16.mxu0 0
  %361 = vmatpush1.bf16.msra.mxu0 %v264
  %362 = vmatprep.subr.bf16.mxu0 0
  %363 = vmatpush1.bf16.msra.mxu0 %v265
  %364 = vmatprep.subr.bf16.mxu0 0
  %365 = vmatpush1.bf16.msra.mxu0 %v266
  %366 = vmatprep.subr.bf16.mxu0 0
  %367 = vmatpush1.bf16.msra.mxu0 %v267
  %368 = vmatprep.subr.bf16.mxu0 0
  %369 = vmatpush1.bf16.msra.mxu0 %v268
  %370 = vmatprep.subr.bf16.mxu0 0
  %371 = vmatpush1.bf16.msra.mxu0 %v269
  %372 = vmatprep.subr.bf16.mxu0 0
  %373 = vmatpush1.bf16.msra.mxu0 %v270
  %374 = vmatprep.subr.bf16.mxu0 0
  %375 = vmatpush1.bf16.msra.mxu0 %v271
  %376 = vmatprep.subr.bf16.mxu0 0
  %377 = vmatpush1.bf16.msra.mxu0 %v272
  %378 = vmatprep.mubr.bf16.mxu0 %v108
  %379 = vmatmul.mubr.bf16.gmra.mrb[0].mxu0 %v107
  %v380 = vpop.f32.mrb[0].mxu0
  %v381 = vadd.f32 %v340, %v380
  %v382 = vpop.f32.mrb[0].mxu0
  %v383 = vpop.f32.mrb[0].mxu0
  %v384 = vadd.f32 %v343, %v383
  %v385 = vpop.f32.mrb[0].mxu0
  %386 = vdwg.mxu0
  %v387 = vld [vmem:[%s3] sm:$0xf]
  %v388 = vld [vmem:[%s3 + $0x4] sm:$0xf]
  %v389 = vunpack.c.l.bf16 %v387
  %v390 = vunpack.c.l.bf16 %v388
  %v391 = vadd.f32 %v381, %v389
  %v392 = vadd.f32 %v384, %v390
  %v393 = vpack.c.bf16 %v392, %v391
  %v395 = vunpack.c.l.b16 %v393
  %v396 = vunpack.c.h.b16 %v393
  %v397 = vpack.c.b16 %v395, %v395
  %v398 = vpack.c.b16 %v396, %v396
  %401 = vst [vmem:[%s4] sm:$0xf] %v397
  %402 = vst [vmem:[%s4 + $0x4] sm:$0xf] %v398
  // Predicated region
  $region18: #{encode_image.19} parent=0 // pred_check
    _
  $region19: #{encode_image.19} parent=0 // pred_check_branch
    %404 = sbr.rel (0) target = $region21
  $region20: #{encode_image.19} parent=0 // pred_region
    _
  $region21: #{encode_image.19} parent=0 // pred_fallthru
    _
  // Predicated region
  $region22: #{encode_image.19} parent=0 // pred_check
    _
  $region23: #{encode_image.19} parent=0 // pred_check_branch
    %406 = sbr.rel (0) target = $region25
  $region24: #{encode_image.19} parent=0 // pred_region
    _
  $region25: #{encode_image.19} parent=0 // pred_fallthru
    _

// kernel: encode_image.25
$region0: #{encode_image.25}
  #allocation0 [shape = 'u32[]', space=smem, size = 0x4, offset = 0x4, fixed_abs, tag = 'smem constant byte address 0x4 - core index']
  #allocation1 [shape = 'u32[144,128]{1,0:T(1,128)}', space=vmem, size = 0x12000, scoped, tag = 'internal scratch']
  #allocation2 [shape = 'bf16[8,128]{1,0:T(8,128)(2,1)}', space=vmem, size = 0x800, scoped, tag = 'scratch operand']
  %s0 = inlined_call_operand.vmem [shape: bf16[8,128], index: 0, kind: input, shape index: {}]
  %s1 = inlined_call_operand.vmem [shape: bf16[128,128], index: 1, kind: input, shape index: {}]
  %s2 = inlined_call_operand.vmem [shape: f32[1,128], index: 2, kind: input, shape index: {}]
  %s3 = inlined_call_operand.vmem [shape: f32[1,128], index: 3, kind: input, shape index: {}]
  %s4 = inlined_call_operand.vmem [shape: f32[8,128], index: 4, kind: output, shape index: {}]
  %s5 = sld [smem:[#allocation0]]
  $region30: #{encode_image.25} parent=0
    _
  %s7 = ssub.s32 1, %s5
  %s8 = scalar_select 0, %s7, %s5
  // Predicated region
  $region2: #{encode_image.25} parent=0 // pred_check
    _
  $region3: #{encode_image.25} parent=0 // pred_check_branch
    %10 = sbr.rel (0) target = $region5
  $region4: #{encode_image.25} parent=0 // pred_region
    _
  $region5: #{encode_image.25} parent=0 // pred_fallthru
    _
  // Predicated region
  $region6: #{encode_image.25} parent=0 // pred_check
    _
  $region7: #{encode_image.25} parent=0 // pred_check_branch
    %12 = sbr.rel (0) target = $region9
  $region8: #{encode_image.25} parent=0 // pred_region
    _
  $region9: #{encode_image.25} parent=0 // pred_fallthru
    _
  // Predicated region
  $region10: #{encode_image.25} parent=0 // pred_check
    _
  $region11: #{encode_image.25} parent=0 // pred_check_branch
    %14 = sbr.rel (0) target = $region13
  $region12: #{encode_image.25} parent=0 // pred_region
    _
  $region13: #{encode_image.25} parent=0 // pred_fallthru
    _
  // Predicated region
  $region14: #{encode_image.25} parent=0 // pred_check
    _
  $region15: #{encode_image.25} parent=0 // pred_check_branch
    %16 = sbr.rel (0) target = $region17
  $region16: #{encode_image.25} parent=0 // pred_region
    _
  $region17: #{encode_image.25} parent=0 // pred_fallthru
    _
  %p18 = scmp.eq.s32.totalorder 0, 0
  // Predicated region
  $region18: #{encode_image.25} parent=0 // pred_check
    %p19 = pneg %p18
  $region19: #{encode_image.25} parent=0 // pred_check_branch
    %21 = sbr.rel (%p19) target = $region21
  $region20: #{encode_image.25} parent=0 // pred_region
    %v22 = vld [vmem:[%s0] sm:$0xf]
    %v23 = vunpack.c.l.bf16 %v22
    %24 = vadd.xlane.f32.xlu0 %v23
    %v25 = vpop.xlane.xlu0 %24
    %v26 = vrcp.pop 128.0
    %v27 = vmul.f32 %v25, %v26
    %v28 = vsub.f32 %v23, %v27
    %v29 = vmul.f32 %v28, %v28
    %30 = vadd.xlane.f32.xlu0 %v29
    %v31 = vpop.xlane.xlu0 %30
    %v32 = vmul.f32 %v31, %v26
    %v33 = vadd.f32 %v32, 1e-05
    %v34 = vrsqrt.pop %v33
    %v35 = vmul.f32 %v28, %v34
    %v36 = vld [vmem:[%s2] sm:$0x1]
    %v38 = vlaneseq
    %v39 = vshrl.u32 %v38, 7
    %v40 = vsub.s32 0, %v39
    %v41 = vrot.slane %v36, %v40
    %v43 = vmul.f32 %v35, %v41
    %v44 = vld [vmem:[%s3] sm:$0x1]
    %v46 = vlaneseq
    %v47 = vshrl.u32 %v46, 7
    %v48 = vsub.s32 0, %v47
    %v49 = vrot.slane %v44, %v48
    %v51 = vadd.f32 %v43, %v49
    %v52 = vpack.c.bf16 %v51, %v51
    %53 = vst [vmem:[#allocation2] sm:$0xf] %v52
  $region21: #{encode_image.25} parent=0 // pred_fallthru
    _
  %v54 = vld [vmem:[#allocation2] sm:$0xf]
  %v55 = vld [vmem:[%s1] sm:$0xf]
  %v56 = vld [vmem:[%s1 + $0x4] sm:$0xf]
  %v57 = vld [vmem:[%s1 + $0x8] sm:$0xf]
  %v58 = vld [vmem:[%s1 + $0xc] sm:$0xf]
  %v59 = vld [vmem:[%s1 + $0x10] sm:$0xf]
  %v60 = vld [vmem:[%s1 + $0x14] sm:$0xf]
  %v61 = vld [vmem:[%s1 + $0x18] sm:$0xf]
  %v62 = vld [vmem:[%s1 + $0x1c] sm:$0xf]
  %v63 = vld [vmem:[%s1 + $0x20] sm:$0xf]
  %v64 = vld [vmem:[%s1 + $0x24] sm:$0xf]
  %v65 = vld [vmem:[%s1 + $0x28] sm:$0xf]
  %v66 = vld [vmem:[%s1 + $0x2c] sm:$0xf]
  %v67 = vld [vmem:[%s1 + $0x30] sm:$0xf]
  %v68 = vld [vmem:[%s1 + $0x34] sm:$0xf]
  %v69 = vld [vmem:[%s1 + $0x38] sm:$0xf]
  %v70 = vld [vmem:[%s1 + $0x3c] sm:$0xf]
  %v87 = vunpack.c.l.b16 %v55
  %v88 = vunpack.c.l.b16 %v56
  %v89 = vunpack.c.l.b16 %v57
  %v90 = vunpack.c.l.b16 %v58
  %v91 = vunpack.c.l.b16 %v59
  %v92 = vunpack.c.l.b16 %v60
  %v93 = vunpack.c.l.b16 %v61
  %v94 = vunpack.c.l.b16 %v62
  %v95 = vunpack.c.l.b16 %v63
  %v96 = vunpack.c.l.b16 %v64
  %v97 = vunpack.c.l.b16 %v65
  %v98 = vunpack.c.l.b16 %v66
  %v99 = vunpack.c.l.b16 %v67
  %v100 = vunpack.c.l.b16 %v68
  %v101 = vunpack.c.l.b16 %v69
  %v102 = vunpack.c.l.b16 %v70
  %v103 = vpack.c.b16 %v88, %v87
  %v104 = vpack.c.b16 %v90, %v89
  %v105 = vpack.c.b16 %v92, %v91
  %v106 = vpack.c.b16 %v94, %v93
  %v107 = vpack.c.b16 %v96, %v95
  %v108 = vpack.c.b16 %v98, %v97
  %v109 = vpack.c.b16 %v100, %v99
  %v110 = vpack.c.b16 %v102, %v101
  %119 = vmatprep.subr.bf16.mxu0 0
  %120 = vmatpush1.bf16.msra.mxu0 %v103
  %121 = vmatprep.subr.bf16.mxu0 0
  %122 = vmatpush1.bf16.msra.mxu0 %v104
  %123 = vmatprep.subr.bf16.mxu0 0
  %124 = vmatpush1.bf16.msra.mxu0 %v105
  %125 = vmatprep.subr.bf16.mxu0 0
  %126 = vmatpush1.bf16.msra.mxu0 %v106
  %127 = vmatprep.subr.bf16.mxu0 0
  %128 = vmatpush1.bf16.msra.mxu0 %v107
  %129 = vmatprep.subr.bf16.mxu0 0
  %130 = vmatpush1.bf16.msra.mxu0 %v108
  %131 = vmatprep.subr.bf16.mxu0 0
  %132 = vmatpush1.bf16.msra.mxu0 %v109
  %133 = vmatprep.subr.bf16.mxu0 0
  %134 = vmatpush1.bf16.msra.mxu0 %v110
  %135 = vmatprep.subr.bf16.mxu0 0
  %136 = vmatpush1.bf16.msra.mxu0 0
  %137 = vmatprep.subr.bf16.mxu0 0
  %138 = vmatpush1.bf16.msra.mxu0 0
  %139 = vmatprep.subr.bf16.mxu0 0
  %140 = vmatpush1.bf16.msra.mxu0 0
  %141 = vmatprep.subr.bf16.mxu0 0
  %142 = vmatpush1.bf16.msra.mxu0 0
  %143 = vmatprep.subr.bf16.mxu0 0
  %144 = vmatpush1.bf16.msra.mxu0 0
  %145 = vmatprep.subr.bf16.mxu0 0
  %146 = vmatpush1.bf16.msra.mxu0 0
  %147 = vmatprep.subr.bf16.mxu0 0
  %148 = vmatpush1.bf16.msra.mxu0 0
  %149 = vmatprep.subr.bf16.mxu0 0
  %150 = vmatpush1.bf16.msra.mxu0 0
  %151 = vmatprep.mubr.bf16.mxu0 0
  %152 = vmatmul.mubr.bf16.gmra.mrb[0].mxu0 %v54
  %v153 = vpop.f32.mrb[0].mxu0
  %v154 = vadd.f32 0.0, %v153
  %v155 = vpop.f32.mrb[0].mxu0
  %v156 = vpop.f32.mrb[0].mxu0
  %v157 = vpop.f32.mrb[0].mxu0
  %158 = vdwg.mxu0
  %159 = vst [vmem:[%s4] sm:$0xff] %v154
  // Predicated region
  $region22: #{encode_image.25} parent=0 // pred_check
    _
  $region23: #{encode_image.25} parent=0 // pred_check_branch
    %161 = sbr.rel (0) target = $region25
  $region24: #{encode_image.25} parent=0 // pred_region
    _
  $region25: #{encode_image.25} parent=0 // pred_fallthru
    _
  // Predicated region
  $region26: #{encode_image.25} parent=0 // pred_check
    _
  $region27: #{encode_image.25} parent=0 // pred_check_branch
    %163 = sbr.rel (0) target = $region29
  $region28: #{encode_image.25} parent=0 // pred_region
    _
  $region29: #{encode_image.25} parent=0 // pred_fallthru
    _

</llo_original>
